<compile_context>
chip_gen: v7x
topology: tpu7x:2x2x1
jax: 0.10.0
libtpu: 0.0.40
codegen_flags: <defaults>
</compile_context>

<pallas_src>
import jax
import jax.numpy as jnp
from jax import lax
from jax.experimental import pallas as pl
from jax.experimental.pallas import tpu as pltpu

# ---------------- tiny synthetic CLIP-vision config ----------------
B = 2                 # batch
C = 3                 # image channels
IMG = 16              # image height/width
PATCH = 8             # patch size
P = (IMG // PATCH) ** 2        # 4 patches
S = P + 1                       # 5 tokens (CLS + patches)
BS = B * S                      # 10 flattened token rows
D = 32                          # vision hidden size (vision_embedding_dim)
NH = 4                          # attention heads
HD = D // NH                    # head dim
MLP = 4 * D                     # transformer MLP dim
NLAYERS = 2                     # encoder layers
HIDDEN = 128                    # classifier hidden_dim (module default)
EPS = 1e-5                      # LayerNorm eps (PyTorch default)
CP = C * PATCH * PATCH          # flattened patch dim (192)
CPP = 256                       # lane-aligned padded patch dim (CP + CLS col + zero pad)


def _layer_norm(x, w, b):
    mu = jnp.mean(x, axis=-1, keepdims=True)
    var = jnp.mean(jnp.square(x - mu), axis=-1, keepdims=True)
    return (x - mu) * lax.rsqrt(var + EPS) * w + b


# ---------------- the single fused kernel ----------------
def clip_fused_kernel(
        tok_ref, wp_ref, pos_ref, lnprew_ref, lnpreb_ref, bias_ref,
        ln1w_ref, ln1b_ref, wqkv_ref, bqkv_ref, wo_ref, bo_ref,
        ln2w_ref, ln2b_ref, w1_ref, b1_ref, w2_ref, b2_ref,
        postw_ref, postb_ref, sel_ref, size_ref,
        w1a_ref, w1b_ref, cb1_ref, cw2_ref, cb2_ref,
        out_ref, ctx_ref):
    scale = 1.0 / float(HD) ** 0.5
    bias = bias_ref[...]                               # (BS, BS) block-diag batch mask

    # ---- patch-embed conv (as matmul) + CLS token + pos-emb + pre-LN ----
    # tok row b*S+0 is the one-hot CLS selector column; rows b*S+1.. carry patches.
    emb = jnp.dot(tok_ref[...], wp_ref[...], preferred_element_type=jnp.float32)  # (BS, D)
    x = _layer_norm(emb + pos_ref[...], lnprew_ref[...], lnpreb_ref[...])          # (BS, D)

    # ---- transformer encoder layers (static unroll; weights resident in VMEM) ----
    for li in range(NLAYERS):
        # attention block (pre-LN)
        h = _layer_norm(x, ln1w_ref[li], ln1b_ref[li])
        qkv = (jnp.dot(h, wqkv_ref[li], preferred_element_type=jnp.float32)
               + bqkv_ref[li])                                                      # (BS, 3D)
        for hi in range(NH):                                # static unroll over heads
            qs = qkv[:, hi * HD:(hi + 1) * HD]
            ks = qkv[:, D + hi * HD:D + (hi + 1) * HD]
            vs = qkv[:, 2 * D + hi * HD:2 * D + (hi + 1) * HD]
            scores = lax.dot_general(qs, ks, (((1,), (1,)), ((), ())),
                                     preferred_element_type=jnp.float32) * scale
            scores = scores + bias                          # kill cross-batch attention
            scores = scores - jnp.max(scores, axis=-1, keepdims=True)
            p = jnp.exp(scores)
            p = p * pl.reciprocal(jnp.sum(p, axis=-1, keepdims=True), approx=True)
            ctx_ref[:, hi * HD:(hi + 1) * HD] = jnp.dot(
                p, vs, preferred_element_type=jnp.float32)
        # hoisted output projection: one (BS,D)x(D,D) matmul instead of per-head
        attn = (jnp.dot(ctx_ref[...], wo_ref[li], preferred_element_type=jnp.float32)
                + bo_ref[li])
        x = x + attn                                       # residual 1

        # MLP block (QuickGELU)
        h2 = _layer_norm(x, ln2w_ref[li], ln2b_ref[li])
        m = jnp.dot(h2, w1_ref[li], preferred_element_type=jnp.float32) + b1_ref[li]
        m = m * jax.nn.sigmoid(1.702 * m)                  # CLIP QuickGELU
        x = x + jnp.dot(m, w2_ref[li], preferred_element_type=jnp.float32) + b2_ref[li]

    # ---- pooler: post-LN on the CLS token of every batch row ----
    cls_tok = jnp.dot(sel_ref[...], x, preferred_element_type=jnp.float32)   # (B, D)
    pooled = _layer_norm(cls_tok, postw_ref[...], postb_ref[...])            # pooler_output

    # ---- classifier head: cat([pooled, size]) @ W1 == pooled@W1a + size@W1b ----
    hdd = (jnp.dot(pooled, w1a_ref[...], preferred_element_type=jnp.float32)
           + jnp.dot(size_ref[...], w1b_ref[...], preferred_element_type=jnp.float32)
           + cb1_ref[...])
    hdd = jnp.where(hdd > 0, hdd, 0.2 * hdd)               # LeakyReLU(0.2)
    out_ref[...] = (jnp.dot(hdd, cw2_ref[...], preferred_element_type=jnp.float32)
                    + cb2_ref[...])                        # (B, 1)


def fused_call(packed, tokens_in, size_f):
    args = (tokens_in, packed['wp_aug'], packed['pos_bs'],
            packed['ln_pre_w'], packed['ln_pre_b'], packed['attn_bias'],
            packed['ln1_w'], packed['ln1_b'], packed['wqkv'], packed['bqkv'],
            packed['wo'], packed['bo'], packed['ln2_w'], packed['ln2_b'],
            packed['w1'], packed['b1'], packed['w2'], packed['b2'],
            packed['post_ln_w'], packed['post_ln_b'], packed['cls_sel'], size_f,
            packed['cls_w1a'], packed['cls_w1b'], packed['cls_b1'],
            packed['cls_w2'], packed['cls_b2'])
    return pl.pallas_call(
        clip_fused_kernel,
        out_shape=jax.ShapeDtypeStruct((B, 1), jnp.float32),
        scratch_shapes=[pltpu.VMEM((BS, D), jnp.float32)],   # per-layer attention context
    )(*args)


# ---------------- glue: patchify NCHW pixels (pure JAX, outside the kernel) ----------------
def patchify(pixel_values):
    g = IMG // PATCH
    x = pixel_values.reshape(B, C, g, PATCH, g, PATCH)
    x = x.transpose(0, 2, 4, 1, 3, 5)          # (B, gh, gw, C, ph, pw)
    return x.reshape(B, P, CP)


def build_patch_tokens(pixel_values):
    """(B,C,H,W) -> (B*S, CPP) augmented token matrix (CLS indicator + patches, zero pad)."""
    patches = patchify(pixel_values)                              # (B, P, CP)
    tok = jnp.zeros((B, S, CPP), jnp.float32)
    tok = tok.at[:, 0, CP].set(1.0)                               # CLS one-hot column
    tok = tok.at[:, 1:, :CP].set(patches)                         # patch rows
    return tok.reshape(BS, CPP)


# ---------------- deterministic synthetic parameters ----------------
def init_params(key):
    def nrm(k, shape, scale=0.02):
        return scale * jax.random.normal(k, shape, dtype=jnp.float32)

    keys = iter(jax.random.split(key, 64))
    params = {
        # patch-embed conv (D, C, ph, pw) flattened to (CP, D); CLIP conv has no bias.
        'wp': nrm(next(keys), (D, C, PATCH, PATCH)).reshape(D, CP).T,
        'cls': nrm(next(keys), (1, D)),
        'pos': nrm(next(keys), (S, D)),
        'ln_pre_w': jnp.ones((1, D), jnp.float32),
        'ln_pre_b': jnp.zeros((1, D), jnp.float32),
        'post_ln_w': jnp.ones((1, D), jnp.float32),
        'post_ln_b': jnp.zeros((1, D), jnp.float32),
        'layers': [],
    }
    for _ in range(NLAYERS):
        params['layers'].append({
            'ln1_w': jnp.ones((1, D), jnp.float32),
            'ln1_b': jnp.zeros((1, D), jnp.float32),
            'wq': nrm(next(keys), (D, D)), 'bq': jnp.zeros((1, D), jnp.float32),
            'wk': nrm(next(keys), (D, D)), 'bk': jnp.zeros((1, D), jnp.float32),
            'wv': nrm(next(keys), (D, D)), 'bv': jnp.zeros((1, D), jnp.float32),
            'wo': nrm(next(keys), (D, D)), 'bo': jnp.zeros((1, D), jnp.float32),
            'ln2_w': jnp.ones((1, D), jnp.float32),
            'ln2_b': jnp.zeros((1, D), jnp.float32),
            'w1': nrm(next(keys), (D, MLP)), 'b1': jnp.zeros((1, MLP), jnp.float32),
            'w2': nrm(next(keys), (MLP, D)), 'b2': jnp.zeros((1, D), jnp.float32),
        })
    # classifier: Linear(D + 2, HIDDEN) -> LeakyReLU(0.2) -> Linear(HIDDEN, 1)
    w1_full = nrm(next(keys), (D + 2, HIDDEN), scale=0.05)
    params['cls_w1a'] = w1_full[:D, :]          # image-embedding part
    params['cls_w1b'] = w1_full[D:, :]          # original_image_size part
    params['cls_b1'] = jnp.zeros((1, HIDDEN), jnp.float32)
    params['cls_w2'] = nrm(next(keys), (HIDDEN, 1), scale=0.05)
    params['cls_b2'] = jnp.zeros((1, 1), jnp.float32)
    return params


def pack_params(p):
    """Pack the natural per-layer params into the stacked/fused kernel layout."""
    L = p['layers']
    stk = lambda name: jnp.stack([lp[name] for lp in L], axis=0)

    # augmented patch-embed weight: rows 0..CP-1 = conv weight, row CP = CLS embedding,
    # rows CP+1..CPP-1 = zero padding (lane-aligned K for the embed matmul).
    wp_aug = jnp.zeros((CPP, D), jnp.float32)
    wp_aug = wp_aug.at[:CP, :].set(p['wp'])
    wp_aug = wp_aug.at[CP, :].set(p['cls'][0])

    # block-diagonal batch mask for flattened attention (0 within batch, -1e30 across).
    tok_batch = jnp.repeat(jnp.arange(BS) // S, 1)
    attn_bias = jnp.where(tok_batch[:, None] == tok_batch[None, :],
                          0.0, -1e30).astype(jnp.float32)

    # selection matrix picking the CLS row of every batch element out of (BS, D).
    cls_sel = jnp.zeros((B, BS), jnp.float32).at[jnp.arange(B), jnp.arange(B) * S].set(1.0)

    return {
        'wp_aug': wp_aug,
        'pos_bs': jnp.tile(p['pos'], (B, 1)),                       # (BS, D)
        'ln_pre_w': p['ln_pre_w'], 'ln_pre_b': p['ln_pre_b'],
        'attn_bias': attn_bias,
        'ln1_w': stk('ln1_w'), 'ln1_b': stk('ln1_b'),
        'wqkv': jnp.stack([jnp.concatenate([lp['wq'], lp['wk'], lp['wv']], axis=1)
                           for lp in L], axis=0),                   # (NL, D, 3D)
        'bqkv': jnp.stack([jnp.concatenate([lp['bq'], lp['bk'], lp['bv']], axis=1)
                           for lp in L], axis=0),                   # (NL, 1, 3D)
        'wo': stk('wo'), 'bo': stk('bo'),
        'ln2_w': stk('ln2_w'), 'ln2_b': stk('ln2_b'),
        'w1': stk('w1'), 'b1': stk('b1'),
        'w2': stk('w2'), 'b2': stk('b2'),
        'post_ln_w': p['post_ln_w'], 'post_ln_b': p['post_ln_b'],
        'cls_sel': cls_sel,
        'cls_w1a': p['cls_w1a'], 'cls_w1b': p['cls_w1b'], 'cls_b1': p['cls_b1'],
        'cls_w2': p['cls_w2'], 'cls_b2': p['cls_b2'],
    }


# ---------------- full forward (matches CLIPBinaryClassifier.forward) ----------------
@jax.jit
def clip_binary_classifier_forward(packed, pixel_values, original_image_size):
    tokens_in = build_patch_tokens(pixel_values)
    size_f = original_image_size.astype(jnp.float32)     # .float() in the reference
    return fused_call(packed, tokens_in, size_f)          # (B, 1) logits


if __name__ == "__main__":
    key = jax.random.PRNGKey(0)
    k_pix, k_size, k_param = jax.random.split(key, 3)
    pixel_values = jax.random.normal(k_pix, (B, C, IMG, IMG), dtype=jnp.float32)
    original_image_size = jax.random.uniform(k_size, (B, 2), dtype=jnp.float32,
                                             minval=64.0, maxval=1024.0)
    params = init_params(k_param)
    packed = pack_params(params)

    logits = clip_binary_classifier_forward(packed, pixel_values, original_image_size)
    logits = jax.block_until_ready(logits)
    assert logits.shape == (B, 1), logits.shape
    assert bool(jnp.all(jnp.isfinite(logits)))
    print("KERNEL_OK")
</pallas_src>

<mosaic_0001>
module attributes {stable_mosaic.version = 11 : i64} {
  func.func @clip_fused_kernel(%arg0: memref<10x256xf32, #tpu.memory_space<vmem>>, %arg1: memref<256x32xf32, #tpu.memory_space<vmem>>, %arg2: memref<10x32xf32, #tpu.memory_space<vmem>>, %arg3: memref<1x32xf32, #tpu.memory_space<vmem>>, %arg4: memref<1x32xf32, #tpu.memory_space<vmem>>, %arg5: memref<10x10xf32, #tpu.memory_space<vmem>>, %arg6: memref<2x1x32xf32, #tpu.memory_space<vmem>>, %arg7: memref<2x1x32xf32, #tpu.memory_space<vmem>>, %arg8: memref<2x32x96xf32, #tpu.memory_space<vmem>>, %arg9: memref<2x1x96xf32, #tpu.memory_space<vmem>>, %arg10: memref<2x32x32xf32, #tpu.memory_space<vmem>>, %arg11: memref<2x1x32xf32, #tpu.memory_space<vmem>>, %arg12: memref<2x1x32xf32, #tpu.memory_space<vmem>>, %arg13: memref<2x1x32xf32, #tpu.memory_space<vmem>>, %arg14: memref<2x32x128xf32, #tpu.memory_space<vmem>>, %arg15: memref<2x1x128xf32, #tpu.memory_space<vmem>>, %arg16: memref<2x128x32xf32, #tpu.memory_space<vmem>>, %arg17: memref<2x1x32xf32, #tpu.memory_space<vmem>>, %arg18: memref<1x32xf32, #tpu.memory_space<vmem>>, %arg19: memref<1x32xf32, #tpu.memory_space<vmem>>, %arg20: memref<2x10xf32, #tpu.memory_space<vmem>>, %arg21: memref<2x2xf32, #tpu.memory_space<vmem>>, %arg22: memref<32x128xf32, #tpu.memory_space<vmem>>, %arg23: memref<2x128xf32, #tpu.memory_space<vmem>>, %arg24: memref<1x128xf32, #tpu.memory_space<vmem>>, %arg25: memref<128x1xf32, #tpu.memory_space<vmem>>, %arg26: memref<1x1xf32, #tpu.memory_space<vmem>>, %arg27: memref<2x1xf32, #tpu.memory_space<vmem>>, %arg28: memref<10x32xf32, #tpu.memory_space<vmem>>) attributes {dimension_semantics = [], scalar_prefetch = 0 : i64, scratch_operands = 1 : i64, tpu.core_type = #tpu.core_type<tc>} {
    %c0 = arith.constant 0 : index
    %c0_0 = arith.constant 0 : index
    %0 = vector.load %arg5[%c0, %c0_0] : memref<10x10xf32, #tpu.memory_space<vmem>>, vector<10x10xf32>
    %c0_1 = arith.constant 0 : index
    %c0_2 = arith.constant 0 : index
    %1 = vector.load %arg0[%c0_1, %c0_2] : memref<10x256xf32, #tpu.memory_space<vmem>>, vector<10x256xf32>
    %c0_3 = arith.constant 0 : index
    %c0_4 = arith.constant 0 : index
    %2 = vector.load %arg1[%c0_3, %c0_4] : memref<256x32xf32, #tpu.memory_space<vmem>>, vector<256x32xf32>
    %cst = arith.constant dense<0.000000e+00> : vector<10x32xf32>
    %3 = tpu.matmul %1, %2, %cst {dimension_numbers = #tpu.dot_dimension_numbers<[1], [0], [0], [1], [0, 0, 1, 1], [], []>} : vector<10x256xf32>, vector<256x32xf32>, vector<10x32xf32> -> vector<10x32xf32>
    %c0_5 = arith.constant 0 : index
    %c0_6 = arith.constant 0 : index
    %4 = vector.load %arg2[%c0_5, %c0_6] : memref<10x32xf32, #tpu.memory_space<vmem>>, vector<10x32xf32>
    %5 = arith.addf %3, %4 : vector<10x32xf32>
    %c0_7 = arith.constant 0 : index
    %c0_8 = arith.constant 0 : index
    %6 = vector.load %arg3[%c0_7, %c0_8] : memref<1x32xf32, #tpu.memory_space<vmem>>, vector<1x32xf32>
    %c0_9 = arith.constant 0 : index
    %c0_10 = arith.constant 0 : index
    %7 = vector.load %arg4[%c0_9, %c0_10] : memref<1x32xf32, #tpu.memory_space<vmem>>, vector<1x32xf32>
    %cst_11 = arith.constant dense<0.000000e+00> : vector<10xf32>
    %8 = vector.multi_reduction <add>, %5, %cst_11 [1] : vector<10x32xf32> to vector<10xf32>
    %9 = vector.shape_cast %8 : vector<10xf32> to vector<10x1xf32>
    %cst_12 = arith.constant 3.200000e+01 : f32
    %10 = vector.broadcast %cst_12 : f32 to vector<10x1xf32>
    %11 = arith.divf %9, %10 : vector<10x1xf32>
    %12 = vector.broadcast %11 : vector<10x1xf32> to vector<10x32xf32>
    %13 = arith.subf %5, %12 : vector<10x32xf32>
    %14 = arith.mulf %13, %13 : vector<10x32xf32>
    %cst_13 = arith.constant dense<0.000000e+00> : vector<10xf32>
    %15 = vector.multi_reduction <add>, %14, %cst_13 [1] : vector<10x32xf32> to vector<10xf32>
    %16 = vector.shape_cast %15 : vector<10xf32> to vector<10x1xf32>
    %cst_14 = arith.constant 3.200000e+01 : f32
    %17 = vector.broadcast %cst_14 : f32 to vector<10x1xf32>
    %18 = arith.divf %16, %17 : vector<10x1xf32>
    %19 = vector.broadcast %11 : vector<10x1xf32> to vector<10x32xf32>
    %20 = arith.subf %5, %19 : vector<10x32xf32>
    %cst_15 = arith.constant 9.99999974E-6 : f32
    %21 = vector.broadcast %cst_15 : f32 to vector<10x1xf32>
    %22 = arith.addf %18, %21 : vector<10x1xf32>
    %23 = math.rsqrt %22 : vector<10x1xf32>
    %24 = vector.broadcast %23 : vector<10x1xf32> to vector<10x32xf32>
    %25 = arith.mulf %20, %24 : vector<10x32xf32>
    %26 = vector.broadcast %6 : vector<1x32xf32> to vector<10x32xf32>
    %27 = arith.mulf %25, %26 : vector<10x32xf32>
    %28 = vector.broadcast %7 : vector<1x32xf32> to vector<10x32xf32>
    %29 = arith.addf %27, %28 : vector<10x32xf32>
    %c0_16 = arith.constant 0 : index
    %c0_17 = arith.constant 0 : index
    %c0_18 = arith.constant 0 : index
    %30 = vector.load %arg6[%c0_16, %c0_17, %c0_18] : memref<2x1x32xf32, #tpu.memory_space<vmem>>, vector<1x1x32xf32>
    %31 = vector.shape_cast %30 : vector<1x1x32xf32> to vector<1x32xf32>
    %c0_19 = arith.constant 0 : index
    %c0_20 = arith.constant 0 : index
    %c0_21 = arith.constant 0 : index
    %32 = vector.load %arg7[%c0_19, %c0_20, %c0_21] : memref<2x1x32xf32, #tpu.memory_space<vmem>>, vector<1x1x32xf32>
    %33 = vector.shape_cast %32 : vector<1x1x32xf32> to vector<1x32xf32>
    %cst_22 = arith.constant dense<0.000000e+00> : vector<10xf32>
    %34 = vector.multi_reduction <add>, %29, %cst_22 [1] : vector<10x32xf32> to vector<10xf32>
    %35 = vector.shape_cast %34 : vector<10xf32> to vector<10x1xf32>
    %cst_23 = arith.constant 3.200000e+01 : f32
    %36 = vector.broadcast %cst_23 : f32 to vector<10x1xf32>
    %37 = arith.divf %35, %36 : vector<10x1xf32>
    %38 = vector.broadcast %37 : vector<10x1xf32> to vector<10x32xf32>
    %39 = arith.subf %29, %38 : vector<10x32xf32>
    %40 = arith.mulf %39, %39 : vector<10x32xf32>
    %cst_24 = arith.constant dense<0.000000e+00> : vector<10xf32>
    %41 = vector.multi_reduction <add>, %40, %cst_24 [1] : vector<10x32xf32> to vector<10xf32>
    %42 = vector.shape_cast %41 : vector<10xf32> to vector<10x1xf32>
    %cst_25 = arith.constant 3.200000e+01 : f32
    %43 = vector.broadcast %cst_25 : f32 to vector<10x1xf32>
    %44 = arith.divf %42, %43 : vector<10x1xf32>
    %45 = vector.broadcast %37 : vector<10x1xf32> to vector<10x32xf32>
    %46 = arith.subf %29, %45 : vector<10x32xf32>
    %cst_26 = arith.constant 9.99999974E-6 : f32
    %47 = vector.broadcast %cst_26 : f32 to vector<10x1xf32>
    %48 = arith.addf %44, %47 : vector<10x1xf32>
    %49 = math.rsqrt %48 : vector<10x1xf32>
    %50 = vector.broadcast %49 : vector<10x1xf32> to vector<10x32xf32>
    %51 = arith.mulf %46, %50 : vector<10x32xf32>
    %52 = vector.broadcast %31 : vector<1x32xf32> to vector<10x32xf32>
    %53 = arith.mulf %51, %52 : vector<10x32xf32>
    %54 = vector.broadcast %33 : vector<1x32xf32> to vector<10x32xf32>
    %55 = arith.addf %53, %54 : vector<10x32xf32>
    %c0_27 = arith.constant 0 : index
    %c0_28 = arith.constant 0 : index
    %c0_29 = arith.constant 0 : index
    %56 = vector.load %arg8[%c0_27, %c0_28, %c0_29] : memref<2x32x96xf32, #tpu.memory_space<vmem>>, vector<1x32x96xf32>
    %57 = vector.shape_cast %56 : vector<1x32x96xf32> to vector<32x96xf32>
    %cst_30 = arith.constant dense<0.000000e+00> : vector<10x96xf32>
    %58 = tpu.matmul %55, %57, %cst_30 {dimension_numbers = #tpu.dot_dimension_numbers<[1], [0], [0], [1], [0, 0, 1, 1], [], []>} : vector<10x32xf32>, vector<32x96xf32>, vector<10x96xf32> -> vector<10x96xf32>
    %c0_31 = arith.constant 0 : index
    %c0_32 = arith.constant 0 : index
    %c0_33 = arith.constant 0 : index
    %59 = vector.load %arg9[%c0_31, %c0_32, %c0_33] : memref<2x1x96xf32, #tpu.memory_space<vmem>>, vector<1x1x96xf32>
    %60 = vector.shape_cast %59 : vector<1x1x96xf32> to vector<1x96xf32>
    %61 = vector.broadcast %60 : vector<1x96xf32> to vector<10x96xf32>
    %62 = arith.addf %58, %61 : vector<10x96xf32>
    %63 = vector.extract_strided_slice %62 {offsets = [0, 0], sizes = [10, 8], strides = [1, 1]} : vector<10x96xf32> to vector<10x8xf32>
    %64 = vector.extract_strided_slice %62 {offsets = [0, 32], sizes = [10, 8], strides = [1, 1]} : vector<10x96xf32> to vector<10x8xf32>
    %65 = vector.extract_strided_slice %62 {offsets = [0, 64], sizes = [10, 8], strides = [1, 1]} : vector<10x96xf32> to vector<10x8xf32>
    %cst_34 = arith.constant dense<0.000000e+00> : vector<10x10xf32>
    %66 = tpu.matmul %63, %64, %cst_34 {dimension_numbers = #tpu.dot_dimension_numbers<[1], [1], [0], [0], [0, 0, 1, 0], [], []>} : vector<10x8xf32>, vector<10x8xf32>, vector<10x10xf32> -> vector<10x10xf32>
    %cst_35 = arith.constant 0.353553385 : f32
    %67 = vector.broadcast %cst_35 : f32 to vector<10x10xf32>
    %68 = arith.mulf %66, %67 : vector<10x10xf32>
    %69 = arith.addf %68, %0 : vector<10x10xf32>
    %cst_36 = arith.constant dense<0xFF800000> : vector<10xf32>
    %70 = vector.multi_reduction <maximumf>, %69, %cst_36 [1] : vector<10x10xf32> to vector<10xf32>
    %71 = vector.shape_cast %70 : vector<10xf32> to vector<10x1xf32>
    %72 = vector.broadcast %71 : vector<10x1xf32> to vector<10x10xf32>
    %73 = arith.subf %69, %72 : vector<10x10xf32>
    %74 = math.exp %73 : vector<10x10xf32>
    %cst_37 = arith.constant dense<0.000000e+00> : vector<10xf32>
    %75 = vector.multi_reduction <add>, %74, %cst_37 [1] : vector<10x10xf32> to vector<10xf32>
    %76 = vector.shape_cast %75 : vector<10xf32> to vector<10x1xf32>
    %77 = tpu.reciprocal %76 {approx = true} : vector<10x1xf32> -> vector<10x1xf32>
    %78 = vector.broadcast %77 : vector<10x1xf32> to vector<10x10xf32>
    %79 = arith.mulf %74, %78 : vector<10x10xf32>
    %cst_38 = arith.constant dense<0.000000e+00> : vector<10x8xf32>
    %80 = tpu.matmul %79, %65, %cst_38 {dimension_numbers = #tpu.dot_dimension_numbers<[1], [0], [0], [1], [0, 0, 1, 1], [], []>} : vector<10x10xf32>, vector<10x8xf32>, vector<10x8xf32> -> vector<10x8xf32>
    %c0_39 = arith.constant 0 : index
    %c0_40 = arith.constant 0 : index
    %81 = vector.load %arg28[%c0_39, %c0_40] : memref<10x32xf32, #tpu.memory_space<vmem>>, vector<10x8xf32>
    tpu.vector_store %arg28[%c0_39, %c0_40], %80 {strides = array<i32>} : memref<10x32xf32, #tpu.memory_space<vmem>>, vector<10x8xf32>,
    %82 = vector.extract_strided_slice %62 {offsets = [0, 8], sizes = [10, 8], strides = [1, 1]} : vector<10x96xf32> to vector<10x8xf32>
    %83 = vector.extract_strided_slice %62 {offsets = [0, 40], sizes = [10, 8], strides = [1, 1]} : vector<10x96xf32> to vector<10x8xf32>
    %84 = vector.extract_strided_slice %62 {offsets = [0, 72], sizes = [10, 8], strides = [1, 1]} : vector<10x96xf32> to vector<10x8xf32>
    %cst_41 = arith.constant dense<0.000000e+00> : vector<10x10xf32>
    %85 = tpu.matmul %82, %83, %cst_41 {dimension_numbers = #tpu.dot_dimension_numbers<[1], [1], [0], [0], [0, 0, 1, 0], [], []>} : vector<10x8xf32>, vector<10x8xf32>, vector<10x10xf32> -> vector<10x10xf32>
    %cst_42 = arith.constant 0.353553385 : f32
    %86 = vector.broadcast %cst_42 : f32 to vector<10x10xf32>
    %87 = arith.mulf %85, %86 : vector<10x10xf32>
    %88 = arith.addf %87, %0 : vector<10x10xf32>
    %cst_43 = arith.constant dense<0xFF800000> : vector<10xf32>
    %89 = vector.multi_reduction <maximumf>, %88, %cst_43 [1] : vector<10x10xf32> to vector<10xf32>
    %90 = vector.shape_cast %89 : vector<10xf32> to vector<10x1xf32>
    %91 = vector.broadcast %90 : vector<10x1xf32> to vector<10x10xf32>
    %92 = arith.subf %88, %91 : vector<10x10xf32>
    %93 = math.exp %92 : vector<10x10xf32>
    %cst_44 = arith.constant dense<0.000000e+00> : vector<10xf32>
    %94 = vector.multi_reduction <add>, %93, %cst_44 [1] : vector<10x10xf32> to vector<10xf32>
    %95 = vector.shape_cast %94 : vector<10xf32> to vector<10x1xf32>
    %96 = tpu.reciprocal %95 {approx = true} : vector<10x1xf32> -> vector<10x1xf32>
    %97 = vector.broadcast %96 : vector<10x1xf32> to vector<10x10xf32>
    %98 = arith.mulf %93, %97 : vector<10x10xf32>
    %cst_45 = arith.constant dense<0.000000e+00> : vector<10x8xf32>
    %99 = tpu.matmul %98, %84, %cst_45 {dimension_numbers = #tpu.dot_dimension_numbers<[1], [0], [0], [1], [0, 0, 1, 1], [], []>} : vector<10x10xf32>, vector<10x8xf32>, vector<10x8xf32> -> vector<10x8xf32>
    %c0_46 = arith.constant 0 : index
    %c8 = arith.constant 8 : index
    %100 = vector.load %arg28[%c0_46, %c8] : memref<10x32xf32, #tpu.memory_space<vmem>>, vector<10x8xf32>
    tpu.vector_store %arg28[%c0_46, %c8], %99 {strides = array<i32>} : memref<10x32xf32, #tpu.memory_space<vmem>>, vector<10x8xf32>,
    %101 = vector.extract_strided_slice %62 {offsets = [0, 16], sizes = [10, 8], strides = [1, 1]} : vector<10x96xf32> to vector<10x8xf32>
    %102 = vector.extract_strided_slice %62 {offsets = [0, 48], sizes = [10, 8], strides = [1, 1]} : vector<10x96xf32> to vector<10x8xf32>
    %103 = vector.extract_strided_slice %62 {offsets = [0, 80], sizes = [10, 8], strides = [1, 1]} : vector<10x96xf32> to vector<10x8xf32>
    %cst_47 = arith.constant dense<0.000000e+00> : vector<10x10xf32>
    %104 = tpu.matmul %101, %102, %cst_47 {dimension_numbers = #tpu.dot_dimension_numbers<[1], [1], [0], [0], [0, 0, 1, 0], [], []>} : vector<10x8xf32>, vector<10x8xf32>, vector<10x10xf32> -> vector<10x10xf32>
    %cst_48 = arith.constant 0.353553385 : f32
    %105 = vector.broadcast %cst_48 : f32 to vector<10x10xf32>
    %106 = arith.mulf %104, %105 : vector<10x10xf32>
    %107 = arith.addf %106, %0 : vector<10x10xf32>
    %cst_49 = arith.constant dense<0xFF800000> : vector<10xf32>
    %108 = vector.multi_reduction <maximumf>, %107, %cst_49 [1] : vector<10x10xf32> to vector<10xf32>
    %109 = vector.shape_cast %108 : vector<10xf32> to vector<10x1xf32>
    %110 = vector.broadcast %109 : vector<10x1xf32> to vector<10x10xf32>
    %111 = arith.subf %107, %110 : vector<10x10xf32>
    %112 = math.exp %111 : vector<10x10xf32>
    %cst_50 = arith.constant dense<0.000000e+00> : vector<10xf32>
    %113 = vector.multi_reduction <add>, %112, %cst_50 [1] : vector<10x10xf32> to vector<10xf32>
    %114 = vector.shape_cast %113 : vector<10xf32> to vector<10x1xf32>
    %115 = tpu.reciprocal %114 {approx = true} : vector<10x1xf32> -> vector<10x1xf32>
    %116 = vector.broadcast %115 : vector<10x1xf32> to vector<10x10xf32>
    %117 = arith.mulf %112, %116 : vector<10x10xf32>
    %cst_51 = arith.constant dense<0.000000e+00> : vector<10x8xf32>
    %118 = tpu.matmul %117, %103, %cst_51 {dimension_numbers = #tpu.dot_dimension_numbers<[1], [0], [0], [1], [0, 0, 1, 1], [], []>} : vector<10x10xf32>, vector<10x8xf32>, vector<10x8xf32> -> vector<10x8xf32>
    %c0_52 = arith.constant 0 : index
    %c16 = arith.constant 16 : index
    %119 = vector.load %arg28[%c0_52, %c16] : memref<10x32xf32, #tpu.memory_space<vmem>>, vector<10x8xf32>
    tpu.vector_store %arg28[%c0_52, %c16], %118 {strides = array<i32>} : memref<10x32xf32, #tpu.memory_space<vmem>>, vector<10x8xf32>,
    %120 = vector.extract_strided_slice %62 {offsets = [0, 24], sizes = [10, 8], strides = [1, 1]} : vector<10x96xf32> to vector<10x8xf32>
    %121 = vector.extract_strided_slice %62 {offsets = [0, 56], sizes = [10, 8], strides = [1, 1]} : vector<10x96xf32> to vector<10x8xf32>
    %122 = vector.extract_strided_slice %62 {offsets = [0, 88], sizes = [10, 8], strides = [1, 1]} : vector<10x96xf32> to vector<10x8xf32>
    %cst_53 = arith.constant dense<0.000000e+00> : vector<10x10xf32>
    %123 = tpu.matmul %120, %121, %cst_53 {dimension_numbers = #tpu.dot_dimension_numbers<[1], [1], [0], [0], [0, 0, 1, 0], [], []>} : vector<10x8xf32>, vector<10x8xf32>, vector<10x10xf32> -> vector<10x10xf32>
    %cst_54 = arith.constant 0.353553385 : f32
    %124 = vector.broadcast %cst_54 : f32 to vector<10x10xf32>
    %125 = arith.mulf %123, %124 : vector<10x10xf32>
    %126 = arith.addf %125, %0 : vector<10x10xf32>
    %cst_55 = arith.constant dense<0xFF800000> : vector<10xf32>
    %127 = vector.multi_reduction <maximumf>, %126, %cst_55 [1] : vector<10x10xf32> to vector<10xf32>
    %128 = vector.shape_cast %127 : vector<10xf32> to vector<10x1xf32>
    %129 = vector.broadcast %128 : vector<10x1xf32> to vector<10x10xf32>
    %130 = arith.subf %126, %129 : vector<10x10xf32>
    %131 = math.exp %130 : vector<10x10xf32>
    %cst_56 = arith.constant dense<0.000000e+00> : vector<10xf32>
    %132 = vector.multi_reduction <add>, %131, %cst_56 [1] : vector<10x10xf32> to vector<10xf32>
    %133 = vector.shape_cast %132 : vector<10xf32> to vector<10x1xf32>
    %134 = tpu.reciprocal %133 {approx = true} : vector<10x1xf32> -> vector<10x1xf32>
    %135 = vector.broadcast %134 : vector<10x1xf32> to vector<10x10xf32>
    %136 = arith.mulf %131, %135 : vector<10x10xf32>
    %cst_57 = arith.constant dense<0.000000e+00> : vector<10x8xf32>
    %137 = tpu.matmul %136, %122, %cst_57 {dimension_numbers = #tpu.dot_dimension_numbers<[1], [0], [0], [1], [0, 0, 1, 1], [], []>} : vector<10x10xf32>, vector<10x8xf32>, vector<10x8xf32> -> vector<10x8xf32>
    %c0_58 = arith.constant 0 : index
    %c24 = arith.constant 24 : index
    %138 = vector.load %arg28[%c0_58, %c24] : memref<10x32xf32, #tpu.memory_space<vmem>>, vector<10x8xf32>
    tpu.vector_store %arg28[%c0_58, %c24], %137 {strides = array<i32>} : memref<10x32xf32, #tpu.memory_space<vmem>>, vector<10x8xf32>,
    %c0_59 = arith.constant 0 : index
    %c0_60 = arith.constant 0 : index
    %139 = vector.load %arg28[%c0_59, %c0_60] : memref<10x32xf32, #tpu.memory_space<vmem>>, vector<10x32xf32>
    %c0_61 = arith.constant 0 : index
    %c0_62 = arith.constant 0 : index
    %c0_63 = arith.constant 0 : index
    %140 = vector.load %arg10[%c0_61, %c0_62, %c0_63] : memref<2x32x32xf32, #tpu.memory_space<vmem>>, vector<1x32x32xf32>
    %141 = vector.shape_cast %140 : vector<1x32x32xf32> to vector<32x32xf32>
    %cst_64 = arith.constant dense<0.000000e+00> : vector<10x32xf32>
    %142 = tpu.matmul %139, %141, %cst_64 {dimension_numbers = #tpu.dot_dimension_numbers<[1], [0], [0], [1], [0, 0, 1, 1], [], []>} : vector<10x32xf32>, vector<32x32xf32>, vector<10x32xf32> -> vector<10x32xf32>
    %c0_65 = arith.constant 0 : index
    %c0_66 = arith.constant 0 : index
    %c0_67 = arith.constant 0 : index
    %143 = vector.load %arg11[%c0_65, %c0_66, %c0_67] : memref<2x1x32xf32, #tpu.memory_space<vmem>>, vector<1x1x32xf32>
    %144 = vector.shape_cast %143 : vector<1x1x32xf32> to vector<1x32xf32>
    %145 = vector.broadcast %144 : vector<1x32xf32> to vector<10x32xf32>
    %146 = arith.addf %142, %145 : vector<10x32xf32>
    %147 = arith.addf %29, %146 : vector<10x32xf32>
    %c0_68 = arith.constant 0 : index
    %c0_69 = arith.constant 0 : index
    %c0_70 = arith.constant 0 : index
    %148 = vector.load %arg12[%c0_68, %c0_69, %c0_70] : memref<2x1x32xf32, #tpu.memory_space<vmem>>, vector<1x1x32xf32>
    %149 = vector.shape_cast %148 : vector<1x1x32xf32> to vector<1x32xf32>
    %c0_71 = arith.constant 0 : index
    %c0_72 = arith.constant 0 : index
    %c0_73 = arith.constant 0 : index
    %150 = vector.load %arg13[%c0_71, %c0_72, %c0_73] : memref<2x1x32xf32, #tpu.memory_space<vmem>>, vector<1x1x32xf32>
    %151 = vector.shape_cast %150 : vector<1x1x32xf32> to vector<1x32xf32>
    %cst_74 = arith.constant dense<0.000000e+00> : vector<10xf32>
    %152 = vector.multi_reduction <add>, %147, %cst_74 [1] : vector<10x32xf32> to vector<10xf32>
    %153 = vector.shape_cast %152 : vector<10xf32> to vector<10x1xf32>
    %cst_75 = arith.constant 3.200000e+01 : f32
    %154 = vector.broadcast %cst_75 : f32 to vector<10x1xf32>
    %155 = arith.divf %153, %154 : vector<10x1xf32>
    %156 = vector.broadcast %155 : vector<10x1xf32> to vector<10x32xf32>
    %157 = arith.subf %147, %156 : vector<10x32xf32>
    %158 = arith.mulf %157, %157 : vector<10x32xf32>
    %cst_76 = arith.constant dense<0.000000e+00> : vector<10xf32>
    %159 = vector.multi_reduction <add>, %158, %cst_76 [1] : vector<10x32xf32> to vector<10xf32>
    %160 = vector.shape_cast %159 : vector<10xf32> to vector<10x1xf32>
    %cst_77 = arith.constant 3.200000e+01 : f32
    %161 = vector.broadcast %cst_77 : f32 to vector<10x1xf32>
    %162 = arith.divf %160, %161 : vector<10x1xf32>
    %163 = vector.broadcast %155 : vector<10x1xf32> to vector<10x32xf32>
    %164 = arith.subf %147, %163 : vector<10x32xf32>
    %cst_78 = arith.constant 9.99999974E-6 : f32
    %165 = vector.broadcast %cst_78 : f32 to vector<10x1xf32>
    %166 = arith.addf %162, %165 : vector<10x1xf32>
    %167 = math.rsqrt %166 : vector<10x1xf32>
    %168 = vector.broadcast %167 : vector<10x1xf32> to vector<10x32xf32>
    %169 = arith.mulf %164, %168 : vector<10x32xf32>
    %170 = vector.broadcast %149 : vector<1x32xf32> to vector<10x32xf32>
    %171 = arith.mulf %169, %170 : vector<10x32xf32>
    %172 = vector.broadcast %151 : vector<1x32xf32> to vector<10x32xf32>
    %173 = arith.addf %171, %172 : vector<10x32xf32>
    %c0_79 = arith.constant 0 : index
    %c0_80 = arith.constant 0 : index
    %c0_81 = arith.constant 0 : index
    %174 = vector.load %arg14[%c0_79, %c0_80, %c0_81] : memref<2x32x128xf32, #tpu.memory_space<vmem>>, vector<1x32x128xf32>
    %175 = vector.shape_cast %174 : vector<1x32x128xf32> to vector<32x128xf32>
    %cst_82 = arith.constant dense<0.000000e+00> : vector<10x128xf32>
    %176 = tpu.matmul %173, %175, %cst_82 {dimension_numbers = #tpu.dot_dimension_numbers<[1], [0], [0], [1], [0, 0, 1, 1], [], []>} : vector<10x32xf32>, vector<32x128xf32>, vector<10x128xf32> -> vector<10x128xf32>
    %c0_83 = arith.constant 0 : index
    %c0_84 = arith.constant 0 : index
    %c0_85 = arith.constant 0 : index
    %177 = vector.load %arg15[%c0_83, %c0_84, %c0_85] : memref<2x1x128xf32, #tpu.memory_space<vmem>>, vector<1x1x128xf32>
    %178 = vector.shape_cast %177 : vector<1x1x128xf32> to vector<1x128xf32>
    %179 = vector.broadcast %178 : vector<1x128xf32> to vector<10x128xf32>
    %180 = arith.addf %176, %179 : vector<10x128xf32>
    %cst_86 = arith.constant 1.702000e+00 : f32
    %181 = vector.broadcast %cst_86 : f32 to vector<10x128xf32>
    %182 = arith.mulf %181, %180 : vector<10x128xf32>
    %183 = arith.negf %182 : vector<10x128xf32>
    %184 = math.exp %183 : vector<10x128xf32>
    %cst_87 = arith.constant 1.000000e+00 : f32
    %185 = vector.broadcast %cst_87 : f32 to vector<10x128xf32>
    %186 = arith.addf %185, %184 : vector<10x128xf32>
    %187 = arith.divf %185, %186 : vector<10x128xf32>
    %188 = arith.mulf %180, %187 : vector<10x128xf32>
    %c0_88 = arith.constant 0 : index
    %c0_89 = arith.constant 0 : index
    %c0_90 = arith.constant 0 : index
    %189 = vector.load %arg16[%c0_88, %c0_89, %c0_90] : memref<2x128x32xf32, #tpu.memory_space<vmem>>, vector<1x128x32xf32>
    %190 = vector.shape_cast %189 : vector<1x128x32xf32> to vector<128x32xf32>
    %cst_91 = arith.constant dense<0.000000e+00> : vector<10x32xf32>
    %191 = tpu.matmul %188, %190, %cst_91 {dimension_numbers = #tpu.dot_dimension_numbers<[1], [0], [0], [1], [0, 0, 1, 1], [], []>} : vector<10x128xf32>, vector<128x32xf32>, vector<10x32xf32> -> vector<10x32xf32>
    %192 = arith.addf %147, %191 : vector<10x32xf32>
    %c0_92 = arith.constant 0 : index
    %c0_93 = arith.constant 0 : index
    %c0_94 = arith.constant 0 : index
    %193 = vector.load %arg17[%c0_92, %c0_93, %c0_94] : memref<2x1x32xf32, #tpu.memory_space<vmem>>, vector<1x1x32xf32>
    %194 = vector.shape_cast %193 : vector<1x1x32xf32> to vector<1x32xf32>
    %195 = vector.broadcast %194 : vector<1x32xf32> to vector<10x32xf32>
    %196 = arith.addf %192, %195 : vector<10x32xf32>
    %c1 = arith.constant 1 : index
    %c0_95 = arith.constant 0 : index
    %c0_96 = arith.constant 0 : index
    %197 = vector.load %arg6[%c1, %c0_95, %c0_96] : memref<2x1x32xf32, #tpu.memory_space<vmem>>, vector<1x1x32xf32>
    %198 = vector.shape_cast %197 : vector<1x1x32xf32> to vector<1x32xf32>
    %c1_97 = arith.constant 1 : index
    %c0_98 = arith.constant 0 : index
    %c0_99 = arith.constant 0 : index
    %199 = vector.load %arg7[%c1_97, %c0_98, %c0_99] : memref<2x1x32xf32, #tpu.memory_space<vmem>>, vector<1x1x32xf32>
    %200 = vector.shape_cast %199 : vector<1x1x32xf32> to vector<1x32xf32>
    %cst_100 = arith.constant dense<0.000000e+00> : vector<10xf32>
    %201 = vector.multi_reduction <add>, %196, %cst_100 [1] : vector<10x32xf32> to vector<10xf32>
    %202 = vector.shape_cast %201 : vector<10xf32> to vector<10x1xf32>
    %cst_101 = arith.constant 3.200000e+01 : f32
    %203 = vector.broadcast %cst_101 : f32 to vector<10x1xf32>
    %204 = arith.divf %202, %203 : vector<10x1xf32>
    %205 = vector.broadcast %204 : vector<10x1xf32> to vector<10x32xf32>
    %206 = arith.subf %196, %205 : vector<10x32xf32>
    %207 = arith.mulf %206, %206 : vector<10x32xf32>
    %cst_102 = arith.constant dense<0.000000e+00> : vector<10xf32>
    %208 = vector.multi_reduction <add>, %207, %cst_102 [1] : vector<10x32xf32> to vector<10xf32>
    %209 = vector.shape_cast %208 : vector<10xf32> to vector<10x1xf32>
    %cst_103 = arith.constant 3.200000e+01 : f32
    %210 = vector.broadcast %cst_103 : f32 to vector<10x1xf32>
    %211 = arith.divf %209, %210 : vector<10x1xf32>
    %212 = vector.broadcast %204 : vector<10x1xf32> to vector<10x32xf32>
    %213 = arith.subf %196, %212 : vector<10x32xf32>
    %cst_104 = arith.constant 9.99999974E-6 : f32
    %214 = vector.broadcast %cst_104 : f32 to vector<10x1xf32>
    %215 = arith.addf %211, %214 : vector<10x1xf32>
    %216 = math.rsqrt %215 : vector<10x1xf32>
    %217 = vector.broadcast %216 : vector<10x1xf32> to vector<10x32xf32>
    %218 = arith.mulf %213, %217 : vector<10x32xf32>
    %219 = vector.broadcast %198 : vector<1x32xf32> to vector<10x32xf32>
    %220 = arith.mulf %218, %219 : vector<10x32xf32>
    %221 = vector.broadcast %200 : vector<1x32xf32> to vector<10x32xf32>
    %222 = arith.addf %220, %221 : vector<10x32xf32>
    %c1_105 = arith.constant 1 : index
    %c0_106 = arith.constant 0 : index
    %c0_107 = arith.constant 0 : index
    %223 = vector.load %arg8[%c1_105, %c0_106, %c0_107] : memref<2x32x96xf32, #tpu.memory_space<vmem>>, vector<1x32x96xf32>
    %224 = vector.shape_cast %223 : vector<1x32x96xf32> to vector<32x96xf32>
    %cst_108 = arith.constant dense<0.000000e+00> : vector<10x96xf32>
    %225 = tpu.matmul %222, %224, %cst_108 {dimension_numbers = #tpu.dot_dimension_numbers<[1], [0], [0], [1], [0, 0, 1, 1], [], []>} : vector<10x32xf32>, vector<32x96xf32>, vector<10x96xf32> -> vector<10x96xf32>
    %c1_109 = arith.constant 1 : index
    %c0_110 = arith.constant 0 : index
    %c0_111 = arith.constant 0 : index
    %226 = vector.load %arg9[%c1_109, %c0_110, %c0_111] : memref<2x1x96xf32, #tpu.memory_space<vmem>>, vector<1x1x96xf32>
    %227 = vector.shape_cast %226 : vector<1x1x96xf32> to vector<1x96xf32>
    %228 = vector.broadcast %227 : vector<1x96xf32> to vector<10x96xf32>
    %229 = arith.addf %225, %228 : vector<10x96xf32>
    %230 = vector.extract_strided_slice %229 {offsets = [0, 0], sizes = [10, 8], strides = [1, 1]} : vector<10x96xf32> to vector<10x8xf32>
    %231 = vector.extract_strided_slice %229 {offsets = [0, 32], sizes = [10, 8], strides = [1, 1]} : vector<10x96xf32> to vector<10x8xf32>
    %232 = vector.extract_strided_slice %229 {offsets = [0, 64], sizes = [10, 8], strides = [1, 1]} : vector<10x96xf32> to vector<10x8xf32>
    %cst_112 = arith.constant dense<0.000000e+00> : vector<10x10xf32>
    %233 = tpu.matmul %230, %231, %cst_112 {dimension_numbers = #tpu.dot_dimension_numbers<[1], [1], [0], [0], [0, 0, 1, 0], [], []>} : vector<10x8xf32>, vector<10x8xf32>, vector<10x10xf32> -> vector<10x10xf32>
    %cst_113 = arith.constant 0.353553385 : f32
    %234 = vector.broadcast %cst_113 : f32 to vector<10x10xf32>
    %235 = arith.mulf %233, %234 : vector<10x10xf32>
    %236 = arith.addf %235, %0 : vector<10x10xf32>
    %cst_114 = arith.constant dense<0xFF800000> : vector<10xf32>
    %237 = vector.multi_reduction <maximumf>, %236, %cst_114 [1] : vector<10x10xf32> to vector<10xf32>
    %238 = vector.shape_cast %237 : vector<10xf32> to vector<10x1xf32>
    %239 = vector.broadcast %238 : vector<10x1xf32> to vector<10x10xf32>
    %240 = arith.subf %236, %239 : vector<10x10xf32>
    %241 = math.exp %240 : vector<10x10xf32>
    %cst_115 = arith.constant dense<0.000000e+00> : vector<10xf32>
    %242 = vector.multi_reduction <add>, %241, %cst_115 [1] : vector<10x10xf32> to vector<10xf32>
    %243 = vector.shape_cast %242 : vector<10xf32> to vector<10x1xf32>
    %244 = tpu.reciprocal %243 {approx = true} : vector<10x1xf32> -> vector<10x1xf32>
    %245 = vector.broadcast %244 : vector<10x1xf32> to vector<10x10xf32>
    %246 = arith.mulf %241, %245 : vector<10x10xf32>
    %cst_116 = arith.constant dense<0.000000e+00> : vector<10x8xf32>
    %247 = tpu.matmul %246, %232, %cst_116 {dimension_numbers = #tpu.dot_dimension_numbers<[1], [0], [0], [1], [0, 0, 1, 1], [], []>} : vector<10x10xf32>, vector<10x8xf32>, vector<10x8xf32> -> vector<10x8xf32>
    %c0_117 = arith.constant 0 : index
    %c0_118 = arith.constant 0 : index
    %248 = vector.load %arg28[%c0_117, %c0_118] : memref<10x32xf32, #tpu.memory_space<vmem>>, vector<10x8xf32>
    tpu.vector_store %arg28[%c0_117, %c0_118], %247 {strides = array<i32>} : memref<10x32xf32, #tpu.memory_space<vmem>>, vector<10x8xf32>,
    %249 = vector.extract_strided_slice %229 {offsets = [0, 8], sizes = [10, 8], strides = [1, 1]} : vector<10x96xf32> to vector<10x8xf32>
    %250 = vector.extract_strided_slice %229 {offsets = [0, 40], sizes = [10, 8], strides = [1, 1]} : vector<10x96xf32> to vector<10x8xf32>
    %251 = vector.extract_strided_slice %229 {offsets = [0, 72], sizes = [10, 8], strides = [1, 1]} : vector<10x96xf32> to vector<10x8xf32>
    %cst_119 = arith.constant dense<0.000000e+00> : vector<10x10xf32>
    %252 = tpu.matmul %249, %250, %cst_119 {dimension_numbers = #tpu.dot_dimension_numbers<[1], [1], [0], [0], [0, 0, 1, 0], [], []>} : vector<10x8xf32>, vector<10x8xf32>, vector<10x10xf32> -> vector<10x10xf32>
    %cst_120 = arith.constant 0.353553385 : f32
    %253 = vector.broadcast %cst_120 : f32 to vector<10x10xf32>
    %254 = arith.mulf %252, %253 : vector<10x10xf32>
    %255 = arith.addf %254, %0 : vector<10x10xf32>
    %cst_121 = arith.constant dense<0xFF800000> : vector<10xf32>
    %256 = vector.multi_reduction <maximumf>, %255, %cst_121 [1] : vector<10x10xf32> to vector<10xf32>
    %257 = vector.shape_cast %256 : vector<10xf32> to vector<10x1xf32>
    %258 = vector.broadcast %257 : vector<10x1xf32> to vector<10x10xf32>
    %259 = arith.subf %255, %258 : vector<10x10xf32>
    %260 = math.exp %259 : vector<10x10xf32>
    %cst_122 = arith.constant dense<0.000000e+00> : vector<10xf32>
    %261 = vector.multi_reduction <add>, %260, %cst_122 [1] : vector<10x10xf32> to vector<10xf32>
    %262 = vector.shape_cast %261 : vector<10xf32> to vector<10x1xf32>
    %263 = tpu.reciprocal %262 {approx = true} : vector<10x1xf32> -> vector<10x1xf32>
    %264 = vector.broadcast %263 : vector<10x1xf32> to vector<10x10xf32>
    %265 = arith.mulf %260, %264 : vector<10x10xf32>
    %cst_123 = arith.constant dense<0.000000e+00> : vector<10x8xf32>
    %266 = tpu.matmul %265, %251, %cst_123 {dimension_numbers = #tpu.dot_dimension_numbers<[1], [0], [0], [1], [0, 0, 1, 1], [], []>} : vector<10x10xf32>, vector<10x8xf32>, vector<10x8xf32> -> vector<10x8xf32>
    %c0_124 = arith.constant 0 : index
    %c8_125 = arith.constant 8 : index
    %267 = vector.load %arg28[%c0_124, %c8_125] : memref<10x32xf32, #tpu.memory_space<vmem>>, vector<10x8xf32>
    tpu.vector_store %arg28[%c0_124, %c8_125], %266 {strides = array<i32>} : memref<10x32xf32, #tpu.memory_space<vmem>>, vector<10x8xf32>,
    %268 = vector.extract_strided_slice %229 {offsets = [0, 16], sizes = [10, 8], strides = [1, 1]} : vector<10x96xf32> to vector<10x8xf32>
    %269 = vector.extract_strided_slice %229 {offsets = [0, 48], sizes = [10, 8], strides = [1, 1]} : vector<10x96xf32> to vector<10x8xf32>
    %270 = vector.extract_strided_slice %229 {offsets = [0, 80], sizes = [10, 8], strides = [1, 1]} : vector<10x96xf32> to vector<10x8xf32>
    %cst_126 = arith.constant dense<0.000000e+00> : vector<10x10xf32>
    %271 = tpu.matmul %268, %269, %cst_126 {dimension_numbers = #tpu.dot_dimension_numbers<[1], [1], [0], [0], [0, 0, 1, 0], [], []>} : vector<10x8xf32>, vector<10x8xf32>, vector<10x10xf32> -> vector<10x10xf32>
    %cst_127 = arith.constant 0.353553385 : f32
    %272 = vector.broadcast %cst_127 : f32 to vector<10x10xf32>
    %273 = arith.mulf %271, %272 : vector<10x10xf32>
    %274 = arith.addf %273, %0 : vector<10x10xf32>
    %cst_128 = arith.constant dense<0xFF800000> : vector<10xf32>
    %275 = vector.multi_reduction <maximumf>, %274, %cst_128 [1] : vector<10x10xf32> to vector<10xf32>
    %276 = vector.shape_cast %275 : vector<10xf32> to vector<10x1xf32>
    %277 = vector.broadcast %276 : vector<10x1xf32> to vector<10x10xf32>
    %278 = arith.subf %274, %277 : vector<10x10xf32>
    %279 = math.exp %278 : vector<10x10xf32>
    %cst_129 = arith.constant dense<0.000000e+00> : vector<10xf32>
    %280 = vector.multi_reduction <add>, %279, %cst_129 [1] : vector<10x10xf32> to vector<10xf32>
    %281 = vector.shape_cast %280 : vector<10xf32> to vector<10x1xf32>
    %282 = tpu.reciprocal %281 {approx = true} : vector<10x1xf32> -> vector<10x1xf32>
    %283 = vector.broadcast %282 : vector<10x1xf32> to vector<10x10xf32>
    %284 = arith.mulf %279, %283 : vector<10x10xf32>
    %cst_130 = arith.constant dense<0.000000e+00> : vector<10x8xf32>
    %285 = tpu.matmul %284, %270, %cst_130 {dimension_numbers = #tpu.dot_dimension_numbers<[1], [0], [0], [1], [0, 0, 1, 1], [], []>} : vector<10x10xf32>, vector<10x8xf32>, vector<10x8xf32> -> vector<10x8xf32>
    %c0_131 = arith.constant 0 : index
    %c16_132 = arith.constant 16 : index
    %286 = vector.load %arg28[%c0_131, %c16_132] : memref<10x32xf32, #tpu.memory_space<vmem>>, vector<10x8xf32>
    tpu.vector_store %arg28[%c0_131, %c16_132], %285 {strides = array<i32>} : memref<10x32xf32, #tpu.memory_space<vmem>>, vector<10x8xf32>,
    %287 = vector.extract_strided_slice %229 {offsets = [0, 24], sizes = [10, 8], strides = [1, 1]} : vector<10x96xf32> to vector<10x8xf32>
    %288 = vector.extract_strided_slice %229 {offsets = [0, 56], sizes = [10, 8], strides = [1, 1]} : vector<10x96xf32> to vector<10x8xf32>
    %289 = vector.extract_strided_slice %229 {offsets = [0, 88], sizes = [10, 8], strides = [1, 1]} : vector<10x96xf32> to vector<10x8xf32>
    %cst_133 = arith.constant dense<0.000000e+00> : vector<10x10xf32>
    %290 = tpu.matmul %287, %288, %cst_133 {dimension_numbers = #tpu.dot_dimension_numbers<[1], [1], [0], [0], [0, 0, 1, 0], [], []>} : vector<10x8xf32>, vector<10x8xf32>, vector<10x10xf32> -> vector<10x10xf32>
    %cst_134 = arith.constant 0.353553385 : f32
    %291 = vector.broadcast %cst_134 : f32 to vector<10x10xf32>
    %292 = arith.mulf %290, %291 : vector<10x10xf32>
    %293 = arith.addf %292, %0 : vector<10x10xf32>
    %cst_135 = arith.constant dense<0xFF800000> : vector<10xf32>
    %294 = vector.multi_reduction <maximumf>, %293, %cst_135 [1] : vector<10x10xf32> to vector<10xf32>
    %295 = vector.shape_cast %294 : vector<10xf32> to vector<10x1xf32>
    %296 = vector.broadcast %295 : vector<10x1xf32> to vector<10x10xf32>
    %297 = arith.subf %293, %296 : vector<10x10xf32>
    %298 = math.exp %297 : vector<10x10xf32>
    %cst_136 = arith.constant dense<0.000000e+00> : vector<10xf32>
    %299 = vector.multi_reduction <add>, %298, %cst_136 [1] : vector<10x10xf32> to vector<10xf32>
    %300 = vector.shape_cast %299 : vector<10xf32> to vector<10x1xf32>
    %301 = tpu.reciprocal %300 {approx = true} : vector<10x1xf32> -> vector<10x1xf32>
    %302 = vector.broadcast %301 : vector<10x1xf32> to vector<10x10xf32>
    %303 = arith.mulf %298, %302 : vector<10x10xf32>
    %cst_137 = arith.constant dense<0.000000e+00> : vector<10x8xf32>
    %304 = tpu.matmul %303, %289, %cst_137 {dimension_numbers = #tpu.dot_dimension_numbers<[1], [0], [0], [1], [0, 0, 1, 1], [], []>} : vector<10x10xf32>, vector<10x8xf32>, vector<10x8xf32> -> vector<10x8xf32>
    %c0_138 = arith.constant 0 : index
    %c24_139 = arith.constant 24 : index
    %305 = vector.load %arg28[%c0_138, %c24_139] : memref<10x32xf32, #tpu.memory_space<vmem>>, vector<10x8xf32>
    tpu.vector_store %arg28[%c0_138, %c24_139], %304 {strides = array<i32>} : memref<10x32xf32, #tpu.memory_space<vmem>>, vector<10x8xf32>,
    %c0_140 = arith.constant 0 : index
    %c0_141 = arith.constant 0 : index
    %306 = vector.load %arg28[%c0_140, %c0_141] : memref<10x32xf32, #tpu.memory_space<vmem>>, vector<10x32xf32>
    %c1_142 = arith.constant 1 : index
    %c0_143 = arith.constant 0 : index
    %c0_144 = arith.constant 0 : index
    %307 = vector.load %arg10[%c1_142, %c0_143, %c0_144] : memref<2x32x32xf32, #tpu.memory_space<vmem>>, vector<1x32x32xf32>
    %308 = vector.shape_cast %307 : vector<1x32x32xf32> to vector<32x32xf32>
    %cst_145 = arith.constant dense<0.000000e+00> : vector<10x32xf32>
    %309 = tpu.matmul %306, %308, %cst_145 {dimension_numbers = #tpu.dot_dimension_numbers<[1], [0], [0], [1], [0, 0, 1, 1], [], []>} : vector<10x32xf32>, vector<32x32xf32>, vector<10x32xf32> -> vector<10x32xf32>
    %c1_146 = arith.constant 1 : index
    %c0_147 = arith.constant 0 : index
    %c0_148 = arith.constant 0 : index
    %310 = vector.load %arg11[%c1_146, %c0_147, %c0_148] : memref<2x1x32xf32, #tpu.memory_space<vmem>>, vector<1x1x32xf32>
    %311 = vector.shape_cast %310 : vector<1x1x32xf32> to vector<1x32xf32>
    %312 = vector.broadcast %311 : vector<1x32xf32> to vector<10x32xf32>
    %313 = arith.addf %309, %312 : vector<10x32xf32>
    %314 = arith.addf %196, %313 : vector<10x32xf32>
    %c1_149 = arith.constant 1 : index
    %c0_150 = arith.constant 0 : index
    %c0_151 = arith.constant 0 : index
    %315 = vector.load %arg12[%c1_149, %c0_150, %c0_151] : memref<2x1x32xf32, #tpu.memory_space<vmem>>, vector<1x1x32xf32>
    %316 = vector.shape_cast %315 : vector<1x1x32xf32> to vector<1x32xf32>
    %c1_152 = arith.constant 1 : index
    %c0_153 = arith.constant 0 : index
    %c0_154 = arith.constant 0 : index
    %317 = vector.load %arg13[%c1_152, %c0_153, %c0_154] : memref<2x1x32xf32, #tpu.memory_space<vmem>>, vector<1x1x32xf32>
    %318 = vector.shape_cast %317 : vector<1x1x32xf32> to vector<1x32xf32>
    %cst_155 = arith.constant dense<0.000000e+00> : vector<10xf32>
    %319 = vector.multi_reduction <add>, %314, %cst_155 [1] : vector<10x32xf32> to vector<10xf32>
    %320 = vector.shape_cast %319 : vector<10xf32> to vector<10x1xf32>
    %cst_156 = arith.constant 3.200000e+01 : f32
    %321 = vector.broadcast %cst_156 : f32 to vector<10x1xf32>
    %322 = arith.divf %320, %321 : vector<10x1xf32>
    %323 = vector.broadcast %322 : vector<10x1xf32> to vector<10x32xf32>
    %324 = arith.subf %314, %323 : vector<10x32xf32>
    %325 = arith.mulf %324, %324 : vector<10x32xf32>
    %cst_157 = arith.constant dense<0.000000e+00> : vector<10xf32>
    %326 = vector.multi_reduction <add>, %325, %cst_157 [1] : vector<10x32xf32> to vector<10xf32>
    %327 = vector.shape_cast %326 : vector<10xf32> to vector<10x1xf32>
    %cst_158 = arith.constant 3.200000e+01 : f32
    %328 = vector.broadcast %cst_158 : f32 to vector<10x1xf32>
    %329 = arith.divf %327, %328 : vector<10x1xf32>
    %330 = vector.broadcast %322 : vector<10x1xf32> to vector<10x32xf32>
    %331 = arith.subf %314, %330 : vector<10x32xf32>
    %cst_159 = arith.constant 9.99999974E-6 : f32
    %332 = vector.broadcast %cst_159 : f32 to vector<10x1xf32>
    %333 = arith.addf %329, %332 : vector<10x1xf32>
    %334 = math.rsqrt %333 : vector<10x1xf32>
    %335 = vector.broadcast %334 : vector<10x1xf32> to vector<10x32xf32>
    %336 = arith.mulf %331, %335 : vector<10x32xf32>
    %337 = vector.broadcast %316 : vector<1x32xf32> to vector<10x32xf32>
    %338 = arith.mulf %336, %337 : vector<10x32xf32>
    %339 = vector.broadcast %318 : vector<1x32xf32> to vector<10x32xf32>
    %340 = arith.addf %338, %339 : vector<10x32xf32>
    %c1_160 = arith.constant 1 : index
    %c0_161 = arith.constant 0 : index
    %c0_162 = arith.constant 0 : index
    %341 = vector.load %arg14[%c1_160, %c0_161, %c0_162] : memref<2x32x128xf32, #tpu.memory_space<vmem>>, vector<1x32x128xf32>
    %342 = vector.shape_cast %341 : vector<1x32x128xf32> to vector<32x128xf32>
    %cst_163 = arith.constant dense<0.000000e+00> : vector<10x128xf32>
    %343 = tpu.matmul %340, %342, %cst_163 {dimension_numbers = #tpu.dot_dimension_numbers<[1], [0], [0], [1], [0, 0, 1, 1], [], []>} : vector<10x32xf32>, vector<32x128xf32>, vector<10x128xf32> -> vector<10x128xf32>
    %c1_164 = arith.constant 1 : index
    %c0_165 = arith.constant 0 : index
    %c0_166 = arith.constant 0 : index
    %344 = vector.load %arg15[%c1_164, %c0_165, %c0_166] : memref<2x1x128xf32, #tpu.memory_space<vmem>>, vector<1x1x128xf32>
    %345 = vector.shape_cast %344 : vector<1x1x128xf32> to vector<1x128xf32>
    %346 = vector.broadcast %345 : vector<1x128xf32> to vector<10x128xf32>
    %347 = arith.addf %343, %346 : vector<10x128xf32>
    %cst_167 = arith.constant 1.702000e+00 : f32
    %348 = vector.broadcast %cst_167 : f32 to vector<10x128xf32>
    %349 = arith.mulf %348, %347 : vector<10x128xf32>
    %350 = arith.negf %349 : vector<10x128xf32>
    %351 = math.exp %350 : vector<10x128xf32>
    %cst_168 = arith.constant 1.000000e+00 : f32
    %352 = vector.broadcast %cst_168 : f32 to vector<10x128xf32>
    %353 = arith.addf %352, %351 : vector<10x128xf32>
    %354 = arith.divf %352, %353 : vector<10x128xf32>
    %355 = arith.mulf %347, %354 : vector<10x128xf32>
    %c1_169 = arith.constant 1 : index
    %c0_170 = arith.constant 0 : index
    %c0_171 = arith.constant 0 : index
    %356 = vector.load %arg16[%c1_169, %c0_170, %c0_171] : memref<2x128x32xf32, #tpu.memory_space<vmem>>, vector<1x128x32xf32>
    %357 = vector.shape_cast %356 : vector<1x128x32xf32> to vector<128x32xf32>
    %cst_172 = arith.constant dense<0.000000e+00> : vector<10x32xf32>
    %358 = tpu.matmul %355, %357, %cst_172 {dimension_numbers = #tpu.dot_dimension_numbers<[1], [0], [0], [1], [0, 0, 1, 1], [], []>} : vector<10x128xf32>, vector<128x32xf32>, vector<10x32xf32> -> vector<10x32xf32>
    %359 = arith.addf %314, %358 : vector<10x32xf32>
    %c1_173 = arith.constant 1 : index
    %c0_174 = arith.constant 0 : index
    %c0_175 = arith.constant 0 : index
    %360 = vector.load %arg17[%c1_173, %c0_174, %c0_175] : memref<2x1x32xf32, #tpu.memory_space<vmem>>, vector<1x1x32xf32>
    %361 = vector.shape_cast %360 : vector<1x1x32xf32> to vector<1x32xf32>
    %362 = vector.broadcast %361 : vector<1x32xf32> to vector<10x32xf32>
    %363 = arith.addf %359, %362 : vector<10x32xf32>
    %c0_176 = arith.constant 0 : index
    %c0_177 = arith.constant 0 : index
    %364 = vector.load %arg20[%c0_176, %c0_177] : memref<2x10xf32, #tpu.memory_space<vmem>>, vector<2x10xf32>
    %cst_178 = arith.constant dense<0.000000e+00> : vector<2x32xf32>
    %365 = tpu.matmul %364, %363, %cst_178 {dimension_numbers = #tpu.dot_dimension_numbers<[1], [0], [0], [1], [0, 0, 1, 1], [], []>} : vector<2x10xf32>, vector<10x32xf32>, vector<2x32xf32> -> vector<2x32xf32>
    %c0_179 = arith.constant 0 : index
    %c0_180 = arith.constant 0 : index
    %366 = vector.load %arg18[%c0_179, %c0_180] : memref<1x32xf32, #tpu.memory_space<vmem>>, vector<1x32xf32>
    %c0_181 = arith.constant 0 : index
    %c0_182 = arith.constant 0 : index
    %367 = vector.load %arg19[%c0_181, %c0_182] : memref<1x32xf32, #tpu.memory_space<vmem>>, vector<1x32xf32>
    %cst_183 = arith.constant dense<0.000000e+00> : vector<2xf32>
    %368 = vector.multi_reduction <add>, %365, %cst_183 [1] : vector<2x32xf32> to vector<2xf32>
    %369 = vector.shape_cast %368 : vector<2xf32> to vector<2x1xf32>
    %cst_184 = arith.constant 3.200000e+01 : f32
    %370 = vector.broadcast %cst_184 : f32 to vector<2x1xf32>
    %371 = arith.divf %369, %370 : vector<2x1xf32>
    %372 = vector.broadcast %371 : vector<2x1xf32> to vector<2x32xf32>
    %373 = arith.subf %365, %372 : vector<2x32xf32>
    %374 = arith.mulf %373, %373 : vector<2x32xf32>
    %cst_185 = arith.constant dense<0.000000e+00> : vector<2xf32>
    %375 = vector.multi_reduction <add>, %374, %cst_185 [1] : vector<2x32xf32> to vector<2xf32>
    %376 = vector.shape_cast %375 : vector<2xf32> to vector<2x1xf32>
    %cst_186 = arith.constant 3.200000e+01 : f32
    %377 = vector.broadcast %cst_186 : f32 to vector<2x1xf32>
    %378 = arith.divf %376, %377 : vector<2x1xf32>
    %379 = vector.broadcast %371 : vector<2x1xf32> to vector<2x32xf32>
    %380 = arith.subf %365, %379 : vector<2x32xf32>
    %cst_187 = arith.constant 9.99999974E-6 : f32
    %381 = vector.broadcast %cst_187 : f32 to vector<2x1xf32>
    %382 = arith.addf %378, %381 : vector<2x1xf32>
    %383 = math.rsqrt %382 : vector<2x1xf32>
    %384 = vector.broadcast %383 : vector<2x1xf32> to vector<2x32xf32>
    %385 = arith.mulf %380, %384 : vector<2x32xf32>
    %386 = vector.broadcast %366 : vector<1x32xf32> to vector<2x32xf32>
    %387 = arith.mulf %385, %386 : vector<2x32xf32>
    %388 = vector.broadcast %367 : vector<1x32xf32> to vector<2x32xf32>
    %389 = arith.addf %387, %388 : vector<2x32xf32>
    %c0_188 = arith.constant 0 : index
    %c0_189 = arith.constant 0 : index
    %390 = vector.load %arg22[%c0_188, %c0_189] : memref<32x128xf32, #tpu.memory_space<vmem>>, vector<32x128xf32>
    %cst_190 = arith.constant dense<0.000000e+00> : vector<2x128xf32>
    %391 = tpu.matmul %389, %390, %cst_190 {dimension_numbers = #tpu.dot_dimension_numbers<[1], [0], [0], [1], [0, 0, 1, 1], [], []>} : vector<2x32xf32>, vector<32x128xf32>, vector<2x128xf32> -> vector<2x128xf32>
    %c0_191 = arith.constant 0 : index
    %c0_192 = arith.constant 0 : index
    %392 = vector.load %arg21[%c0_191, %c0_192] : memref<2x2xf32, #tpu.memory_space<vmem>>, vector<2x2xf32>
    %c0_193 = arith.constant 0 : index
    %c0_194 = arith.constant 0 : index
    %393 = vector.load %arg23[%c0_193, %c0_194] : memref<2x128xf32, #tpu.memory_space<vmem>>, vector<2x128xf32>
    %cst_195 = arith.constant dense<0.000000e+00> : vector<2x128xf32>
    %394 = tpu.matmul %392, %393, %cst_195 {dimension_numbers = #tpu.dot_dimension_numbers<[1], [0], [0], [1], [0, 0, 1, 1], [], []>} : vector<2x2xf32>, vector<2x128xf32>, vector<2x128xf32> -> vector<2x128xf32>
    %395 = arith.addf %391, %394 : vector<2x128xf32>
    %c0_196 = arith.constant 0 : index
    %c0_197 = arith.constant 0 : index
    %396 = vector.load %arg24[%c0_196, %c0_197] : memref<1x128xf32, #tpu.memory_space<vmem>>, vector<1x128xf32>
    %397 = vector.broadcast %396 : vector<1x128xf32> to vector<2x128xf32>
    %398 = arith.addf %395, %397 : vector<2x128xf32>
    %cst_198 = arith.constant 0.000000e+00 : f32
    %399 = vector.broadcast %cst_198 : f32 to vector<2x128xf32>
    %400 = arith.cmpf ogt, %398, %399 : vector<2x128xf32>
    %cst_199 = arith.constant 2.000000e-01 : f32
    %401 = vector.broadcast %cst_199 : f32 to vector<2x128xf32>
    %402 = arith.mulf %401, %398 : vector<2x128xf32>
    %403 = arith.select %400, %398, %402 : vector<2x128xi1>, vector<2x128xf32>
    %c0_200 = arith.constant 0 : index
    %c0_201 = arith.constant 0 : index
    %404 = vector.load %arg25[%c0_200, %c0_201] : memref<128x1xf32, #tpu.memory_space<vmem>>, vector<128x1xf32>
    %cst_202 = arith.constant dense<0.000000e+00> : vector<2x1xf32>
    %405 = tpu.matmul %403, %404, %cst_202 {dimension_numbers = #tpu.dot_dimension_numbers<[1], [0], [0], [1], [0, 0, 1, 1], [], []>} : vector<2x128xf32>, vector<128x1xf32>, vector<2x1xf32> -> vector<2x1xf32>
    %c0_203 = arith.constant 0 : index
    %c0_204 = arith.constant 0 : index
    %406 = vector.load %arg26[%c0_203, %c0_204] : memref<1x1xf32, #tpu.memory_space<vmem>>, vector<1x1xf32>
    %407 = vector.broadcast %406 : vector<1x1xf32> to vector<2x1xf32>
    %408 = arith.addf %405, %407 : vector<2x1xf32>
    %c0_205 = arith.constant 0 : index
    %c0_206 = arith.constant 0 : index
    %409 = vector.load %arg27[%c0_205, %c0_206] : memref<2x1xf32, #tpu.memory_space<vmem>>, vector<2x1xf32>
    tpu.vector_store %arg27[%c0_205, %c0_206], %408 {strides = array<i32>} : memref<2x1xf32, #tpu.memory_space<vmem>>, vector<2x1xf32>,
    return
  }
}

</mosaic_0001>

<llo_original>
// kernel: clip_binary_classifier_forward.1
$region0: #{clip_binary_classifier_forward.1}
  #allocation0 [shape = 'u32[]', space=smem, size = 0x4, offset = 0x4, fixed_abs, tag = 'smem constant byte address 0x4 - core index']
  #allocation1 [shape = 'u32[144,128]{1,0:T(1,128)}', space=vmem, size = 0x12000, scoped, tag = 'internal scratch']
  #allocation2 [shape = 'f32[10,32]{1,0:T(8,128)}', space=vmem, size = 0x2000, scoped, tag = 'scratch operand']
  #allocation3 [shape = 'f32[1,1]{1,0:T(1,128)S(1)}', space=vmem, size = 0x200, scoped, tag = 'scoped memory for clip_binary_classifier_forward.1']
  %s0 = inlined_call_operand.vmem [shape: f32[10,256], index: 0, kind: input, shape index: {}]
  %s1 = inlined_call_operand.vmem [shape: f32[256,32], index: 1, kind: input, shape index: {}]
  %s2 = inlined_call_operand.vmem [shape: f32[10,32], index: 2, kind: input, shape index: {}]
  %s3 = inlined_call_operand.vmem [shape: f32[1,32], index: 3, kind: input, shape index: {}]
  %s4 = inlined_call_operand.vmem [shape: f32[1,32], index: 4, kind: input, shape index: {}]
  %s5 = inlined_call_operand.vmem [shape: f32[10,10], index: 5, kind: input, shape index: {}]
  %s6 = inlined_call_operand.vmem [shape: f32[2,1,32], index: 6, kind: input, shape index: {}]
  %s7 = inlined_call_operand.vmem [shape: f32[2,1,32], index: 7, kind: input, shape index: {}]
  %s8 = inlined_call_operand.vmem [shape: f32[2,32,96], index: 8, kind: input, shape index: {}]
  %s9 = inlined_call_operand.vmem [shape: f32[2,1,96], index: 9, kind: input, shape index: {}]
  %s10 = inlined_call_operand.vmem [shape: f32[2,32,32], index: 10, kind: input, shape index: {}]
  %s11 = inlined_call_operand.vmem [shape: f32[2,1,32], index: 11, kind: input, shape index: {}]
  %s12 = inlined_call_operand.vmem [shape: f32[2,1,32], index: 12, kind: input, shape index: {}]
  %s13 = inlined_call_operand.vmem [shape: f32[2,1,32], index: 13, kind: input, shape index: {}]
  %s14 = inlined_call_operand.vmem [shape: f32[2,32,128], index: 14, kind: input, shape index: {}]
  %s15 = inlined_call_operand.vmem [shape: f32[2,1,128], index: 15, kind: input, shape index: {}]
  %s16 = inlined_call_operand.vmem [shape: f32[2,128,32], index: 16, kind: input, shape index: {}]
  %s17 = inlined_call_operand.vmem [shape: f32[2,1,32], index: 17, kind: input, shape index: {}]
  %s18 = inlined_call_operand.vmem [shape: f32[1,32], index: 18, kind: input, shape index: {}]
  %s19 = inlined_call_operand.vmem [shape: f32[1,32], index: 19, kind: input, shape index: {}]
  %s20 = inlined_call_operand.vmem [shape: f32[2,10], index: 20, kind: input, shape index: {}]
  %s21 = inlined_call_operand.vmem [shape: f32[2,2], index: 21, kind: input, shape index: {}]
  %s22 = inlined_call_operand.vmem [shape: f32[32,128], index: 22, kind: input, shape index: {}]
  %s23 = inlined_call_operand.vmem [shape: f32[2,128], index: 23, kind: input, shape index: {}]
  %s24 = inlined_call_operand.vmem [shape: f32[1,128], index: 24, kind: input, shape index: {}]
  %s25 = inlined_call_operand.vmem [shape: f32[128,1], index: 25, kind: input, shape index: {}]
  %s26 = inlined_call_operand.<no memory space> [shape: f32[1,1], index: 26, kind: input, shape index: {}]
  %s27 = inlined_call_operand.vmem [shape: f32[2,1], index: 27, kind: output, shape index: {}]
  %s28 = sld [smem:[#allocation0]]
  $region118: #{clip_binary_classifier_forward.1} parent=0
    _
  %s30 = ssub.s32 1, %s28
  %s31 = scalar_select 0, %s30, %s28
  %v32 = vstv %s26
  %33 = vst [vmem:[#allocation3] sm:$0x1] %v32
  // Predicated region
  $region2: #{clip_binary_classifier_forward.1} parent=0 // pred_check
    _
  $region3: #{clip_binary_classifier_forward.1} parent=0 // pred_check_branch
    %35 = sbr.rel (0) target = $region5
  $region4: #{clip_binary_classifier_forward.1} parent=0 // pred_region
    _
  $region5: #{clip_binary_classifier_forward.1} parent=0 // pred_fallthru
    _
  // Predicated region
  $region6: #{clip_binary_classifier_forward.1} parent=0 // pred_check
    _
  $region7: #{clip_binary_classifier_forward.1} parent=0 // pred_check_branch
    %37 = sbr.rel (0) target = $region9
  $region8: #{clip_binary_classifier_forward.1} parent=0 // pred_region
    _
  $region9: #{clip_binary_classifier_forward.1} parent=0 // pred_fallthru
    _
  // Predicated region
  $region10: #{clip_binary_classifier_forward.1} parent=0 // pred_check
    _
  $region11: #{clip_binary_classifier_forward.1} parent=0 // pred_check_branch
    %39 = sbr.rel (0) target = $region13
  $region12: #{clip_binary_classifier_forward.1} parent=0 // pred_region
    _
  $region13: #{clip_binary_classifier_forward.1} parent=0 // pred_fallthru
    _
  // Predicated region
  $region14: #{clip_binary_classifier_forward.1} parent=0 // pred_check
    _
  $region15: #{clip_binary_classifier_forward.1} parent=0 // pred_check_branch
    %41 = sbr.rel (0) target = $region17
  $region16: #{clip_binary_classifier_forward.1} parent=0 // pred_region
    _
  $region17: #{clip_binary_classifier_forward.1} parent=0 // pred_fallthru
    _
  // Predicated region
  $region18: #{clip_binary_classifier_forward.1} parent=0 // pred_check
    _
  $region19: #{clip_binary_classifier_forward.1} parent=0 // pred_check_branch
    %43 = sbr.rel (0) target = $region21
  $region20: #{clip_binary_classifier_forward.1} parent=0 // pred_region
    _
  $region21: #{clip_binary_classifier_forward.1} parent=0 // pred_fallthru
    _
  // Predicated region
  $region22: #{clip_binary_classifier_forward.1} parent=0 // pred_check
    _
  $region23: #{clip_binary_classifier_forward.1} parent=0 // pred_check_branch
    %45 = sbr.rel (0) target = $region25
  $region24: #{clip_binary_classifier_forward.1} parent=0 // pred_region
    _
  $region25: #{clip_binary_classifier_forward.1} parent=0 // pred_fallthru
    _
  // Predicated region
  $region26: #{clip_binary_classifier_forward.1} parent=0 // pred_check
    _
  $region27: #{clip_binary_classifier_forward.1} parent=0 // pred_check_branch
    %47 = sbr.rel (0) target = $region29
  $region28: #{clip_binary_classifier_forward.1} parent=0 // pred_region
    _
  $region29: #{clip_binary_classifier_forward.1} parent=0 // pred_fallthru
    _
  // Predicated region
  $region30: #{clip_binary_classifier_forward.1} parent=0 // pred_check
    _
  $region31: #{clip_binary_classifier_forward.1} parent=0 // pred_check_branch
    %49 = sbr.rel (0) target = $region33
  $region32: #{clip_binary_classifier_forward.1} parent=0 // pred_region
    _
  $region33: #{clip_binary_classifier_forward.1} parent=0 // pred_fallthru
    _
  // Predicated region
  $region34: #{clip_binary_classifier_forward.1} parent=0 // pred_check
    _
  $region35: #{clip_binary_classifier_forward.1} parent=0 // pred_check_branch
    %51 = sbr.rel (0) target = $region37
  $region36: #{clip_binary_classifier_forward.1} parent=0 // pred_region
    _
  $region37: #{clip_binary_classifier_forward.1} parent=0 // pred_fallthru
    _
  // Predicated region
  $region38: #{clip_binary_classifier_forward.1} parent=0 // pred_check
    _
  $region39: #{clip_binary_classifier_forward.1} parent=0 // pred_check_branch
    %53 = sbr.rel (0) target = $region41
  $region40: #{clip_binary_classifier_forward.1} parent=0 // pred_region
    _
  $region41: #{clip_binary_classifier_forward.1} parent=0 // pred_fallthru
    _
  // Predicated region
  $region42: #{clip_binary_classifier_forward.1} parent=0 // pred_check
    _
  $region43: #{clip_binary_classifier_forward.1} parent=0 // pred_check_branch
    %55 = sbr.rel (0) target = $region45
  $region44: #{clip_binary_classifier_forward.1} parent=0 // pred_region
    _
  $region45: #{clip_binary_classifier_forward.1} parent=0 // pred_fallthru
    _
  // Predicated region
  $region46: #{clip_binary_classifier_forward.1} parent=0 // pred_check
    _
  $region47: #{clip_binary_classifier_forward.1} parent=0 // pred_check_branch
    %57 = sbr.rel (0) target = $region49
  $region48: #{clip_binary_classifier_forward.1} parent=0 // pred_region
    _
  $region49: #{clip_binary_classifier_forward.1} parent=0 // pred_fallthru
    _
  // Predicated region
  $region50: #{clip_binary_classifier_forward.1} parent=0 // pred_check
    _
  $region51: #{clip_binary_classifier_forward.1} parent=0 // pred_check_branch
    %59 = sbr.rel (0) target = $region53
  $region52: #{clip_binary_classifier_forward.1} parent=0 // pred_region
    _
  $region53: #{clip_binary_classifier_forward.1} parent=0 // pred_fallthru
    _
  // Predicated region
  $region54: #{clip_binary_classifier_forward.1} parent=0 // pred_check
    _
  $region55: #{clip_binary_classifier_forward.1} parent=0 // pred_check_branch
    %61 = sbr.rel (0) target = $region57
  $region56: #{clip_binary_classifier_forward.1} parent=0 // pred_region
    _
  $region57: #{clip_binary_classifier_forward.1} parent=0 // pred_fallthru
    _
  // Predicated region
  $region58: #{clip_binary_classifier_forward.1} parent=0 // pred_check
    _
  $region59: #{clip_binary_classifier_forward.1} parent=0 // pred_check_branch
    %63 = sbr.rel (0) target = $region61
  $region60: #{clip_binary_classifier_forward.1} parent=0 // pred_region
    _
  $region61: #{clip_binary_classifier_forward.1} parent=0 // pred_fallthru
    _
  // Predicated region
  $region62: #{clip_binary_classifier_forward.1} parent=0 // pred_check
    _
  $region63: #{clip_binary_classifier_forward.1} parent=0 // pred_check_branch
    %65 = sbr.rel (0) target = $region65
  $region64: #{clip_binary_classifier_forward.1} parent=0 // pred_region
    _
  $region65: #{clip_binary_classifier_forward.1} parent=0 // pred_fallthru
    _
  // Predicated region
  $region66: #{clip_binary_classifier_forward.1} parent=0 // pred_check
    _
  $region67: #{clip_binary_classifier_forward.1} parent=0 // pred_check_branch
    %67 = sbr.rel (0) target = $region69
  $region68: #{clip_binary_classifier_forward.1} parent=0 // pred_region
    _
  $region69: #{clip_binary_classifier_forward.1} parent=0 // pred_fallthru
    _
  // Predicated region
  $region70: #{clip_binary_classifier_forward.1} parent=0 // pred_check
    _
  $region71: #{clip_binary_classifier_forward.1} parent=0 // pred_check_branch
    %69 = sbr.rel (0) target = $region73
  $region72: #{clip_binary_classifier_forward.1} parent=0 // pred_region
    _
  $region73: #{clip_binary_classifier_forward.1} parent=0 // pred_fallthru
    _
  // Predicated region
  $region74: #{clip_binary_classifier_forward.1} parent=0 // pred_check
    _
  $region75: #{clip_binary_classifier_forward.1} parent=0 // pred_check_branch
    %71 = sbr.rel (0) target = $region77
  $region76: #{clip_binary_classifier_forward.1} parent=0 // pred_region
    _
  $region77: #{clip_binary_classifier_forward.1} parent=0 // pred_fallthru
    _
  // Predicated region
  $region78: #{clip_binary_classifier_forward.1} parent=0 // pred_check
    _
  $region79: #{clip_binary_classifier_forward.1} parent=0 // pred_check_branch
    %73 = sbr.rel (0) target = $region81
  $region80: #{clip_binary_classifier_forward.1} parent=0 // pred_region
    _
  $region81: #{clip_binary_classifier_forward.1} parent=0 // pred_fallthru
    _
  // Predicated region
  $region82: #{clip_binary_classifier_forward.1} parent=0 // pred_check
    _
  $region83: #{clip_binary_classifier_forward.1} parent=0 // pred_check_branch
    %75 = sbr.rel (0) target = $region85
  $region84: #{clip_binary_classifier_forward.1} parent=0 // pred_region
    _
  $region85: #{clip_binary_classifier_forward.1} parent=0 // pred_fallthru
    _
  // Predicated region
  $region86: #{clip_binary_classifier_forward.1} parent=0 // pred_check
    _
  $region87: #{clip_binary_classifier_forward.1} parent=0 // pred_check_branch
    %77 = sbr.rel (0) target = $region89
  $region88: #{clip_binary_classifier_forward.1} parent=0 // pred_region
    _
  $region89: #{clip_binary_classifier_forward.1} parent=0 // pred_fallthru
    _
  // Predicated region
  $region90: #{clip_binary_classifier_forward.1} parent=0 // pred_check
    _
  $region91: #{clip_binary_classifier_forward.1} parent=0 // pred_check_branch
    %79 = sbr.rel (0) target = $region93
  $region92: #{clip_binary_classifier_forward.1} parent=0 // pred_region
    _
  $region93: #{clip_binary_classifier_forward.1} parent=0 // pred_fallthru
    _
  // Predicated region
  $region94: #{clip_binary_classifier_forward.1} parent=0 // pred_check
    _
  $region95: #{clip_binary_classifier_forward.1} parent=0 // pred_check_branch
    %81 = sbr.rel (0) target = $region97
  $region96: #{clip_binary_classifier_forward.1} parent=0 // pred_region
    _
  $region97: #{clip_binary_classifier_forward.1} parent=0 // pred_fallthru
    _
  // Predicated region
  $region98: #{clip_binary_classifier_forward.1} parent=0 // pred_check
    _
  $region99: #{clip_binary_classifier_forward.1} parent=0 // pred_check_branch
    %83 = sbr.rel (0) target = $region101
  $region100: #{clip_binary_classifier_forward.1} parent=0 // pred_region
    _
  $region101: #{clip_binary_classifier_forward.1} parent=0 // pred_fallthru
    _
  // Predicated region
  $region102: #{clip_binary_classifier_forward.1} parent=0 // pred_check
    _
  $region103: #{clip_binary_classifier_forward.1} parent=0 // pred_check_branch
    %85 = sbr.rel (0) target = $region105
  $region104: #{clip_binary_classifier_forward.1} parent=0 // pred_region
    _
  $region105: #{clip_binary_classifier_forward.1} parent=0 // pred_fallthru
    _
  // Predicated region
  $region106: #{clip_binary_classifier_forward.1} parent=0 // pred_check
    _
  $region107: #{clip_binary_classifier_forward.1} parent=0 // pred_check_branch
    %87 = sbr.rel (0) target = $region109
  $region108: #{clip_binary_classifier_forward.1} parent=0 // pred_region
    _
  $region109: #{clip_binary_classifier_forward.1} parent=0 // pred_fallthru
    _
  %v88 = vld [vmem:[%s5] sm:$0xff]
  %v89 = vld [vmem:[%s5 + $0x8] sm:$0x3]
  %v90 = vld [vmem:[%s0] sm:$0xff]
  %v91 = vld [vmem:[%s0 + $0x8] sm:$0xff]
  %v92 = vld [vmem:[%s0 + $0x10] sm:$0x3]
  %v93 = vld [vmem:[%s0 + $0x18] sm:$0x3]
  %v94 = vld [vmem:[%s1] sm:$0xff]
  %v95 = vld [vmem:[%s1 + $0x8] sm:$0xff]
  %v96 = vld [vmem:[%s1 + $0x10] sm:$0xff]
  %v97 = vld [vmem:[%s1 + $0x18] sm:$0xff]
  %v98 = vld [vmem:[%s1 + $0x20] sm:$0xff]
  %v99 = vld [vmem:[%s1 + $0x28] sm:$0xff]
  %v100 = vld [vmem:[%s1 + $0x30] sm:$0xff]
  %v101 = vld [vmem:[%s1 + $0x38] sm:$0xff]
  %v102 = vld [vmem:[%s1 + $0x40] sm:$0xff]
  %v103 = vld [vmem:[%s1 + $0x48] sm:$0xff]
  %v104 = vld [vmem:[%s1 + $0x50] sm:$0xff]
  %v105 = vld [vmem:[%s1 + $0x58] sm:$0xff]
  %v106 = vld [vmem:[%s1 + $0x60] sm:$0xff]
  %v107 = vld [vmem:[%s1 + $0x68] sm:$0xff]
  %v108 = vld [vmem:[%s1 + $0x70] sm:$0xff]
  %v109 = vld [vmem:[%s1 + $0x78] sm:$0xff]
  %v110 = vld [vmem:[%s1 + $0x80] sm:$0xff]
  %v111 = vld [vmem:[%s1 + $0x88] sm:$0xff]
  %v112 = vld [vmem:[%s1 + $0x90] sm:$0xff]
  %v113 = vld [vmem:[%s1 + $0x98] sm:$0xff]
  %v114 = vld [vmem:[%s1 + $0xa0] sm:$0xff]
  %v115 = vld [vmem:[%s1 + $0xa8] sm:$0xff]
  %v116 = vld [vmem:[%s1 + $0xb0] sm:$0xff]
  %v117 = vld [vmem:[%s1 + $0xb8] sm:$0xff]
  %v118 = vld [vmem:[%s1 + $0xc0] sm:$0xff]
  %v119 = vld [vmem:[%s1 + $0xc8] sm:$0xff]
  %v120 = vld [vmem:[%s1 + $0xd0] sm:$0xff]
  %v121 = vld [vmem:[%s1 + $0xd8] sm:$0xff]
  %v122 = vld [vmem:[%s1 + $0xe0] sm:$0xff]
  %v123 = vld [vmem:[%s1 + $0xe8] sm:$0xff]
  %v124 = vld [vmem:[%s1 + $0xf0] sm:$0xff]
  %v125 = vld [vmem:[%s1 + $0xf8] sm:$0xff]
  %v126 = vld [vmem:[%s2] sm:$0xff]
  %v127 = vld [vmem:[%s2 + $0x8] sm:$0x3]
  %128 = vmatprep.subr.mxu0 0.0
  %129 = vmatpush1.msra.mxu0 %v94
  %130 = vmatprep.subr.mxu0 0.0
  %131 = vmatpush1.msra.mxu0 %v95
  %132 = vmatprep.subr.mxu0 0.0
  %133 = vmatpush1.msra.mxu0 %v96
  %134 = vmatprep.subr.mxu0 0.0
  %135 = vmatpush1.msra.mxu0 %v97
  %136 = vmatprep.subr.mxu0 0.0
  %137 = vmatpush1.msra.mxu0 %v98
  %138 = vmatprep.subr.mxu0 0.0
  %139 = vmatpush1.msra.mxu0 %v99
  %140 = vmatprep.subr.mxu0 0.0
  %141 = vmatpush1.msra.mxu0 %v100
  %142 = vmatprep.subr.mxu0 0.0
  %143 = vmatpush1.msra.mxu0 %v101
  %144 = vmatprep.subr.mxu0 0.0
  %145 = vmatpush1.msra.mxu0 %v102
  %146 = vmatprep.subr.mxu0 0.0
  %147 = vmatpush1.msra.mxu0 %v103
  %148 = vmatprep.subr.mxu0 0.0
  %149 = vmatpush1.msra.mxu0 %v104
  %150 = vmatprep.subr.mxu0 0.0
  %151 = vmatpush1.msra.mxu0 %v105
  %152 = vmatprep.subr.mxu0 0.0
  %153 = vmatpush1.msra.mxu0 %v106
  %154 = vmatprep.subr.mxu0 0.0
  %155 = vmatpush1.msra.mxu0 %v107
  %156 = vmatprep.subr.mxu0 0.0
  %157 = vmatpush1.msra.mxu0 %v108
  %158 = vmatprep.subr.mxu0 0.0
  %159 = vmatpush1.msra.mxu0 %v109
  %160 = vmatprep.subr.mxu0 0.0
  %161 = vmatpush1.msra.mxu0 %v110
  %162 = vmatprep.subr.mxu0 0.0
  %163 = vmatpush1.msra.mxu0 %v111
  %164 = vmatprep.subr.mxu0 0.0
  %165 = vmatpush1.msra.mxu0 %v112
  %166 = vmatprep.subr.mxu0 0.0
  %167 = vmatpush1.msra.mxu0 %v113
  %168 = vmatprep.subr.mxu0 0.0
  %169 = vmatpush1.msra.mxu0 %v114
  %170 = vmatprep.subr.mxu0 0.0
  %171 = vmatpush1.msra.mxu0 %v115
  %172 = vmatprep.subr.mxu0 0.0
  %173 = vmatpush1.msra.mxu0 %v116
  %174 = vmatprep.subr.mxu0 0.0
  %175 = vmatpush1.msra.mxu0 %v117
  %176 = vmatprep.subr.mxu0 0.0
  %177 = vmatpush1.msra.mxu0 %v118
  %178 = vmatprep.subr.mxu0 0.0
  %179 = vmatpush1.msra.mxu0 %v119
  %180 = vmatprep.subr.mxu0 0.0
  %181 = vmatpush1.msra.mxu0 %v120
  %182 = vmatprep.subr.mxu0 0.0
  %183 = vmatpush1.msra.mxu0 %v121
  %184 = vmatprep.subr.mxu0 0.0
  %185 = vmatpush1.msra.mxu0 %v122
  %186 = vmatprep.subr.mxu0 0.0
  %187 = vmatpush1.msra.mxu0 %v123
  %188 = vmatprep.subr.mxu0 0.0
  %189 = vmatpush1.msra.mxu0 %v124
  %190 = vmatprep.subr.mxu0 0.0
  %191 = vmatpush1.msra.mxu0 %v125
  %192 = vmatprep.mubr.f32.mxu0 %v91
  %193 = vmatmul.mubr.f32.gmra.mrb[0].mxu0 %v90
  %v194 = vpop.f32.mrb[0].mxu0
  %v195 = vadd.f32 %v126, %v194
  %v196 = vpop.f32.mrb[0].mxu0
  %197 = vmatprep.mubr.f32.mxu0 %v93
  %198 = vmatmul.mubr.f32.gmra.mrb[0].mxu0 %v92
  %v199 = vpop.f32.mrb[0].mxu0
  %v200 = vadd.f32 %v127, %v199
  %v201 = vpop.f32.mrb[0].mxu0
  %202 = vdwg.mxu0
  %v203 = vld [vmem:[%s3] sm:$0x1]
  %v204 = vld [vmem:[%s4] sm:$0x1]
  %vm205 = vcmask 261120
  %v206 = vsel %vm205, %v195, 0.0
  %207 = vadd.xlane.f32.xlu0 %v206
  %v208 = vpop.xlane.xlu0 %207
  %vm209 = vcmask 254976
  %v210 = vsel %vm209, %v200, 0.0
  %211 = vadd.xlane.f32.xlu0 %v210
  %v212 = vpop.xlane.xlu0 %211
  %v213 = vrcp.pop 32.0
  %v214 = vmul.f32 %v208, %v213
  %v215 = vmul.f32 %v212, %v213
  %v216 = vsub.f32 %v195, %v214
  %v217 = vsub.f32 %v200, %v215
  %v218 = vmul.f32 %v216, %v216
  %v219 = vmul.f32 %v217, %v217
  %v220 = vsel %vm205, %v218, 0.0
  %221 = vadd.xlane.f32.xlu0 %v220
  %v222 = vpop.xlane.xlu0 %221
  %v223 = vsel %vm209, %v219, 0.0
  %224 = vadd.xlane.f32.xlu0 %v223
  %v225 = vpop.xlane.xlu0 %224
  %v226 = vmul.f32 %v222, %v213
  %v227 = vmul.f32 %v225, %v213
  %v228 = vadd.f32 %v226, 1e-05
  %v229 = vadd.f32 %v227, 1e-05
  %v230 = vrsqrt.pop %v228
  %v231 = vrsqrt.pop %v229
  %v232 = vmul.f32 %v216, %v230
  %v233 = vmul.f32 %v217, %v231
  %v235 = vlaneseq
  %v236 = vshrl.u32 %v235, 7
  %v237 = vsub.s32 0, %v236
  %v238 = vrot.slane %v203, %v237
  %v240 = vmul.f32 %v232, %v238
  %v241 = vmul.f32 %v233, %v238
  %v243 = vlaneseq
  %v244 = vshrl.u32 %v243, 7
  %v245 = vsub.s32 0, %v244
  %v246 = vrot.slane %v204, %v245
  %v248 = vadd.f32 %v240, %v246
  %v249 = vadd.f32 %v241, %v246
  %v250 = vld [vmem:[%s6] sm:$0x1]
  %v251 = vld [vmem:[%s7] sm:$0x1]
  %v252 = vsel %vm205, %v248, 0.0
  %253 = vadd.xlane.f32.xlu0 %v252
  %v254 = vpop.xlane.xlu0 %253
  %v255 = vsel %vm209, %v249, 0.0
  %256 = vadd.xlane.f32.xlu0 %v255
  %v257 = vpop.xlane.xlu0 %256
  %v258 = vmul.f32 %v254, %v213
  %v259 = vmul.f32 %v257, %v213
  %v260 = vsub.f32 %v248, %v258
  %v261 = vsub.f32 %v249, %v259
  %v262 = vmul.f32 %v260, %v260
  %v263 = vmul.f32 %v261, %v261
  %v264 = vsel %vm205, %v262, 0.0
  %265 = vadd.xlane.f32.xlu0 %v264
  %v266 = vpop.xlane.xlu0 %265
  %v267 = vsel %vm209, %v263, 0.0
  %268 = vadd.xlane.f32.xlu0 %v267
  %v269 = vpop.xlane.xlu0 %268
  %v270 = vmul.f32 %v266, %v213
  %v271 = vmul.f32 %v269, %v213
  %v272 = vadd.f32 %v270, 1e-05
  %v273 = vadd.f32 %v271, 1e-05
  %v274 = vrsqrt.pop %v272
  %v275 = vrsqrt.pop %v273
  %v276 = vmul.f32 %v260, %v274
  %v277 = vmul.f32 %v261, %v275
  %v279 = vlaneseq
  %v280 = vshrl.u32 %v279, 7
  %v281 = vsub.s32 0, %v280
  %v282 = vrot.slane %v250, %v281
  %v284 = vmul.f32 %v276, %v282
  %v285 = vmul.f32 %v277, %v282
  %v287 = vlaneseq
  %v288 = vshrl.u32 %v287, 7
  %v289 = vsub.s32 0, %v288
  %v290 = vrot.slane %v251, %v289
  %v292 = vadd.f32 %v284, %v290
  %v293 = vadd.f32 %v285, %v290
  %v294 = vld [vmem:[%s8] sm:$0xff]
  %v295 = vld [vmem:[%s8 + $0x8] sm:$0xff]
  %v296 = vld [vmem:[%s8 + $0x10] sm:$0xff]
  %v297 = vld [vmem:[%s8 + $0x18] sm:$0xff]
  %v298 = vld [vmem:[%s9] sm:$0x1]
  %v300 = vlaneseq
  %v301 = vshrl.u32 %v300, 7
  %v302 = vsub.s32 0, %v301
  %v303 = vrot.slane %v298, %v302
  %v306 = vsel %vm205, %v292, 0
  %v309 = vsel %vm205, %v293, 0
  %311 = vmatprep.subr.mxu0 0.0
  %312 = vmatpush1.msra.mxu0 %v294
  %313 = vmatprep.subr.mxu0 0.0
  %314 = vmatpush1.msra.mxu0 %v295
  %315 = vmatprep.subr.mxu0 0.0
  %316 = vmatpush1.msra.mxu0 %v296
  %317 = vmatprep.subr.mxu0 0.0
  %318 = vmatpush1.msra.mxu0 %v297
  %319 = vmatprep.subr.mxu0 0.0
  %320 = vmatpush1.msra.mxu0 0.0
  %321 = vmatprep.subr.mxu0 0.0
  %322 = vmatpush1.msra.mxu0 0.0
  %323 = vmatprep.subr.mxu0 0.0
  %324 = vmatpush1.msra.mxu0 0.0
  %325 = vmatprep.subr.mxu0 0.0
  %326 = vmatpush1.msra.mxu0 0.0
  %327 = vmatprep.subr.mxu0 0.0
  %328 = vmatpush1.msra.mxu0 0.0
  %329 = vmatprep.subr.mxu0 0.0
  %330 = vmatpush1.msra.mxu0 0.0
  %331 = vmatprep.subr.mxu0 0.0
  %332 = vmatpush1.msra.mxu0 0.0
  %333 = vmatprep.subr.mxu0 0.0
  %334 = vmatpush1.msra.mxu0 0.0
  %335 = vmatprep.subr.mxu0 0.0
  %336 = vmatpush1.msra.mxu0 0.0
  %337 = vmatprep.subr.mxu0 0.0
  %338 = vmatpush1.msra.mxu0 0.0
  %339 = vmatprep.subr.mxu0 0.0
  %340 = vmatpush1.msra.mxu0 0.0
  %341 = vmatprep.subr.mxu0 0.0
  %342 = vmatpush1.msra.mxu0 0.0
  %343 = vmatprep.subr.mxu0 0.0
  %344 = vmatpush1.msra.mxu0 0.0
  %345 = vmatprep.subr.mxu0 0.0
  %346 = vmatpush1.msra.mxu0 0.0
  %347 = vmatprep.subr.mxu0 0.0
  %348 = vmatpush1.msra.mxu0 0.0
  %349 = vmatprep.subr.mxu0 0.0
  %350 = vmatpush1.msra.mxu0 0.0
  %351 = vmatprep.subr.mxu0 0.0
  %352 = vmatpush1.msra.mxu0 0.0
  %353 = vmatprep.subr.mxu0 0.0
  %354 = vmatpush1.msra.mxu0 0.0
  %355 = vmatprep.subr.mxu0 0.0
  %356 = vmatpush1.msra.mxu0 0.0
  %357 = vmatprep.subr.mxu0 0.0
  %358 = vmatpush1.msra.mxu0 0.0
  %359 = vmatprep.subr.mxu0 0.0
  %360 = vmatpush1.msra.mxu0 0.0
  %361 = vmatprep.subr.mxu0 0.0
  %362 = vmatpush1.msra.mxu0 0.0
  %363 = vmatprep.subr.mxu0 0.0
  %364 = vmatpush1.msra.mxu0 0.0
  %365 = vmatprep.subr.mxu0 0.0
  %366 = vmatpush1.msra.mxu0 0.0
  %367 = vmatprep.subr.mxu0 0.0
  %368 = vmatpush1.msra.mxu0 0.0
  %369 = vmatprep.subr.mxu0 0.0
  %370 = vmatpush1.msra.mxu0 0.0
  %371 = vmatprep.subr.mxu0 0.0
  %372 = vmatpush1.msra.mxu0 0.0
  %373 = vmatprep.subr.mxu0 0.0
  %374 = vmatpush1.msra.mxu0 0.0
  %375 = vmatprep.mubr.f32.mxu0 0.0
  %376 = vmatmul.mubr.f32.gmra.mrb[0].mxu0 %v306
  %v377 = vpop.f32.mrb[0].mxu0
  %v378 = vadd.f32 %v303, %v377
  %v379 = vpop.f32.mrb[0].mxu0
  %380 = vmatprep.mubr.f32.mxu0 0.0
  %381 = vmatmul.mubr.f32.gmra.mrb[0].mxu0 %v309
  %v382 = vpop.f32.mrb[0].mxu0
  %v383 = vadd.f32 %v303, %v382
  %v384 = vpop.f32.mrb[0].mxu0
  %385 = vdwg.mxu0
  %388 = vrot.lane.b32.xlu0 %v378, 96
  %v389 = vpop.permute.xlu0 %388
  %390 = vrot.lane.b32.xlu0 %v383, 96
  %v391 = vpop.permute.xlu0 %390
  %vm392 = vcmask 64512
  %v393 = vsel %vm392, %v378, 0
  %v395 = vsel %vm392, %v383, 0
  %v397 = vsel %vm392, %v389, 0
  %v399 = vsel %vm392, %v391, 0
  %401 = vmatprep.subr.mxu0 0.0
  %402 = vmatpush1.xpose.msra.mxu0 %v397
  %403 = vmatprep.subr.mxu0 0.0
  %404 = vmatpush1.xpose.msra.mxu0 %v399
  %405 = vmatprep.subr.mxu0 0.0
  %406 = vmatpush1.xpose.msra.mxu0 0.0
  %407 = vmatprep.subr.mxu0 0.0
  %408 = vmatpush1.xpose.msra.mxu0 0.0
  %409 = vmatprep.subr.mxu0 0.0
  %410 = vmatpush1.xpose.msra.mxu0 0.0
  %411 = vmatprep.subr.mxu0 0.0
  %412 = vmatpush1.xpose.msra.mxu0 0.0
  %413 = vmatprep.subr.mxu0 0.0
  %414 = vmatpush1.xpose.msra.mxu0 0.0
  %415 = vmatprep.subr.mxu0 0.0
  %416 = vmatpush1.xpose.msra.mxu0 0.0
  %417 = vmatprep.subr.mxu0 0.0
  %418 = vmatpush1.xpose.msra.mxu0 0.0
  %419 = vmatprep.subr.mxu0 0.0
  %420 = vmatpush1.xpose.msra.mxu0 0.0
  %421 = vmatprep.subr.mxu0 0.0
  %422 = vmatpush1.xpose.msra.mxu0 0.0
  %423 = vmatprep.subr.mxu0 0.0
  %424 = vmatpush1.xpose.msra.mxu0 0.0
  %425 = vmatprep.subr.mxu0 0.0
  %426 = vmatpush1.xpose.msra.mxu0 0.0
  %427 = vmatprep.subr.mxu0 0.0
  %428 = vmatpush1.xpose.msra.mxu0 0.0
  %429 = vmatprep.subr.mxu0 0.0
  %430 = vmatpush1.xpose.msra.mxu0 0.0
  %431 = vmatprep.subr.mxu0 0.0
  %432 = vmatpush1.xpose.msra.mxu0 0.0
  %433 = vmatprep.subr.mxu0 0.0
  %434 = vmatpush1.xpose.msra.mxu0 0.0
  %435 = vmatprep.subr.mxu0 0.0
  %436 = vmatpush1.xpose.msra.mxu0 0.0
  %437 = vmatprep.subr.mxu0 0.0
  %438 = vmatpush1.xpose.msra.mxu0 0.0
  %439 = vmatprep.subr.mxu0 0.0
  %440 = vmatpush1.xpose.msra.mxu0 0.0
  %441 = vmatprep.subr.mxu0 0.0
  %442 = vmatpush1.xpose.msra.mxu0 0.0
  %443 = vmatprep.subr.mxu0 0.0
  %444 = vmatpush1.xpose.msra.mxu0 0.0
  %445 = vmatprep.subr.mxu0 0.0
  %446 = vmatpush1.xpose.msra.mxu0 0.0
  %447 = vmatprep.subr.mxu0 0.0
  %448 = vmatpush1.xpose.msra.mxu0 0.0
  %449 = vmatprep.subr.mxu0 0.0
  %450 = vmatpush1.xpose.msra.mxu0 0.0
  %451 = vmatprep.subr.mxu0 0.0
  %452 = vmatpush1.xpose.msra.mxu0 0.0
  %453 = vmatprep.subr.mxu0 0.0
  %454 = vmatpush1.xpose.msra.mxu0 0.0
  %455 = vmatprep.subr.mxu0 0.0
  %456 = vmatpush1.xpose.msra.mxu0 0.0
  %457 = vmatprep.subr.mxu0 0.0
  %458 = vmatpush1.xpose.msra.mxu0 0.0
  %459 = vmatprep.subr.mxu0 0.0
  %460 = vmatpush1.xpose.msra.mxu0 0.0
  %461 = vmatprep.subr.mxu0 0.0
  %462 = vmatpush1.xpose.msra.mxu0 0.0
  %463 = vmatprep.subr.mxu0 0.0
  %464 = vmatpush1.xpose.msra.mxu0 0.0
  %465 = vmatprep.mubr.f32.mxu0 0.0
  %466 = vmatmul.mubr.f32.gmra.mrb[0].mxu0 %v393
  %v467 = vpop.f32.mrb[0].mxu0
  %v468 = vadd.f32 0.0, %v467
  %v469 = vpop.f32.mrb[0].mxu0
  %470 = vmatprep.mubr.f32.mxu0 0.0
  %471 = vmatmul.mubr.f32.gmra.mrb[0].mxu0 %v395
  %v472 = vpop.f32.mrb[0].mxu0
  %v473 = vadd.f32 0.0, %v472
  %v474 = vpop.f32.mrb[0].mxu0
  %475 = vdwg.mxu0
  %v476 = vmul.f32 %v468, 0.35355338
  %v477 = vmul.f32 %v473, 0.35355338
  %v478 = vadd.f32 %v476, %v88
  %v479 = vadd.f32 %v477, %v89
  %vm480 = vcmask 80896
  %v481 = vsel %vm480, %v478, -inf
  %482 = vmax.xlane.f32.xlu0 %v481
  %v483 = vpop.xlane.xlu0 %482
  %vm484 = vcmask 74752
  %v485 = vsel %vm484, %v479, -inf
  %486 = vmax.xlane.f32.xlu0 %v485
  %v487 = vpop.xlane.xlu0 %486
  %v488 = vsub.f32 %v478, %v483
  %v489 = vsub.f32 %v479, %v487
  %v490 = vmul.f32 %v488, 1.442695
  %v491 = vpow.pop %v490
  %v492 = vmul.f32 %v489, 1.442695
  %v493 = vpow.pop %v492
  %v494 = vsel %vm480, %v491, 0.0
  %495 = vadd.xlane.f32.xlu0 %v494
  %v496 = vpop.xlane.xlu0 %495
  %v497 = vsel %vm484, %v493, 0.0
  %498 = vadd.xlane.f32.xlu0 %v497
  %v499 = vpop.xlane.xlu0 %498
  %v500 = vrcp.pop %v496
  %v501 = vrcp.pop %v499
  %v502 = vmul.f32 %v491, %v500
  %v503 = vmul.f32 %v493, %v501
  %504 = vrot.lane.b32.xlu0 %v378, 64
  %v505 = vpop.permute.xlu0 %504
  %506 = vrot.lane.b32.xlu0 %v383, 64
  %v507 = vpop.permute.xlu0 %506
  %v510 = vsel %vm480, %v502, 0
  %v513 = vsel %vm480, %v503, 0
  %vm515 = vcmask 1041408
  %v516 = vsel %vm515, %v507, 0
  %518 = vmatprep.subr.mxu0 0.0
  %519 = vmatpush1.msra.mxu0 %v505
  %520 = vmatprep.subr.mxu0 0.0
  %521 = vmatpush1.msra.mxu0 %v516
  %522 = vmatprep.subr.mxu0 0.0
  %523 = vmatpush1.msra.mxu0 0.0
  %524 = vmatprep.subr.mxu0 0.0
  %525 = vmatpush1.msra.mxu0 0.0
  %526 = vmatprep.subr.mxu0 0.0
  %527 = vmatpush1.msra.mxu0 0.0
  %528 = vmatprep.subr.mxu0 0.0
  %529 = vmatpush1.msra.mxu0 0.0
  %530 = vmatprep.subr.mxu0 0.0
  %531 = vmatpush1.msra.mxu0 0.0
  %532 = vmatprep.subr.mxu0 0.0
  %533 = vmatpush1.msra.mxu0 0.0
  %534 = vmatprep.subr.mxu0 0.0
  %535 = vmatpush1.msra.mxu0 0.0
  %536 = vmatprep.subr.mxu0 0.0
  %537 = vmatpush1.msra.mxu0 0.0
  %538 = vmatprep.subr.mxu0 0.0
  %539 = vmatpush1.msra.mxu0 0.0
  %540 = vmatprep.subr.mxu0 0.0
  %541 = vmatpush1.msra.mxu0 0.0
  %542 = vmatprep.subr.mxu0 0.0
  %543 = vmatpush1.msra.mxu0 0.0
  %544 = vmatprep.subr.mxu0 0.0
  %545 = vmatpush1.msra.mxu0 0.0
  %546 = vmatprep.subr.mxu0 0.0
  %547 = vmatpush1.msra.mxu0 0.0
  %548 = vmatprep.subr.mxu0 0.0
  %549 = vmatpush1.msra.mxu0 0.0
  %550 = vmatprep.subr.mxu0 0.0
  %551 = vmatpush1.msra.mxu0 0.0
  %552 = vmatprep.subr.mxu0 0.0
  %553 = vmatpush1.msra.mxu0 0.0
  %554 = vmatprep.subr.mxu0 0.0
  %555 = vmatpush1.msra.mxu0 0.0
  %556 = vmatprep.subr.mxu0 0.0
  %557 = vmatpush1.msra.mxu0 0.0
  %558 = vmatprep.subr.mxu0 0.0
  %559 = vmatpush1.msra.mxu0 0.0
  %560 = vmatprep.subr.mxu0 0.0
  %561 = vmatpush1.msra.mxu0 0.0
  %562 = vmatprep.subr.mxu0 0.0
  %563 = vmatpush1.msra.mxu0 0.0
  %564 = vmatprep.subr.mxu0 0.0
  %565 = vmatpush1.msra.mxu0 0.0
  %566 = vmatprep.subr.mxu0 0.0
  %567 = vmatpush1.msra.mxu0 0.0
  %568 = vmatprep.subr.mxu0 0.0
  %569 = vmatpush1.msra.mxu0 0.0
  %570 = vmatprep.subr.mxu0 0.0
  %571 = vmatpush1.msra.mxu0 0.0
  %572 = vmatprep.subr.mxu0 0.0
  %573 = vmatpush1.msra.mxu0 0.0
  %574 = vmatprep.subr.mxu0 0.0
  %575 = vmatpush1.msra.mxu0 0.0
  %576 = vmatprep.subr.mxu0 0.0
  %577 = vmatpush1.msra.mxu0 0.0
  %578 = vmatprep.subr.mxu0 0.0
  %579 = vmatpush1.msra.mxu0 0.0
  %580 = vmatprep.subr.mxu0 0.0
  %581 = vmatpush1.msra.mxu0 0.0
  %582 = vmatprep.mubr.f32.mxu0 0.0
  %583 = vmatmul.mubr.f32.gmra.mrb[0].mxu0 %v510
  %v584 = vpop.f32.mrb[0].mxu0
  %v585 = vadd.f32 0.0, %v584
  %v586 = vpop.f32.mrb[0].mxu0
  %587 = vmatprep.mubr.f32.mxu0 0.0
  %588 = vmatmul.mubr.f32.gmra.mrb[0].mxu0 %v513
  %v589 = vpop.f32.mrb[0].mxu0
  %v590 = vadd.f32 0.0, %v589
  %v591 = vpop.f32.mrb[0].mxu0
  %592 = vdwg.mxu0
  %593 = vst.msk [vmem:[#allocation2] sm:$0xff] %vm392, %v585
  %vm594 = vcmask 58368
  %595 = vst.msk [vmem:[#allocation2 + $0x8] sm:$0x3] %vm594, %v590
  %596 = vrot.lane.b32.xlu0 %v378, 120
  %v597 = vpop.permute.xlu0 %596
  %598 = vrot.lane.b32.xlu0 %v383, 120
  %v599 = vpop.permute.xlu0 %598
  %600 = vrot.lane.b32.xlu0 %v378, 88
  %v601 = vpop.permute.xlu0 %600
  %602 = vrot.lane.b32.xlu0 %v383, 88
  %v603 = vpop.permute.xlu0 %602
  %v604 = vsel %vm392, %v597, 0
  %v606 = vsel %vm392, %v599, 0
  %v608 = vsel %vm392, %v601, 0
  %v610 = vsel %vm392, %v603, 0
  %612 = vmatprep.subr.mxu0 0.0
  %613 = vmatpush1.xpose.msra.mxu0 %v608
  %614 = vmatprep.subr.mxu0 0.0
  %615 = vmatpush1.xpose.msra.mxu0 %v610
  %616 = vmatprep.subr.mxu0 0.0
  %617 = vmatpush1.xpose.msra.mxu0 0.0
  %618 = vmatprep.subr.mxu0 0.0
  %619 = vmatpush1.xpose.msra.mxu0 0.0
  %620 = vmatprep.subr.mxu0 0.0
  %621 = vmatpush1.xpose.msra.mxu0 0.0
  %622 = vmatprep.subr.mxu0 0.0
  %623 = vmatpush1.xpose.msra.mxu0 0.0
  %624 = vmatprep.subr.mxu0 0.0
  %625 = vmatpush1.xpose.msra.mxu0 0.0
  %626 = vmatprep.subr.mxu0 0.0
  %627 = vmatpush1.xpose.msra.mxu0 0.0
  %628 = vmatprep.subr.mxu0 0.0
  %629 = vmatpush1.xpose.msra.mxu0 0.0
  %630 = vmatprep.subr.mxu0 0.0
  %631 = vmatpush1.xpose.msra.mxu0 0.0
  %632 = vmatprep.subr.mxu0 0.0
  %633 = vmatpush1.xpose.msra.mxu0 0.0
  %634 = vmatprep.subr.mxu0 0.0
  %635 = vmatpush1.xpose.msra.mxu0 0.0
  %636 = vmatprep.subr.mxu0 0.0
  %637 = vmatpush1.xpose.msra.mxu0 0.0
  %638 = vmatprep.subr.mxu0 0.0
  %639 = vmatpush1.xpose.msra.mxu0 0.0
  %640 = vmatprep.subr.mxu0 0.0
  %641 = vmatpush1.xpose.msra.mxu0 0.0
  %642 = vmatprep.subr.mxu0 0.0
  %643 = vmatpush1.xpose.msra.mxu0 0.0
  %644 = vmatprep.subr.mxu0 0.0
  %645 = vmatpush1.xpose.msra.mxu0 0.0
  %646 = vmatprep.subr.mxu0 0.0
  %647 = vmatpush1.xpose.msra.mxu0 0.0
  %648 = vmatprep.subr.mxu0 0.0
  %649 = vmatpush1.xpose.msra.mxu0 0.0
  %650 = vmatprep.subr.mxu0 0.0
  %651 = vmatpush1.xpose.msra.mxu0 0.0
  %652 = vmatprep.subr.mxu0 0.0
  %653 = vmatpush1.xpose.msra.mxu0 0.0
  %654 = vmatprep.subr.mxu0 0.0
  %655 = vmatpush1.xpose.msra.mxu0 0.0
  %656 = vmatprep.subr.mxu0 0.0
  %657 = vmatpush1.xpose.msra.mxu0 0.0
  %658 = vmatprep.subr.mxu0 0.0
  %659 = vmatpush1.xpose.msra.mxu0 0.0
  %660 = vmatprep.subr.mxu0 0.0
  %661 = vmatpush1.xpose.msra.mxu0 0.0
  %662 = vmatprep.subr.mxu0 0.0
  %663 = vmatpush1.xpose.msra.mxu0 0.0
  %664 = vmatprep.subr.mxu0 0.0
  %665 = vmatpush1.xpose.msra.mxu0 0.0
  %666 = vmatprep.subr.mxu0 0.0
  %667 = vmatpush1.xpose.msra.mxu0 0.0
  %668 = vmatprep.subr.mxu0 0.0
  %669 = vmatpush1.xpose.msra.mxu0 0.0
  %670 = vmatprep.subr.mxu0 0.0
  %671 = vmatpush1.xpose.msra.mxu0 0.0
  %672 = vmatprep.subr.mxu0 0.0
  %673 = vmatpush1.xpose.msra.mxu0 0.0
  %674 = vmatprep.subr.mxu0 0.0
  %675 = vmatpush1.xpose.msra.mxu0 0.0
  %676 = vmatprep.mubr.f32.mxu0 0.0
  %677 = vmatmul.mubr.f32.gmra.mrb[0].mxu0 %v604
  %v678 = vpop.f32.mrb[0].mxu0
  %v679 = vadd.f32 0.0, %v678
  %v680 = vpop.f32.mrb[0].mxu0
  %681 = vmatprep.mubr.f32.mxu0 0.0
  %682 = vmatmul.mubr.f32.gmra.mrb[0].mxu0 %v606
  %v683 = vpop.f32.mrb[0].mxu0
  %v684 = vadd.f32 0.0, %v683
  %v685 = vpop.f32.mrb[0].mxu0
  %686 = vdwg.mxu0
  %v687 = vmul.f32 %v679, 0.35355338
  %v688 = vmul.f32 %v684, 0.35355338
  %v689 = vadd.f32 %v687, %v88
  %v690 = vadd.f32 %v688, %v89
  %v691 = vsel %vm480, %v689, -inf
  %692 = vmax.xlane.f32.xlu0 %v691
  %v693 = vpop.xlane.xlu0 %692
  %v694 = vsel %vm484, %v690, -inf
  %695 = vmax.xlane.f32.xlu0 %v694
  %v696 = vpop.xlane.xlu0 %695
  %v697 = vsub.f32 %v689, %v693
  %v698 = vsub.f32 %v690, %v696
  %v699 = vmul.f32 %v697, 1.442695
  %v700 = vpow.pop %v699
  %v701 = vmul.f32 %v698, 1.442695
  %v702 = vpow.pop %v701
  %v703 = vsel %vm480, %v700, 0.0
  %704 = vadd.xlane.f32.xlu0 %v703
  %v705 = vpop.xlane.xlu0 %704
  %v706 = vsel %vm484, %v702, 0.0
  %707 = vadd.xlane.f32.xlu0 %v706
  %v708 = vpop.xlane.xlu0 %707
  %v709 = vrcp.pop %v705
  %v710 = vrcp.pop %v708
  %v711 = vmul.f32 %v700, %v709
  %v712 = vmul.f32 %v702, %v710
  %713 = vrot.lane.b32.xlu0 %v378, 56
  %v714 = vpop.permute.xlu0 %713
  %715 = vrot.lane.b32.xlu0 %v383, 56
  %v716 = vpop.permute.xlu0 %715
  %v719 = vsel %vm480, %v711, 0
  %v722 = vsel %vm480, %v712, 0
  %v724 = vsel %vm515, %v716, 0
  %726 = vmatprep.subr.mxu0 0.0
  %727 = vmatpush1.msra.mxu0 %v714
  %728 = vmatprep.subr.mxu0 0.0
  %729 = vmatpush1.msra.mxu0 %v724
  %730 = vmatprep.subr.mxu0 0.0
  %731 = vmatpush1.msra.mxu0 0.0
  %732 = vmatprep.subr.mxu0 0.0
  %733 = vmatpush1.msra.mxu0 0.0
  %734 = vmatprep.subr.mxu0 0.0
  %735 = vmatpush1.msra.mxu0 0.0
  %736 = vmatprep.subr.mxu0 0.0
  %737 = vmatpush1.msra.mxu0 0.0
  %738 = vmatprep.subr.mxu0 0.0
  %739 = vmatpush1.msra.mxu0 0.0
  %740 = vmatprep.subr.mxu0 0.0
  %741 = vmatpush1.msra.mxu0 0.0
  %742 = vmatprep.subr.mxu0 0.0
  %743 = vmatpush1.msra.mxu0 0.0
  %744 = vmatprep.subr.mxu0 0.0
  %745 = vmatpush1.msra.mxu0 0.0
  %746 = vmatprep.subr.mxu0 0.0
  %747 = vmatpush1.msra.mxu0 0.0
  %748 = vmatprep.subr.mxu0 0.0
  %749 = vmatpush1.msra.mxu0 0.0
  %750 = vmatprep.subr.mxu0 0.0
  %751 = vmatpush1.msra.mxu0 0.0
  %752 = vmatprep.subr.mxu0 0.0
  %753 = vmatpush1.msra.mxu0 0.0
  %754 = vmatprep.subr.mxu0 0.0
  %755 = vmatpush1.msra.mxu0 0.0
  %756 = vmatprep.subr.mxu0 0.0
  %757 = vmatpush1.msra.mxu0 0.0
  %758 = vmatprep.subr.mxu0 0.0
  %759 = vmatpush1.msra.mxu0 0.0
  %760 = vmatprep.subr.mxu0 0.0
  %761 = vmatpush1.msra.mxu0 0.0
  %762 = vmatprep.subr.mxu0 0.0
  %763 = vmatpush1.msra.mxu0 0.0
  %764 = vmatprep.subr.mxu0 0.0
  %765 = vmatpush1.msra.mxu0 0.0
  %766 = vmatprep.subr.mxu0 0.0
  %767 = vmatpush1.msra.mxu0 0.0
  %768 = vmatprep.subr.mxu0 0.0
  %769 = vmatpush1.msra.mxu0 0.0
  %770 = vmatprep.subr.mxu0 0.0
  %771 = vmatpush1.msra.mxu0 0.0
  %772 = vmatprep.subr.mxu0 0.0
  %773 = vmatpush1.msra.mxu0 0.0
  %774 = vmatprep.subr.mxu0 0.0
  %775 = vmatpush1.msra.mxu0 0.0
  %776 = vmatprep.subr.mxu0 0.0
  %777 = vmatpush1.msra.mxu0 0.0
  %778 = vmatprep.subr.mxu0 0.0
  %779 = vmatpush1.msra.mxu0 0.0
  %780 = vmatprep.subr.mxu0 0.0
  %781 = vmatpush1.msra.mxu0 0.0
  %782 = vmatprep.subr.mxu0 0.0
  %783 = vmatpush1.msra.mxu0 0.0
  %784 = vmatprep.subr.mxu0 0.0
  %785 = vmatpush1.msra.mxu0 0.0
  %786 = vmatprep.subr.mxu0 0.0
  %787 = vmatpush1.msra.mxu0 0.0
  %788 = vmatprep.subr.mxu0 0.0
  %789 = vmatpush1.msra.mxu0 0.0
  %790 = vmatprep.mubr.f32.mxu0 0.0
  %791 = vmatmul.mubr.f32.gmra.mrb[0].mxu0 %v719
  %v792 = vpop.f32.mrb[0].mxu0
  %v793 = vadd.f32 0.0, %v792
  %v794 = vpop.f32.mrb[0].mxu0
  %795 = vmatprep.mubr.f32.mxu0 0.0
  %796 = vmatmul.mubr.f32.gmra.mrb[0].mxu0 %v722
  %v797 = vpop.f32.mrb[0].mxu0
  %v798 = vadd.f32 0.0, %v797
  %v799 = vpop.f32.mrb[0].mxu0
  %800 = vdwg.mxu0
  %803 = vrot.lane.b32.xlu0 %v793, 8
  %v804 = vpop.permute.xlu0 %803
  %805 = vrot.lane.b32.xlu0 %v798, 8
  %v806 = vpop.permute.xlu0 %805
  %vm809 = vcmask 130112
  %810 = vst.msk [vmem:[#allocation2] sm:$0xff] %vm809, %v804
  %vm811 = vcmask 123968
  %812 = vst.msk [vmem:[#allocation2 + $0x8] sm:$0x3] %vm811, %v806
  %813 = vrot.lane.b32.xlu0 %v378, 112
  %v814 = vpop.permute.xlu0 %813
  %815 = vrot.lane.b32.xlu0 %v383, 112
  %v816 = vpop.permute.xlu0 %815
  %817 = vrot.lane.b32.xlu0 %v378, 80
  %v818 = vpop.permute.xlu0 %817
  %819 = vrot.lane.b32.xlu0 %v383, 80
  %v820 = vpop.permute.xlu0 %819
  %v821 = vsel %vm392, %v814, 0
  %v823 = vsel %vm392, %v816, 0
  %v825 = vsel %vm392, %v818, 0
  %v827 = vsel %vm392, %v820, 0
  %829 = vmatprep.subr.mxu0 0.0
  %830 = vmatpush1.xpose.msra.mxu0 %v825
  %831 = vmatprep.subr.mxu0 0.0
  %832 = vmatpush1.xpose.msra.mxu0 %v827
  %833 = vmatprep.subr.mxu0 0.0
  %834 = vmatpush1.xpose.msra.mxu0 0.0
  %835 = vmatprep.subr.mxu0 0.0
  %836 = vmatpush1.xpose.msra.mxu0 0.0
  %837 = vmatprep.subr.mxu0 0.0
  %838 = vmatpush1.xpose.msra.mxu0 0.0
  %839 = vmatprep.subr.mxu0 0.0
  %840 = vmatpush1.xpose.msra.mxu0 0.0
  %841 = vmatprep.subr.mxu0 0.0
  %842 = vmatpush1.xpose.msra.mxu0 0.0
  %843 = vmatprep.subr.mxu0 0.0
  %844 = vmatpush1.xpose.msra.mxu0 0.0
  %845 = vmatprep.subr.mxu0 0.0
  %846 = vmatpush1.xpose.msra.mxu0 0.0
  %847 = vmatprep.subr.mxu0 0.0
  %848 = vmatpush1.xpose.msra.mxu0 0.0
  %849 = vmatprep.subr.mxu0 0.0
  %850 = vmatpush1.xpose.msra.mxu0 0.0
  %851 = vmatprep.subr.mxu0 0.0
  %852 = vmatpush1.xpose.msra.mxu0 0.0
  %853 = vmatprep.subr.mxu0 0.0
  %854 = vmatpush1.xpose.msra.mxu0 0.0
  %855 = vmatprep.subr.mxu0 0.0
  %856 = vmatpush1.xpose.msra.mxu0 0.0
  %857 = vmatprep.subr.mxu0 0.0
  %858 = vmatpush1.xpose.msra.mxu0 0.0
  %859 = vmatprep.subr.mxu0 0.0
  %860 = vmatpush1.xpose.msra.mxu0 0.0
  %861 = vmatprep.subr.mxu0 0.0
  %862 = vmatpush1.xpose.msra.mxu0 0.0
  %863 = vmatprep.subr.mxu0 0.0
  %864 = vmatpush1.xpose.msra.mxu0 0.0
  %865 = vmatprep.subr.mxu0 0.0
  %866 = vmatpush1.xpose.msra.mxu0 0.0
  %867 = vmatprep.subr.mxu0 0.0
  %868 = vmatpush1.xpose.msra.mxu0 0.0
  %869 = vmatprep.subr.mxu0 0.0
  %870 = vmatpush1.xpose.msra.mxu0 0.0
  %871 = vmatprep.subr.mxu0 0.0
  %872 = vmatpush1.xpose.msra.mxu0 0.0
  %873 = vmatprep.subr.mxu0 0.0
  %874 = vmatpush1.xpose.msra.mxu0 0.0
  %875 = vmatprep.subr.mxu0 0.0
  %876 = vmatpush1.xpose.msra.mxu0 0.0
  %877 = vmatprep.subr.mxu0 0.0
  %878 = vmatpush1.xpose.msra.mxu0 0.0
  %879 = vmatprep.subr.mxu0 0.0
  %880 = vmatpush1.xpose.msra.mxu0 0.0
  %881 = vmatprep.subr.mxu0 0.0
  %882 = vmatpush1.xpose.msra.mxu0 0.0
  %883 = vmatprep.subr.mxu0 0.0
  %884 = vmatpush1.xpose.msra.mxu0 0.0
  %885 = vmatprep.subr.mxu0 0.0
  %886 = vmatpush1.xpose.msra.mxu0 0.0
  %887 = vmatprep.subr.mxu0 0.0
  %888 = vmatpush1.xpose.msra.mxu0 0.0
  %889 = vmatprep.subr.mxu0 0.0
  %890 = vmatpush1.xpose.msra.mxu0 0.0
  %891 = vmatprep.subr.mxu0 0.0
  %892 = vmatpush1.xpose.msra.mxu0 0.0
  %893 = vmatprep.mubr.f32.mxu0 0.0
  %894 = vmatmul.mubr.f32.gmra.mrb[0].mxu0 %v821
  %v895 = vpop.f32.mrb[0].mxu0
  %v896 = vadd.f32 0.0, %v895
  %v897 = vpop.f32.mrb[0].mxu0
  %898 = vmatprep.mubr.f32.mxu0 0.0
  %899 = vmatmul.mubr.f32.gmra.mrb[0].mxu0 %v823
  %v900 = vpop.f32.mrb[0].mxu0
  %v901 = vadd.f32 0.0, %v900
  %v902 = vpop.f32.mrb[0].mxu0
  %903 = vdwg.mxu0
  %v904 = vmul.f32 %v896, 0.35355338
  %v905 = vmul.f32 %v901, 0.35355338
  %v906 = vadd.f32 %v904, %v88
  %v907 = vadd.f32 %v905, %v89
  %v908 = vsel %vm480, %v906, -inf
  %909 = vmax.xlane.f32.xlu0 %v908
  %v910 = vpop.xlane.xlu0 %909
  %v911 = vsel %vm484, %v907, -inf
  %912 = vmax.xlane.f32.xlu0 %v911
  %v913 = vpop.xlane.xlu0 %912
  %v914 = vsub.f32 %v906, %v910
  %v915 = vsub.f32 %v907, %v913
  %v916 = vmul.f32 %v914, 1.442695
  %v917 = vpow.pop %v916
  %v918 = vmul.f32 %v915, 1.442695
  %v919 = vpow.pop %v918
  %v920 = vsel %vm480, %v917, 0.0
  %921 = vadd.xlane.f32.xlu0 %v920
  %v922 = vpop.xlane.xlu0 %921
  %v923 = vsel %vm484, %v919, 0.0
  %924 = vadd.xlane.f32.xlu0 %v923
  %v925 = vpop.xlane.xlu0 %924
  %v926 = vrcp.pop %v922
  %v927 = vrcp.pop %v925
  %v928 = vmul.f32 %v917, %v926
  %v929 = vmul.f32 %v919, %v927
  %930 = vrot.lane.b32.xlu0 %v378, 48
  %v931 = vpop.permute.xlu0 %930
  %932 = vrot.lane.b32.xlu0 %v383, 48
  %v933 = vpop.permute.xlu0 %932
  %v936 = vsel %vm480, %v928, 0
  %v939 = vsel %vm480, %v929, 0
  %v941 = vsel %vm515, %v933, 0
  %943 = vmatprep.subr.mxu0 0.0
  %944 = vmatpush1.msra.mxu0 %v931
  %945 = vmatprep.subr.mxu0 0.0
  %946 = vmatpush1.msra.mxu0 %v941
  %947 = vmatprep.subr.mxu0 0.0
  %948 = vmatpush1.msra.mxu0 0.0
  %949 = vmatprep.subr.mxu0 0.0
  %950 = vmatpush1.msra.mxu0 0.0
  %951 = vmatprep.subr.mxu0 0.0
  %952 = vmatpush1.msra.mxu0 0.0
  %953 = vmatprep.subr.mxu0 0.0
  %954 = vmatpush1.msra.mxu0 0.0
  %955 = vmatprep.subr.mxu0 0.0
  %956 = vmatpush1.msra.mxu0 0.0
  %957 = vmatprep.subr.mxu0 0.0
  %958 = vmatpush1.msra.mxu0 0.0
  %959 = vmatprep.subr.mxu0 0.0
  %960 = vmatpush1.msra.mxu0 0.0
  %961 = vmatprep.subr.mxu0 0.0
  %962 = vmatpush1.msra.mxu0 0.0
  %963 = vmatprep.subr.mxu0 0.0
  %964 = vmatpush1.msra.mxu0 0.0
  %965 = vmatprep.subr.mxu0 0.0
  %966 = vmatpush1.msra.mxu0 0.0
  %967 = vmatprep.subr.mxu0 0.0
  %968 = vmatpush1.msra.mxu0 0.0
  %969 = vmatprep.subr.mxu0 0.0
  %970 = vmatpush1.msra.mxu0 0.0
  %971 = vmatprep.subr.mxu0 0.0
  %972 = vmatpush1.msra.mxu0 0.0
  %973 = vmatprep.subr.mxu0 0.0
  %974 = vmatpush1.msra.mxu0 0.0
  %975 = vmatprep.subr.mxu0 0.0
  %976 = vmatpush1.msra.mxu0 0.0
  %977 = vmatprep.subr.mxu0 0.0
  %978 = vmatpush1.msra.mxu0 0.0
  %979 = vmatprep.subr.mxu0 0.0
  %980 = vmatpush1.msra.mxu0 0.0
  %981 = vmatprep.subr.mxu0 0.0
  %982 = vmatpush1.msra.mxu0 0.0
  %983 = vmatprep.subr.mxu0 0.0
  %984 = vmatpush1.msra.mxu0 0.0
  %985 = vmatprep.subr.mxu0 0.0
  %986 = vmatpush1.msra.mxu0 0.0
  %987 = vmatprep.subr.mxu0 0.0
  %988 = vmatpush1.msra.mxu0 0.0
  %989 = vmatprep.subr.mxu0 0.0
  %990 = vmatpush1.msra.mxu0 0.0
  %991 = vmatprep.subr.mxu0 0.0
  %992 = vmatpush1.msra.mxu0 0.0
  %993 = vmatprep.subr.mxu0 0.0
  %994 = vmatpush1.msra.mxu0 0.0
  %995 = vmatprep.subr.mxu0 0.0
  %996 = vmatpush1.msra.mxu0 0.0
  %997 = vmatprep.subr.mxu0 0.0
  %998 = vmatpush1.msra.mxu0 0.0
  %999 = vmatprep.subr.mxu0 0.0
  %1000 = vmatpush1.msra.mxu0 0.0
  %1001 = vmatprep.subr.mxu0 0.0
  %1002 = vmatpush1.msra.mxu0 0.0
  %1003 = vmatprep.subr.mxu0 0.0
  %1004 = vmatpush1.msra.mxu0 0.0
  %1005 = vmatprep.subr.mxu0 0.0
  %1006 = vmatpush1.msra.mxu0 0.0
  %1007 = vmatprep.mubr.f32.mxu0 0.0
  %1008 = vmatmul.mubr.f32.gmra.mrb[0].mxu0 %v936
  %v1009 = vpop.f32.mrb[0].mxu0
  %v1010 = vadd.f32 0.0, %v1009
  %v1011 = vpop.f32.mrb[0].mxu0
  %1012 = vmatprep.mubr.f32.mxu0 0.0
  %1013 = vmatmul.mubr.f32.gmra.mrb[0].mxu0 %v939
  %v1014 = vpop.f32.mrb[0].mxu0
  %v1015 = vadd.f32 0.0, %v1014
  %v1016 = vpop.f32.mrb[0].mxu0
  %1017 = vdwg.mxu0
  %1020 = vrot.lane.b32.xlu0 %v1010, 16
  %v1021 = vpop.permute.xlu0 %1020
  %1022 = vrot.lane.b32.xlu0 %v1015, 16
  %v1023 = vpop.permute.xlu0 %1022
  %vm1026 = vcmask 195712
  %1027 = vst.msk [vmem:[#allocation2] sm:$0xff] %vm1026, %v1021
  %vm1028 = vcmask 189568
  %1029 = vst.msk [vmem:[#allocation2 + $0x8] sm:$0x3] %vm1028, %v1023
  %1030 = vrot.lane.b32.xlu0 %v378, 104
  %v1031 = vpop.permute.xlu0 %1030
  %1032 = vrot.lane.b32.xlu0 %v383, 104
  %v1033 = vpop.permute.xlu0 %1032
  %1034 = vrot.lane.b32.xlu0 %v378, 72
  %v1035 = vpop.permute.xlu0 %1034
  %1036 = vrot.lane.b32.xlu0 %v383, 72
  %v1037 = vpop.permute.xlu0 %1036
  %v1038 = vsel %vm392, %v1031, 0
  %v1040 = vsel %vm392, %v1033, 0
  %v1042 = vsel %vm392, %v1035, 0
  %v1044 = vsel %vm392, %v1037, 0
  %1046 = vmatprep.subr.mxu0 0.0
  %1047 = vmatpush1.xpose.msra.mxu0 %v1042
  %1048 = vmatprep.subr.mxu0 0.0
  %1049 = vmatpush1.xpose.msra.mxu0 %v1044
  %1050 = vmatprep.subr.mxu0 0.0
  %1051 = vmatpush1.xpose.msra.mxu0 0.0
  %1052 = vmatprep.subr.mxu0 0.0
  %1053 = vmatpush1.xpose.msra.mxu0 0.0
  %1054 = vmatprep.subr.mxu0 0.0
  %1055 = vmatpush1.xpose.msra.mxu0 0.0
  %1056 = vmatprep.subr.mxu0 0.0
  %1057 = vmatpush1.xpose.msra.mxu0 0.0
  %1058 = vmatprep.subr.mxu0 0.0
  %1059 = vmatpush1.xpose.msra.mxu0 0.0
  %1060 = vmatprep.subr.mxu0 0.0
  %1061 = vmatpush1.xpose.msra.mxu0 0.0
  %1062 = vmatprep.subr.mxu0 0.0
  %1063 = vmatpush1.xpose.msra.mxu0 0.0
  %1064 = vmatprep.subr.mxu0 0.0
  %1065 = vmatpush1.xpose.msra.mxu0 0.0
  %1066 = vmatprep.subr.mxu0 0.0
  %1067 = vmatpush1.xpose.msra.mxu0 0.0
  %1068 = vmatprep.subr.mxu0 0.0
  %1069 = vmatpush1.xpose.msra.mxu0 0.0
  %1070 = vmatprep.subr.mxu0 0.0
  %1071 = vmatpush1.xpose.msra.mxu0 0.0
  %1072 = vmatprep.subr.mxu0 0.0
  %1073 = vmatpush1.xpose.msra.mxu0 0.0
  %1074 = vmatprep.subr.mxu0 0.0
  %1075 = vmatpush1.xpose.msra.mxu0 0.0
  %1076 = vmatprep.subr.mxu0 0.0
  %1077 = vmatpush1.xpose.msra.mxu0 0.0
  %1078 = vmatprep.subr.mxu0 0.0
  %1079 = vmatpush1.xpose.msra.mxu0 0.0
  %1080 = vmatprep.subr.mxu0 0.0
  %1081 = vmatpush1.xpose.msra.mxu0 0.0
  %1082 = vmatprep.subr.mxu0 0.0
  %1083 = vmatpush1.xpose.msra.mxu0 0.0
  %1084 = vmatprep.subr.mxu0 0.0
  %1085 = vmatpush1.xpose.msra.mxu0 0.0
  %1086 = vmatprep.subr.mxu0 0.0
  %1087 = vmatpush1.xpose.msra.mxu0 0.0
  %1088 = vmatprep.subr.mxu0 0.0
  %1089 = vmatpush1.xpose.msra.mxu0 0.0
  %1090 = vmatprep.subr.mxu0 0.0
  %1091 = vmatpush1.xpose.msra.mxu0 0.0
  %1092 = vmatprep.subr.mxu0 0.0
  %1093 = vmatpush1.xpose.msra.mxu0 0.0
  %1094 = vmatprep.subr.mxu0 0.0
  %1095 = vmatpush1.xpose.msra.mxu0 0.0
  %1096 = vmatprep.subr.mxu0 0.0
  %1097 = vmatpush1.xpose.msra.mxu0 0.0
  %1098 = vmatprep.subr.mxu0 0.0
  %1099 = vmatpush1.xpose.msra.mxu0 0.0
  %1100 = vmatprep.subr.mxu0 0.0
  %1101 = vmatpush1.xpose.msra.mxu0 0.0
  %1102 = vmatprep.subr.mxu0 0.0
  %1103 = vmatpush1.xpose.msra.mxu0 0.0
  %1104 = vmatprep.subr.mxu0 0.0
  %1105 = vmatpush1.xpose.msra.mxu0 0.0
  %1106 = vmatprep.subr.mxu0 0.0
  %1107 = vmatpush1.xpose.msra.mxu0 0.0
  %1108 = vmatprep.subr.mxu0 0.0
  %1109 = vmatpush1.xpose.msra.mxu0 0.0
  %1110 = vmatprep.mubr.f32.mxu0 0.0
  %1111 = vmatmul.mubr.f32.gmra.mrb[0].mxu0 %v1038
  %v1112 = vpop.f32.mrb[0].mxu0
  %v1113 = vadd.f32 0.0, %v1112
  %v1114 = vpop.f32.mrb[0].mxu0
  %1115 = vmatprep.mubr.f32.mxu0 0.0
  %1116 = vmatmul.mubr.f32.gmra.mrb[0].mxu0 %v1040
  %v1117 = vpop.f32.mrb[0].mxu0
  %v1118 = vadd.f32 0.0, %v1117
  %v1119 = vpop.f32.mrb[0].mxu0
  %1120 = vdwg.mxu0
  %v1121 = vmul.f32 %v1113, 0.35355338
  %v1122 = vmul.f32 %v1118, 0.35355338
  %v1123 = vadd.f32 %v1121, %v88
  %v1124 = vadd.f32 %v1122, %v89
  %v1125 = vsel %vm480, %v1123, -inf
  %1126 = vmax.xlane.f32.xlu0 %v1125
  %v1127 = vpop.xlane.xlu0 %1126
  %v1128 = vsel %vm484, %v1124, -inf
  %1129 = vmax.xlane.f32.xlu0 %v1128
  %v1130 = vpop.xlane.xlu0 %1129
  %v1131 = vsub.f32 %v1123, %v1127
  %v1132 = vsub.f32 %v1124, %v1130
  %v1133 = vmul.f32 %v1131, 1.442695
  %v1134 = vpow.pop %v1133
  %v1135 = vmul.f32 %v1132, 1.442695
  %v1136 = vpow.pop %v1135
  %v1137 = vsel %vm480, %v1134, 0.0
  %1138 = vadd.xlane.f32.xlu0 %v1137
  %v1139 = vpop.xlane.xlu0 %1138
  %v1140 = vsel %vm484, %v1136, 0.0
  %1141 = vadd.xlane.f32.xlu0 %v1140
  %v1142 = vpop.xlane.xlu0 %1141
  %v1143 = vrcp.pop %v1139
  %v1144 = vrcp.pop %v1142
  %v1145 = vmul.f32 %v1134, %v1143
  %v1146 = vmul.f32 %v1136, %v1144
  %1147 = vrot.lane.b32.xlu0 %v378, 40
  %v1148 = vpop.permute.xlu0 %1147
  %1149 = vrot.lane.b32.xlu0 %v383, 40
  %v1150 = vpop.permute.xlu0 %1149
  %v1153 = vsel %vm480, %v1145, 0
  %v1156 = vsel %vm480, %v1146, 0
  %v1158 = vsel %vm515, %v1150, 0
  %1160 = vmatprep.subr.mxu0 0.0
  %1161 = vmatpush1.msra.mxu0 %v1148
  %1162 = vmatprep.subr.mxu0 0.0
  %1163 = vmatpush1.msra.mxu0 %v1158
  %1164 = vmatprep.subr.mxu0 0.0
  %1165 = vmatpush1.msra.mxu0 0.0
  %1166 = vmatprep.subr.mxu0 0.0
  %1167 = vmatpush1.msra.mxu0 0.0
  %1168 = vmatprep.subr.mxu0 0.0
  %1169 = vmatpush1.msra.mxu0 0.0
  %1170 = vmatprep.subr.mxu0 0.0
  %1171 = vmatpush1.msra.mxu0 0.0
  %1172 = vmatprep.subr.mxu0 0.0
  %1173 = vmatpush1.msra.mxu0 0.0
  %1174 = vmatprep.subr.mxu0 0.0
  %1175 = vmatpush1.msra.mxu0 0.0
  %1176 = vmatprep.subr.mxu0 0.0
  %1177 = vmatpush1.msra.mxu0 0.0
  %1178 = vmatprep.subr.mxu0 0.0
  %1179 = vmatpush1.msra.mxu0 0.0
  %1180 = vmatprep.subr.mxu0 0.0
  %1181 = vmatpush1.msra.mxu0 0.0
  %1182 = vmatprep.subr.mxu0 0.0
  %1183 = vmatpush1.msra.mxu0 0.0
  %1184 = vmatprep.subr.mxu0 0.0
  %1185 = vmatpush1.msra.mxu0 0.0
  %1186 = vmatprep.subr.mxu0 0.0
  %1187 = vmatpush1.msra.mxu0 0.0
  %1188 = vmatprep.subr.mxu0 0.0
  %1189 = vmatpush1.msra.mxu0 0.0
  %1190 = vmatprep.subr.mxu0 0.0
  %1191 = vmatpush1.msra.mxu0 0.0
  %1192 = vmatprep.subr.mxu0 0.0
  %1193 = vmatpush1.msra.mxu0 0.0
  %1194 = vmatprep.subr.mxu0 0.0
  %1195 = vmatpush1.msra.mxu0 0.0
  %1196 = vmatprep.subr.mxu0 0.0
  %1197 = vmatpush1.msra.mxu0 0.0
  %1198 = vmatprep.subr.mxu0 0.0
  %1199 = vmatpush1.msra.mxu0 0.0
  %1200 = vmatprep.subr.mxu0 0.0
  %1201 = vmatpush1.msra.mxu0 0.0
  %1202 = vmatprep.subr.mxu0 0.0
  %1203 = vmatpush1.msra.mxu0 0.0
  %1204 = vmatprep.subr.mxu0 0.0
  %1205 = vmatpush1.msra.mxu0 0.0
  %1206 = vmatprep.subr.mxu0 0.0
  %1207 = vmatpush1.msra.mxu0 0.0
  %1208 = vmatprep.subr.mxu0 0.0
  %1209 = vmatpush1.msra.mxu0 0.0
  %1210 = vmatprep.subr.mxu0 0.0
  %1211 = vmatpush1.msra.mxu0 0.0
  %1212 = vmatprep.subr.mxu0 0.0
  %1213 = vmatpush1.msra.mxu0 0.0
  %1214 = vmatprep.subr.mxu0 0.0
  %1215 = vmatpush1.msra.mxu0 0.0
  %1216 = vmatprep.subr.mxu0 0.0
  %1217 = vmatpush1.msra.mxu0 0.0
  %1218 = vmatprep.subr.mxu0 0.0
  %1219 = vmatpush1.msra.mxu0 0.0
  %1220 = vmatprep.subr.mxu0 0.0
  %1221 = vmatpush1.msra.mxu0 0.0
  %1222 = vmatprep.subr.mxu0 0.0
  %1223 = vmatpush1.msra.mxu0 0.0
  %1224 = vmatprep.mubr.f32.mxu0 0.0
  %1225 = vmatmul.mubr.f32.gmra.mrb[0].mxu0 %v1153
  %v1226 = vpop.f32.mrb[0].mxu0
  %v1227 = vadd.f32 0.0, %v1226
  %v1228 = vpop.f32.mrb[0].mxu0
  %1229 = vmatprep.mubr.f32.mxu0 0.0
  %1230 = vmatmul.mubr.f32.gmra.mrb[0].mxu0 %v1156
  %v1231 = vpop.f32.mrb[0].mxu0
  %v1232 = vadd.f32 0.0, %v1231
  %v1233 = vpop.f32.mrb[0].mxu0
  %1234 = vdwg.mxu0
  %1237 = vrot.lane.b32.xlu0 %v1227, 24
  %v1238 = vpop.permute.xlu0 %1237
  %1239 = vrot.lane.b32.xlu0 %v1232, 24
  %v1240 = vpop.permute.xlu0 %1239
  %vm1243 = vcmask 261312
  %1244 = vst.msk [vmem:[#allocation2] sm:$0xff] %vm1243, %v1238
  %vm1245 = vcmask 255168
  %1246 = vst.msk [vmem:[#allocation2 + $0x8] sm:$0x3] %vm1245, %v1240
  %v1247 = vld [vmem:[#allocation2] sm:$0xff]
  %v1248 = vld [vmem:[#allocation2 + $0x8] sm:$0x3]
  %v1249 = vld [vmem:[%s10] sm:$0xff]
  %v1250 = vld [vmem:[%s10 + $0x8] sm:$0xff]
  %v1251 = vld [vmem:[%s10 + $0x10] sm:$0xff]
  %v1252 = vld [vmem:[%s10 + $0x18] sm:$0xff]
  %v1253 = vld [vmem:[%s11] sm:$0x1]
  %v1255 = vlaneseq
  %v1256 = vshrl.u32 %v1255, 7
  %v1257 = vsub.s32 0, %v1256
  %v1258 = vrot.slane %v1253, %v1257
  %v1261 = vsel %vm205, %v1247, 0
  %v1264 = vsel %vm205, %v1248, 0
  %1266 = vmatprep.subr.mxu0 0.0
  %1267 = vmatpush1.msra.mxu0 %v1249
  %1268 = vmatprep.subr.mxu0 0.0
  %1269 = vmatpush1.msra.mxu0 %v1250
  %1270 = vmatprep.subr.mxu0 0.0
  %1271 = vmatpush1.msra.mxu0 %v1251
  %1272 = vmatprep.subr.mxu0 0.0
  %1273 = vmatpush1.msra.mxu0 %v1252
  %1274 = vmatprep.subr.mxu0 0.0
  %1275 = vmatpush1.msra.mxu0 0.0
  %1276 = vmatprep.subr.mxu0 0.0
  %1277 = vmatpush1.msra.mxu0 0.0
  %1278 = vmatprep.subr.mxu0 0.0
  %1279 = vmatpush1.msra.mxu0 0.0
  %1280 = vmatprep.subr.mxu0 0.0
  %1281 = vmatpush1.msra.mxu0 0.0
  %1282 = vmatprep.subr.mxu0 0.0
  %1283 = vmatpush1.msra.mxu0 0.0
  %1284 = vmatprep.subr.mxu0 0.0
  %1285 = vmatpush1.msra.mxu0 0.0
  %1286 = vmatprep.subr.mxu0 0.0
  %1287 = vmatpush1.msra.mxu0 0.0
  %1288 = vmatprep.subr.mxu0 0.0
  %1289 = vmatpush1.msra.mxu0 0.0
  %1290 = vmatprep.subr.mxu0 0.0
  %1291 = vmatpush1.msra.mxu0 0.0
  %1292 = vmatprep.subr.mxu0 0.0
  %1293 = vmatpush1.msra.mxu0 0.0
  %1294 = vmatprep.subr.mxu0 0.0
  %1295 = vmatpush1.msra.mxu0 0.0
  %1296 = vmatprep.subr.mxu0 0.0
  %1297 = vmatpush1.msra.mxu0 0.0
  %1298 = vmatprep.subr.mxu0 0.0
  %1299 = vmatpush1.msra.mxu0 0.0
  %1300 = vmatprep.subr.mxu0 0.0
  %1301 = vmatpush1.msra.mxu0 0.0
  %1302 = vmatprep.subr.mxu0 0.0
  %1303 = vmatpush1.msra.mxu0 0.0
  %1304 = vmatprep.subr.mxu0 0.0
  %1305 = vmatpush1.msra.mxu0 0.0
  %1306 = vmatprep.subr.mxu0 0.0
  %1307 = vmatpush1.msra.mxu0 0.0
  %1308 = vmatprep.subr.mxu0 0.0
  %1309 = vmatpush1.msra.mxu0 0.0
  %1310 = vmatprep.subr.mxu0 0.0
  %1311 = vmatpush1.msra.mxu0 0.0
  %1312 = vmatprep.subr.mxu0 0.0
  %1313 = vmatpush1.msra.mxu0 0.0
  %1314 = vmatprep.subr.mxu0 0.0
  %1315 = vmatpush1.msra.mxu0 0.0
  %1316 = vmatprep.subr.mxu0 0.0
  %1317 = vmatpush1.msra.mxu0 0.0
  %1318 = vmatprep.subr.mxu0 0.0
  %1319 = vmatpush1.msra.mxu0 0.0
  %1320 = vmatprep.subr.mxu0 0.0
  %1321 = vmatpush1.msra.mxu0 0.0
  %1322 = vmatprep.subr.mxu0 0.0
  %1323 = vmatpush1.msra.mxu0 0.0
  %1324 = vmatprep.subr.mxu0 0.0
  %1325 = vmatpush1.msra.mxu0 0.0
  %1326 = vmatprep.subr.mxu0 0.0
  %1327 = vmatpush1.msra.mxu0 0.0
  %1328 = vmatprep.subr.mxu0 0.0
  %1329 = vmatpush1.msra.mxu0 0.0
  %1330 = vmatprep.mubr.f32.mxu0 0.0
  %1331 = vmatmul.mubr.f32.gmra.mrb[0].mxu0 %v1261
  %v1332 = vpop.f32.mrb[0].mxu0
  %v1333 = vadd.f32 %v1258, %v1332
  %v1334 = vpop.f32.mrb[0].mxu0
  %1335 = vmatprep.mubr.f32.mxu0 0.0
  %1336 = vmatmul.mubr.f32.gmra.mrb[0].mxu0 %v1264
  %v1337 = vpop.f32.mrb[0].mxu0
  %v1338 = vadd.f32 %v1258, %v1337
  %v1339 = vpop.f32.mrb[0].mxu0
  %1340 = vdwg.mxu0
  %v1341 = vadd.f32 %v248, %v1333
  %v1342 = vadd.f32 %v249, %v1338
  %v1343 = vld [vmem:[%s12] sm:$0x1]
  %v1344 = vld [vmem:[%s13] sm:$0x1]
  %v1345 = vsel %vm205, %v1341, 0.0
  %1346 = vadd.xlane.f32.xlu0 %v1345
  %v1347 = vpop.xlane.xlu0 %1346
  %v1348 = vsel %vm209, %v1342, 0.0
  %1349 = vadd.xlane.f32.xlu0 %v1348
  %v1350 = vpop.xlane.xlu0 %1349
  %v1351 = vmul.f32 %v1347, %v213
  %v1352 = vmul.f32 %v1350, %v213
  %v1353 = vsub.f32 %v1341, %v1351
  %v1354 = vsub.f32 %v1342, %v1352
  %v1355 = vmul.f32 %v1353, %v1353
  %v1356 = vmul.f32 %v1354, %v1354
  %v1357 = vsel %vm205, %v1355, 0.0
  %1358 = vadd.xlane.f32.xlu0 %v1357
  %v1359 = vpop.xlane.xlu0 %1358
  %v1360 = vsel %vm209, %v1356, 0.0
  %1361 = vadd.xlane.f32.xlu0 %v1360
  %v1362 = vpop.xlane.xlu0 %1361
  %v1363 = vmul.f32 %v1359, %v213
  %v1364 = vmul.f32 %v1362, %v213
  %v1365 = vadd.f32 %v1363, 1e-05
  %v1366 = vadd.f32 %v1364, 1e-05
  %v1367 = vrsqrt.pop %v1365
  %v1368 = vrsqrt.pop %v1366
  %v1369 = vmul.f32 %v1353, %v1367
  %v1370 = vmul.f32 %v1354, %v1368
  %v1372 = vlaneseq
  %v1373 = vshrl.u32 %v1372, 7
  %v1374 = vsub.s32 0, %v1373
  %v1375 = vrot.slane %v1343, %v1374
  %v1377 = vmul.f32 %v1369, %v1375
  %v1378 = vmul.f32 %v1370, %v1375
  %v1380 = vlaneseq
  %v1381 = vshrl.u32 %v1380, 7
  %v1382 = vsub.s32 0, %v1381
  %v1383 = vrot.slane %v1344, %v1382
  %v1385 = vadd.f32 %v1377, %v1383
  %v1386 = vadd.f32 %v1378, %v1383
  %v1387 = vld [vmem:[%s14] sm:$0xff]
  %v1388 = vld [vmem:[%s14 + $0x8] sm:$0xff]
  %v1389 = vld [vmem:[%s14 + $0x10] sm:$0xff]
  %v1390 = vld [vmem:[%s14 + $0x18] sm:$0xff]
  %v1391 = vld [vmem:[%s15] sm:$0x1]
  %v1393 = vlaneseq
  %v1394 = vshrl.u32 %v1393, 7
  %v1395 = vsub.s32 0, %v1394
  %v1396 = vrot.slane %v1391, %v1395
  %v1399 = vsel %vm205, %v1385, 0
  %v1402 = vsel %vm205, %v1386, 0
  %1404 = vmatprep.subr.mxu0 0.0
  %1405 = vmatpush1.msra.mxu0 %v1387
  %1406 = vmatprep.subr.mxu0 0.0
  %1407 = vmatpush1.msra.mxu0 %v1388
  %1408 = vmatprep.subr.mxu0 0.0
  %1409 = vmatpush1.msra.mxu0 %v1389
  %1410 = vmatprep.subr.mxu0 0.0
  %1411 = vmatpush1.msra.mxu0 %v1390
  %1412 = vmatprep.subr.mxu0 0.0
  %1413 = vmatpush1.msra.mxu0 0.0
  %1414 = vmatprep.subr.mxu0 0.0
  %1415 = vmatpush1.msra.mxu0 0.0
  %1416 = vmatprep.subr.mxu0 0.0
  %1417 = vmatpush1.msra.mxu0 0.0
  %1418 = vmatprep.subr.mxu0 0.0
  %1419 = vmatpush1.msra.mxu0 0.0
  %1420 = vmatprep.subr.mxu0 0.0
  %1421 = vmatpush1.msra.mxu0 0.0
  %1422 = vmatprep.subr.mxu0 0.0
  %1423 = vmatpush1.msra.mxu0 0.0
  %1424 = vmatprep.subr.mxu0 0.0
  %1425 = vmatpush1.msra.mxu0 0.0
  %1426 = vmatprep.subr.mxu0 0.0
  %1427 = vmatpush1.msra.mxu0 0.0
  %1428 = vmatprep.subr.mxu0 0.0
  %1429 = vmatpush1.msra.mxu0 0.0
  %1430 = vmatprep.subr.mxu0 0.0
  %1431 = vmatpush1.msra.mxu0 0.0
  %1432 = vmatprep.subr.mxu0 0.0
  %1433 = vmatpush1.msra.mxu0 0.0
  %1434 = vmatprep.subr.mxu0 0.0
  %1435 = vmatpush1.msra.mxu0 0.0
  %1436 = vmatprep.subr.mxu0 0.0
  %1437 = vmatpush1.msra.mxu0 0.0
  %1438 = vmatprep.subr.mxu0 0.0
  %1439 = vmatpush1.msra.mxu0 0.0
  %1440 = vmatprep.subr.mxu0 0.0
  %1441 = vmatpush1.msra.mxu0 0.0
  %1442 = vmatprep.subr.mxu0 0.0
  %1443 = vmatpush1.msra.mxu0 0.0
  %1444 = vmatprep.subr.mxu0 0.0
  %1445 = vmatpush1.msra.mxu0 0.0
  %1446 = vmatprep.subr.mxu0 0.0
  %1447 = vmatpush1.msra.mxu0 0.0
  %1448 = vmatprep.subr.mxu0 0.0
  %1449 = vmatpush1.msra.mxu0 0.0
  %1450 = vmatprep.subr.mxu0 0.0
  %1451 = vmatpush1.msra.mxu0 0.0
  %1452 = vmatprep.subr.mxu0 0.0
  %1453 = vmatpush1.msra.mxu0 0.0
  %1454 = vmatprep.subr.mxu0 0.0
  %1455 = vmatpush1.msra.mxu0 0.0
  %1456 = vmatprep.subr.mxu0 0.0
  %1457 = vmatpush1.msra.mxu0 0.0
  %1458 = vmatprep.subr.mxu0 0.0
  %1459 = vmatpush1.msra.mxu0 0.0
  %1460 = vmatprep.subr.mxu0 0.0
  %1461 = vmatpush1.msra.mxu0 0.0
  %1462 = vmatprep.subr.mxu0 0.0
  %1463 = vmatpush1.msra.mxu0 0.0
  %1464 = vmatprep.subr.mxu0 0.0
  %1465 = vmatpush1.msra.mxu0 0.0
  %1466 = vmatprep.subr.mxu0 0.0
  %1467 = vmatpush1.msra.mxu0 0.0
  %1468 = vmatprep.mubr.f32.mxu0 0.0
  %1469 = vmatmul.mubr.f32.gmra.mrb[0].mxu0 %v1399
  %v1470 = vpop.f32.mrb[0].mxu0
  %v1471 = vadd.f32 %v1396, %v1470
  %v1472 = vpop.f32.mrb[0].mxu0
  %1473 = vmatprep.mubr.f32.mxu0 0.0
  %1474 = vmatmul.mubr.f32.gmra.mrb[0].mxu0 %v1402
  %v1475 = vpop.f32.mrb[0].mxu0
  %v1476 = vadd.f32 %v1396, %v1475
  %v1477 = vpop.f32.mrb[0].mxu0
  %1478 = vdwg.mxu0
  %v1479 = vmul.f32 %v1471, 1.702
  %v1480 = vmul.f32 %v1476, 1.702
  %v1481 = vxor.u32 %v1479, 2147483648
  %v1482 = vxor.u32 %v1480, 2147483648
  %v1483 = vmul.f32 %v1481, 1.442695
  %v1484 = vpow.pop %v1483
  %v1485 = vmul.f32 %v1482, 1.442695
  %v1486 = vpow.pop %v1485
  %v1487 = vadd.f32 %v1484, 1.0
  %v1488 = vadd.f32 %v1486, 1.0
  %v1489 = vrcp.pop %v1487
  %v1490 = vmul.f32 1.0, %v1489
  %v1491 = vrcp.pop %v1488
  %v1492 = vmul.f32 1.0, %v1491
  %v1493 = vmul.f32 %v1471, %v1490
  %v1494 = vmul.f32 %v1476, %v1492
  %v1495 = vld [vmem:[%s16] sm:$0xff]
  %v1496 = vld [vmem:[%s16 + $0x8] sm:$0xff]
  %v1497 = vld [vmem:[%s16 + $0x10] sm:$0xff]
  %v1498 = vld [vmem:[%s16 + $0x18] sm:$0xff]
  %v1499 = vld [vmem:[%s16 + $0x20] sm:$0xff]
  %v1500 = vld [vmem:[%s16 + $0x28] sm:$0xff]
  %v1501 = vld [vmem:[%s16 + $0x30] sm:$0xff]
  %v1502 = vld [vmem:[%s16 + $0x38] sm:$0xff]
  %v1503 = vld [vmem:[%s16 + $0x40] sm:$0xff]
  %v1504 = vld [vmem:[%s16 + $0x48] sm:$0xff]
  %v1505 = vld [vmem:[%s16 + $0x50] sm:$0xff]
  %v1506 = vld [vmem:[%s16 + $0x58] sm:$0xff]
  %v1507 = vld [vmem:[%s16 + $0x60] sm:$0xff]
  %v1508 = vld [vmem:[%s16 + $0x68] sm:$0xff]
  %v1509 = vld [vmem:[%s16 + $0x70] sm:$0xff]
  %v1510 = vld [vmem:[%s16 + $0x78] sm:$0xff]
  %1511 = vmatprep.subr.mxu0 0.0
  %1512 = vmatpush1.msra.mxu0 %v1495
  %1513 = vmatprep.subr.mxu0 0.0
  %1514 = vmatpush1.msra.mxu0 %v1496
  %1515 = vmatprep.subr.mxu0 0.0
  %1516 = vmatpush1.msra.mxu0 %v1497
  %1517 = vmatprep.subr.mxu0 0.0
  %1518 = vmatpush1.msra.mxu0 %v1498
  %1519 = vmatprep.subr.mxu0 0.0
  %1520 = vmatpush1.msra.mxu0 %v1499
  %1521 = vmatprep.subr.mxu0 0.0
  %1522 = vmatpush1.msra.mxu0 %v1500
  %1523 = vmatprep.subr.mxu0 0.0
  %1524 = vmatpush1.msra.mxu0 %v1501
  %1525 = vmatprep.subr.mxu0 0.0
  %1526 = vmatpush1.msra.mxu0 %v1502
  %1527 = vmatprep.subr.mxu0 0.0
  %1528 = vmatpush1.msra.mxu0 %v1503
  %1529 = vmatprep.subr.mxu0 0.0
  %1530 = vmatpush1.msra.mxu0 %v1504
  %1531 = vmatprep.subr.mxu0 0.0
  %1532 = vmatpush1.msra.mxu0 %v1505
  %1533 = vmatprep.subr.mxu0 0.0
  %1534 = vmatpush1.msra.mxu0 %v1506
  %1535 = vmatprep.subr.mxu0 0.0
  %1536 = vmatpush1.msra.mxu0 %v1507
  %1537 = vmatprep.subr.mxu0 0.0
  %1538 = vmatpush1.msra.mxu0 %v1508
  %1539 = vmatprep.subr.mxu0 0.0
  %1540 = vmatpush1.msra.mxu0 %v1509
  %1541 = vmatprep.subr.mxu0 0.0
  %1542 = vmatpush1.msra.mxu0 %v1510
  %1543 = vmatprep.subr.mxu0 0.0
  %1544 = vmatpush1.msra.mxu0 0.0
  %1545 = vmatprep.subr.mxu0 0.0
  %1546 = vmatpush1.msra.mxu0 0.0
  %1547 = vmatprep.subr.mxu0 0.0
  %1548 = vmatpush1.msra.mxu0 0.0
  %1549 = vmatprep.subr.mxu0 0.0
  %1550 = vmatpush1.msra.mxu0 0.0
  %1551 = vmatprep.subr.mxu0 0.0
  %1552 = vmatpush1.msra.mxu0 0.0
  %1553 = vmatprep.subr.mxu0 0.0
  %1554 = vmatpush1.msra.mxu0 0.0
  %1555 = vmatprep.subr.mxu0 0.0
  %1556 = vmatpush1.msra.mxu0 0.0
  %1557 = vmatprep.subr.mxu0 0.0
  %1558 = vmatpush1.msra.mxu0 0.0
  %1559 = vmatprep.subr.mxu0 0.0
  %1560 = vmatpush1.msra.mxu0 0.0
  %1561 = vmatprep.subr.mxu0 0.0
  %1562 = vmatpush1.msra.mxu0 0.0
  %1563 = vmatprep.subr.mxu0 0.0
  %1564 = vmatpush1.msra.mxu0 0.0
  %1565 = vmatprep.subr.mxu0 0.0
  %1566 = vmatpush1.msra.mxu0 0.0
  %1567 = vmatprep.subr.mxu0 0.0
  %1568 = vmatpush1.msra.mxu0 0.0
  %1569 = vmatprep.subr.mxu0 0.0
  %1570 = vmatpush1.msra.mxu0 0.0
  %1571 = vmatprep.subr.mxu0 0.0
  %1572 = vmatpush1.msra.mxu0 0.0
  %1573 = vmatprep.subr.mxu0 0.0
  %1574 = vmatpush1.msra.mxu0 0.0
  %1575 = vmatprep.mubr.f32.mxu0 0.0
  %1576 = vmatmul.mubr.f32.gmra.mrb[0].mxu0 %v1493
  %v1577 = vpop.f32.mrb[0].mxu0
  %v1578 = vadd.f32 0.0, %v1577
  %v1579 = vpop.f32.mrb[0].mxu0
  %1580 = vmatprep.mubr.f32.mxu0 0.0
  %1581 = vmatmul.mubr.f32.gmra.mrb[0].mxu0 %v1494
  %v1582 = vpop.f32.mrb[0].mxu0
  %v1583 = vadd.f32 0.0, %v1582
  %v1584 = vpop.f32.mrb[0].mxu0
  %1585 = vdwg.mxu0
  %v1586 = vadd.f32 %v1341, %v1578
  %v1587 = vadd.f32 %v1342, %v1583
  %v1588 = vld [vmem:[%s17] sm:$0x1]
  %v1590 = vlaneseq
  %v1591 = vshrl.u32 %v1590, 7
  %v1592 = vsub.s32 0, %v1591
  %v1593 = vrot.slane %v1588, %v1592
  %v1595 = vadd.f32 %v1586, %v1593
  %v1596 = vadd.f32 %v1587, %v1593
  %s1597 = scalar_lea.vmem %s6, 1
  %v1598 = vld [vmem:[%s1597] sm:$0x1]
  %s1599 = scalar_lea.vmem %s7, 1
  %v1600 = vld [vmem:[%s1599] sm:$0x1]
  %v1601 = vsel %vm205, %v1595, 0.0
  %1602 = vadd.xlane.f32.xlu0 %v1601
  %v1603 = vpop.xlane.xlu0 %1602
  %v1604 = vsel %vm209, %v1596, 0.0
  %1605 = vadd.xlane.f32.xlu0 %v1604
  %v1606 = vpop.xlane.xlu0 %1605
  %v1607 = vmul.f32 %v1603, %v213
  %v1608 = vmul.f32 %v1606, %v213
  %v1609 = vsub.f32 %v1595, %v1607
  %v1610 = vsub.f32 %v1596, %v1608
  %v1611 = vmul.f32 %v1609, %v1609
  %v1612 = vmul.f32 %v1610, %v1610
  %v1613 = vsel %vm205, %v1611, 0.0
  %1614 = vadd.xlane.f32.xlu0 %v1613
  %v1615 = vpop.xlane.xlu0 %1614
  %v1616 = vsel %vm209, %v1612, 0.0
  %1617 = vadd.xlane.f32.xlu0 %v1616
  %v1618 = vpop.xlane.xlu0 %1617
  %v1619 = vmul.f32 %v1615, %v213
  %v1620 = vmul.f32 %v1618, %v213
  %v1621 = vadd.f32 %v1619, 1e-05
  %v1622 = vadd.f32 %v1620, 1e-05
  %v1623 = vrsqrt.pop %v1621
  %v1624 = vrsqrt.pop %v1622
  %v1625 = vmul.f32 %v1609, %v1623
  %v1626 = vmul.f32 %v1610, %v1624
  %v1628 = vlaneseq
  %v1629 = vshrl.u32 %v1628, 7
  %v1630 = vsub.s32 0, %v1629
  %v1631 = vrot.slane %v1598, %v1630
  %v1633 = vmul.f32 %v1625, %v1631
  %v1634 = vmul.f32 %v1626, %v1631
  %v1636 = vlaneseq
  %v1637 = vshrl.u32 %v1636, 7
  %v1638 = vsub.s32 0, %v1637
  %v1639 = vrot.slane %v1600, %v1638
  %v1641 = vadd.f32 %v1633, %v1639
  %v1642 = vadd.f32 %v1634, %v1639
  %s1643 = scalar_lea.vmem %s8, 32
  %v1644 = vld [vmem:[%s1643] sm:$0xff]
  %v1645 = vld [vmem:[%s1643 + $0x8] sm:$0xff]
  %v1646 = vld [vmem:[%s1643 + $0x10] sm:$0xff]
  %v1647 = vld [vmem:[%s1643 + $0x18] sm:$0xff]
  %s1648 = scalar_lea.vmem %s9, 1
  %v1649 = vld [vmem:[%s1648] sm:$0x1]
  %v1651 = vlaneseq
  %v1652 = vshrl.u32 %v1651, 7
  %v1653 = vsub.s32 0, %v1652
  %v1654 = vrot.slane %v1649, %v1653
  %v1657 = vsel %vm205, %v1641, 0
  %v1660 = vsel %vm205, %v1642, 0
  %1662 = vmatprep.subr.mxu0 0.0
  %1663 = vmatpush1.msra.mxu0 %v1644
  %1664 = vmatprep.subr.mxu0 0.0
  %1665 = vmatpush1.msra.mxu0 %v1645
  %1666 = vmatprep.subr.mxu0 0.0
  %1667 = vmatpush1.msra.mxu0 %v1646
  %1668 = vmatprep.subr.mxu0 0.0
  %1669 = vmatpush1.msra.mxu0 %v1647
  %1670 = vmatprep.subr.mxu0 0.0
  %1671 = vmatpush1.msra.mxu0 0.0
  %1672 = vmatprep.subr.mxu0 0.0
  %1673 = vmatpush1.msra.mxu0 0.0
  %1674 = vmatprep.subr.mxu0 0.0
  %1675 = vmatpush1.msra.mxu0 0.0
  %1676 = vmatprep.subr.mxu0 0.0
  %1677 = vmatpush1.msra.mxu0 0.0
  %1678 = vmatprep.subr.mxu0 0.0
  %1679 = vmatpush1.msra.mxu0 0.0
  %1680 = vmatprep.subr.mxu0 0.0
  %1681 = vmatpush1.msra.mxu0 0.0
  %1682 = vmatprep.subr.mxu0 0.0
  %1683 = vmatpush1.msra.mxu0 0.0
  %1684 = vmatprep.subr.mxu0 0.0
  %1685 = vmatpush1.msra.mxu0 0.0
  %1686 = vmatprep.subr.mxu0 0.0
  %1687 = vmatpush1.msra.mxu0 0.0
  %1688 = vmatprep.subr.mxu0 0.0
  %1689 = vmatpush1.msra.mxu0 0.0
  %1690 = vmatprep.subr.mxu0 0.0
  %1691 = vmatpush1.msra.mxu0 0.0
  %1692 = vmatprep.subr.mxu0 0.0
  %1693 = vmatpush1.msra.mxu0 0.0
  %1694 = vmatprep.subr.mxu0 0.0
  %1695 = vmatpush1.msra.mxu0 0.0
  %1696 = vmatprep.subr.mxu0 0.0
  %1697 = vmatpush1.msra.mxu0 0.0
  %1698 = vmatprep.subr.mxu0 0.0
  %1699 = vmatpush1.msra.mxu0 0.0
  %1700 = vmatprep.subr.mxu0 0.0
  %1701 = vmatpush1.msra.mxu0 0.0
  %1702 = vmatprep.subr.mxu0 0.0
  %1703 = vmatpush1.msra.mxu0 0.0
  %1704 = vmatprep.subr.mxu0 0.0
  %1705 = vmatpush1.msra.mxu0 0.0
  %1706 = vmatprep.subr.mxu0 0.0
  %1707 = vmatpush1.msra.mxu0 0.0
  %1708 = vmatprep.subr.mxu0 0.0
  %1709 = vmatpush1.msra.mxu0 0.0
  %1710 = vmatprep.subr.mxu0 0.0
  %1711 = vmatpush1.msra.mxu0 0.0
  %1712 = vmatprep.subr.mxu0 0.0
  %1713 = vmatpush1.msra.mxu0 0.0
  %1714 = vmatprep.subr.mxu0 0.0
  %1715 = vmatpush1.msra.mxu0 0.0
  %1716 = vmatprep.subr.mxu0 0.0
  %1717 = vmatpush1.msra.mxu0 0.0
  %1718 = vmatprep.subr.mxu0 0.0
  %1719 = vmatpush1.msra.mxu0 0.0
  %1720 = vmatprep.subr.mxu0 0.0
  %1721 = vmatpush1.msra.mxu0 0.0
  %1722 = vmatprep.subr.mxu0 0.0
  %1723 = vmatpush1.msra.mxu0 0.0
  %1724 = vmatprep.subr.mxu0 0.0
  %1725 = vmatpush1.msra.mxu0 0.0
  %1726 = vmatprep.mubr.f32.mxu0 0.0
  %1727 = vmatmul.mubr.f32.gmra.mrb[0].mxu0 %v1657
  %v1728 = vpop.f32.mrb[0].mxu0
  %v1729 = vadd.f32 %v1654, %v1728
  %v1730 = vpop.f32.mrb[0].mxu0
  %1731 = vmatprep.mubr.f32.mxu0 0.0
  %1732 = vmatmul.mubr.f32.gmra.mrb[0].mxu0 %v1660
  %v1733 = vpop.f32.mrb[0].mxu0
  %v1734 = vadd.f32 %v1654, %v1733
  %v1735 = vpop.f32.mrb[0].mxu0
  %1736 = vdwg.mxu0
  %1739 = vrot.lane.b32.xlu0 %v1729, 96
  %v1740 = vpop.permute.xlu0 %1739
  %1741 = vrot.lane.b32.xlu0 %v1734, 96
  %v1742 = vpop.permute.xlu0 %1741
  %v1743 = vsel %vm392, %v1729, 0
  %v1745 = vsel %vm392, %v1734, 0
  %v1747 = vsel %vm392, %v1740, 0
  %v1749 = vsel %vm392, %v1742, 0
  %1751 = vmatprep.subr.mxu0 0.0
  %1752 = vmatpush1.xpose.msra.mxu0 %v1747
  %1753 = vmatprep.subr.mxu0 0.0
  %1754 = vmatpush1.xpose.msra.mxu0 %v1749
  %1755 = vmatprep.subr.mxu0 0.0
  %1756 = vmatpush1.xpose.msra.mxu0 0.0
  %1757 = vmatprep.subr.mxu0 0.0
  %1758 = vmatpush1.xpose.msra.mxu0 0.0
  %1759 = vmatprep.subr.mxu0 0.0
  %1760 = vmatpush1.xpose.msra.mxu0 0.0
  %1761 = vmatprep.subr.mxu0 0.0
  %1762 = vmatpush1.xpose.msra.mxu0 0.0
  %1763 = vmatprep.subr.mxu0 0.0
  %1764 = vmatpush1.xpose.msra.mxu0 0.0
  %1765 = vmatprep.subr.mxu0 0.0
  %1766 = vmatpush1.xpose.msra.mxu0 0.0
  %1767 = vmatprep.subr.mxu0 0.0
  %1768 = vmatpush1.xpose.msra.mxu0 0.0
  %1769 = vmatprep.subr.mxu0 0.0
  %1770 = vmatpush1.xpose.msra.mxu0 0.0
  %1771 = vmatprep.subr.mxu0 0.0
  %1772 = vmatpush1.xpose.msra.mxu0 0.0
  %1773 = vmatprep.subr.mxu0 0.0
  %1774 = vmatpush1.xpose.msra.mxu0 0.0
  %1775 = vmatprep.subr.mxu0 0.0
  %1776 = vmatpush1.xpose.msra.mxu0 0.0
  %1777 = vmatprep.subr.mxu0 0.0
  %1778 = vmatpush1.xpose.msra.mxu0 0.0
  %1779 = vmatprep.subr.mxu0 0.0
  %1780 = vmatpush1.xpose.msra.mxu0 0.0
  %1781 = vmatprep.subr.mxu0 0.0
  %1782 = vmatpush1.xpose.msra.mxu0 0.0
  %1783 = vmatprep.subr.mxu0 0.0
  %1784 = vmatpush1.xpose.msra.mxu0 0.0
  %1785 = vmatprep.subr.mxu0 0.0
  %1786 = vmatpush1.xpose.msra.mxu0 0.0
  %1787 = vmatprep.subr.mxu0 0.0
  %1788 = vmatpush1.xpose.msra.mxu0 0.0
  %1789 = vmatprep.subr.mxu0 0.0
  %1790 = vmatpush1.xpose.msra.mxu0 0.0
  %1791 = vmatprep.subr.mxu0 0.0
  %1792 = vmatpush1.xpose.msra.mxu0 0.0
  %1793 = vmatprep.subr.mxu0 0.0
  %1794 = vmatpush1.xpose.msra.mxu0 0.0
  %1795 = vmatprep.subr.mxu0 0.0
  %1796 = vmatpush1.xpose.msra.mxu0 0.0
  %1797 = vmatprep.subr.mxu0 0.0
  %1798 = vmatpush1.xpose.msra.mxu0 0.0
  %1799 = vmatprep.subr.mxu0 0.0
  %1800 = vmatpush1.xpose.msra.mxu0 0.0
  %1801 = vmatprep.subr.mxu0 0.0
  %1802 = vmatpush1.xpose.msra.mxu0 0.0
  %1803 = vmatprep.subr.mxu0 0.0
  %1804 = vmatpush1.xpose.msra.mxu0 0.0
  %1805 = vmatprep.subr.mxu0 0.0
  %1806 = vmatpush1.xpose.msra.mxu0 0.0
  %1807 = vmatprep.subr.mxu0 0.0
  %1808 = vmatpush1.xpose.msra.mxu0 0.0
  %1809 = vmatprep.subr.mxu0 0.0
  %1810 = vmatpush1.xpose.msra.mxu0 0.0
  %1811 = vmatprep.subr.mxu0 0.0
  %1812 = vmatpush1.xpose.msra.mxu0 0.0
  %1813 = vmatprep.subr.mxu0 0.0
  %1814 = vmatpush1.xpose.msra.mxu0 0.0
  %1815 = vmatprep.mubr.f32.mxu0 0.0
  %1816 = vmatmul.mubr.f32.gmra.mrb[0].mxu0 %v1743
  %v1817 = vpop.f32.mrb[0].mxu0
  %v1818 = vadd.f32 0.0, %v1817
  %v1819 = vpop.f32.mrb[0].mxu0
  %1820 = vmatprep.mubr.f32.mxu0 0.0
  %1821 = vmatmul.mubr.f32.gmra.mrb[0].mxu0 %v1745
  %v1822 = vpop.f32.mrb[0].mxu0
  %v1823 = vadd.f32 0.0, %v1822
  %v1824 = vpop.f32.mrb[0].mxu0
  %1825 = vdwg.mxu0
  %v1826 = vmul.f32 %v1818, 0.35355338
  %v1827 = vmul.f32 %v1823, 0.35355338
  %v1828 = vadd.f32 %v1826, %v88
  %v1829 = vadd.f32 %v1827, %v89
  %v1830 = vsel %vm480, %v1828, -inf
  %1831 = vmax.xlane.f32.xlu0 %v1830
  %v1832 = vpop.xlane.xlu0 %1831
  %v1833 = vsel %vm484, %v1829, -inf
  %1834 = vmax.xlane.f32.xlu0 %v1833
  %v1835 = vpop.xlane.xlu0 %1834
  %v1836 = vsub.f32 %v1828, %v1832
  %v1837 = vsub.f32 %v1829, %v1835
  %v1838 = vmul.f32 %v1836, 1.442695
  %v1839 = vpow.pop %v1838
  %v1840 = vmul.f32 %v1837, 1.442695
  %v1841 = vpow.pop %v1840
  %v1842 = vsel %vm480, %v1839, 0.0
  %1843 = vadd.xlane.f32.xlu0 %v1842
  %v1844 = vpop.xlane.xlu0 %1843
  %v1845 = vsel %vm484, %v1841, 0.0
  %1846 = vadd.xlane.f32.xlu0 %v1845
  %v1847 = vpop.xlane.xlu0 %1846
  %v1848 = vrcp.pop %v1844
  %v1849 = vrcp.pop %v1847
  %v1850 = vmul.f32 %v1839, %v1848
  %v1851 = vmul.f32 %v1841, %v1849
  %1852 = vrot.lane.b32.xlu0 %v1729, 64
  %v1853 = vpop.permute.xlu0 %1852
  %1854 = vrot.lane.b32.xlu0 %v1734, 64
  %v1855 = vpop.permute.xlu0 %1854
  %v1858 = vsel %vm480, %v1850, 0
  %v1861 = vsel %vm480, %v1851, 0
  %v1863 = vsel %vm515, %v1855, 0
  %1865 = vmatprep.subr.mxu0 0.0
  %1866 = vmatpush1.msra.mxu0 %v1853
  %1867 = vmatprep.subr.mxu0 0.0
  %1868 = vmatpush1.msra.mxu0 %v1863
  %1869 = vmatprep.subr.mxu0 0.0
  %1870 = vmatpush1.msra.mxu0 0.0
  %1871 = vmatprep.subr.mxu0 0.0
  %1872 = vmatpush1.msra.mxu0 0.0
  %1873 = vmatprep.subr.mxu0 0.0
  %1874 = vmatpush1.msra.mxu0 0.0
  %1875 = vmatprep.subr.mxu0 0.0
  %1876 = vmatpush1.msra.mxu0 0.0
  %1877 = vmatprep.subr.mxu0 0.0
  %1878 = vmatpush1.msra.mxu0 0.0
  %1879 = vmatprep.subr.mxu0 0.0
  %1880 = vmatpush1.msra.mxu0 0.0
  %1881 = vmatprep.subr.mxu0 0.0
  %1882 = vmatpush1.msra.mxu0 0.0
  %1883 = vmatprep.subr.mxu0 0.0
  %1884 = vmatpush1.msra.mxu0 0.0
  %1885 = vmatprep.subr.mxu0 0.0
  %1886 = vmatpush1.msra.mxu0 0.0
  %1887 = vmatprep.subr.mxu0 0.0
  %1888 = vmatpush1.msra.mxu0 0.0
  %1889 = vmatprep.subr.mxu0 0.0
  %1890 = vmatpush1.msra.mxu0 0.0
  %1891 = vmatprep.subr.mxu0 0.0
  %1892 = vmatpush1.msra.mxu0 0.0
  %1893 = vmatprep.subr.mxu0 0.0
  %1894 = vmatpush1.msra.mxu0 0.0
  %1895 = vmatprep.subr.mxu0 0.0
  %1896 = vmatpush1.msra.mxu0 0.0
  %1897 = vmatprep.subr.mxu0 0.0
  %1898 = vmatpush1.msra.mxu0 0.0
  %1899 = vmatprep.subr.mxu0 0.0
  %1900 = vmatpush1.msra.mxu0 0.0
  %1901 = vmatprep.subr.mxu0 0.0
  %1902 = vmatpush1.msra.mxu0 0.0
  %1903 = vmatprep.subr.mxu0 0.0
  %1904 = vmatpush1.msra.mxu0 0.0
  %1905 = vmatprep.subr.mxu0 0.0
  %1906 = vmatpush1.msra.mxu0 0.0
  %1907 = vmatprep.subr.mxu0 0.0
  %1908 = vmatpush1.msra.mxu0 0.0
  %1909 = vmatprep.subr.mxu0 0.0
  %1910 = vmatpush1.msra.mxu0 0.0
  %1911 = vmatprep.subr.mxu0 0.0
  %1912 = vmatpush1.msra.mxu0 0.0
  %1913 = vmatprep.subr.mxu0 0.0
  %1914 = vmatpush1.msra.mxu0 0.0
  %1915 = vmatprep.subr.mxu0 0.0
  %1916 = vmatpush1.msra.mxu0 0.0
  %1917 = vmatprep.subr.mxu0 0.0
  %1918 = vmatpush1.msra.mxu0 0.0
  %1919 = vmatprep.subr.mxu0 0.0
  %1920 = vmatpush1.msra.mxu0 0.0
  %1921 = vmatprep.subr.mxu0 0.0
  %1922 = vmatpush1.msra.mxu0 0.0
  %1923 = vmatprep.subr.mxu0 0.0
  %1924 = vmatpush1.msra.mxu0 0.0
  %1925 = vmatprep.subr.mxu0 0.0
  %1926 = vmatpush1.msra.mxu0 0.0
  %1927 = vmatprep.subr.mxu0 0.0
  %1928 = vmatpush1.msra.mxu0 0.0
  %1929 = vmatprep.mubr.f32.mxu0 0.0
  %1930 = vmatmul.mubr.f32.gmra.mrb[0].mxu0 %v1858
  %v1931 = vpop.f32.mrb[0].mxu0
  %v1932 = vadd.f32 0.0, %v1931
  %v1933 = vpop.f32.mrb[0].mxu0
  %1934 = vmatprep.mubr.f32.mxu0 0.0
  %1935 = vmatmul.mubr.f32.gmra.mrb[0].mxu0 %v1861
  %v1936 = vpop.f32.mrb[0].mxu0
  %v1937 = vadd.f32 0.0, %v1936
  %v1938 = vpop.f32.mrb[0].mxu0
  %1939 = vdwg.mxu0
  %1940 = vst.msk [vmem:[#allocation2] sm:$0xff] %vm392, %v1932
  %1941 = vst.msk [vmem:[#allocation2 + $0x8] sm:$0x3] %vm594, %v1937
  %1942 = vrot.lane.b32.xlu0 %v1729, 120
  %v1943 = vpop.permute.xlu0 %1942
  %1944 = vrot.lane.b32.xlu0 %v1734, 120
  %v1945 = vpop.permute.xlu0 %1944
  %1946 = vrot.lane.b32.xlu0 %v1729, 88
  %v1947 = vpop.permute.xlu0 %1946
  %1948 = vrot.lane.b32.xlu0 %v1734, 88
  %v1949 = vpop.permute.xlu0 %1948
  %v1950 = vsel %vm392, %v1943, 0
  %v1952 = vsel %vm392, %v1945, 0
  %v1954 = vsel %vm392, %v1947, 0
  %v1956 = vsel %vm392, %v1949, 0
  %1958 = vmatprep.subr.mxu0 0.0
  %1959 = vmatpush1.xpose.msra.mxu0 %v1954
  %1960 = vmatprep.subr.mxu0 0.0
  %1961 = vmatpush1.xpose.msra.mxu0 %v1956
  %1962 = vmatprep.subr.mxu0 0.0
  %1963 = vmatpush1.xpose.msra.mxu0 0.0
  %1964 = vmatprep.subr.mxu0 0.0
  %1965 = vmatpush1.xpose.msra.mxu0 0.0
  %1966 = vmatprep.subr.mxu0 0.0
  %1967 = vmatpush1.xpose.msra.mxu0 0.0
  %1968 = vmatprep.subr.mxu0 0.0
  %1969 = vmatpush1.xpose.msra.mxu0 0.0
  %1970 = vmatprep.subr.mxu0 0.0
  %1971 = vmatpush1.xpose.msra.mxu0 0.0
  %1972 = vmatprep.subr.mxu0 0.0
  %1973 = vmatpush1.xpose.msra.mxu0 0.0
  %1974 = vmatprep.subr.mxu0 0.0
  %1975 = vmatpush1.xpose.msra.mxu0 0.0
  %1976 = vmatprep.subr.mxu0 0.0
  %1977 = vmatpush1.xpose.msra.mxu0 0.0
  %1978 = vmatprep.subr.mxu0 0.0
  %1979 = vmatpush1.xpose.msra.mxu0 0.0
  %1980 = vmatprep.subr.mxu0 0.0
  %1981 = vmatpush1.xpose.msra.mxu0 0.0
  %1982 = vmatprep.subr.mxu0 0.0
  %1983 = vmatpush1.xpose.msra.mxu0 0.0
  %1984 = vmatprep.subr.mxu0 0.0
  %1985 = vmatpush1.xpose.msra.mxu0 0.0
  %1986 = vmatprep.subr.mxu0 0.0
  %1987 = vmatpush1.xpose.msra.mxu0 0.0
  %1988 = vmatprep.subr.mxu0 0.0
  %1989 = vmatpush1.xpose.msra.mxu0 0.0
  %1990 = vmatprep.subr.mxu0 0.0
  %1991 = vmatpush1.xpose.msra.mxu0 0.0
  %1992 = vmatprep.subr.mxu0 0.0
  %1993 = vmatpush1.xpose.msra.mxu0 0.0
  %1994 = vmatprep.subr.mxu0 0.0
  %1995 = vmatpush1.xpose.msra.mxu0 0.0
  %1996 = vmatprep.subr.mxu0 0.0
  %1997 = vmatpush1.xpose.msra.mxu0 0.0
  %1998 = vmatprep.subr.mxu0 0.0
  %1999 = vmatpush1.xpose.msra.mxu0 0.0
  %2000 = vmatprep.subr.mxu0 0.0
  %2001 = vmatpush1.xpose.msra.mxu0 0.0
  %2002 = vmatprep.subr.mxu0 0.0
  %2003 = vmatpush1.xpose.msra.mxu0 0.0
  %2004 = vmatprep.subr.mxu0 0.0
  %2005 = vmatpush1.xpose.msra.mxu0 0.0
  %2006 = vmatprep.subr.mxu0 0.0
  %2007 = vmatpush1.xpose.msra.mxu0 0.0
  %2008 = vmatprep.subr.mxu0 0.0
  %2009 = vmatpush1.xpose.msra.mxu0 0.0
  %2010 = vmatprep.subr.mxu0 0.0
  %2011 = vmatpush1.xpose.msra.mxu0 0.0
  %2012 = vmatprep.subr.mxu0 0.0
  %2013 = vmatpush1.xpose.msra.mxu0 0.0
  %2014 = vmatprep.subr.mxu0 0.0
  %2015 = vmatpush1.xpose.msra.mxu0 0.0
  %2016 = vmatprep.subr.mxu0 0.0
  %2017 = vmatpush1.xpose.msra.mxu0 0.0
  %2018 = vmatprep.subr.mxu0 0.0
  %2019 = vmatpush1.xpose.msra.mxu0 0.0
  %2020 = vmatprep.subr.mxu0 0.0
  %2021 = vmatpush1.xpose.msra.mxu0 0.0
  %2022 = vmatprep.mubr.f32.mxu0 0.0
  %2023 = vmatmul.mubr.f32.gmra.mrb[0].mxu0 %v1950
  %v2024 = vpop.f32.mrb[0].mxu0
  %v2025 = vadd.f32 0.0, %v2024
  %v2026 = vpop.f32.mrb[0].mxu0
  %2027 = vmatprep.mubr.f32.mxu0 0.0
  %2028 = vmatmul.mubr.f32.gmra.mrb[0].mxu0 %v1952
  %v2029 = vpop.f32.mrb[0].mxu0
  %v2030 = vadd.f32 0.0, %v2029
  %v2031 = vpop.f32.mrb[0].mxu0
  %2032 = vdwg.mxu0
  %v2033 = vmul.f32 %v2025, 0.35355338
  %v2034 = vmul.f32 %v2030, 0.35355338
  %v2035 = vadd.f32 %v2033, %v88
  %v2036 = vadd.f32 %v2034, %v89
  %v2037 = vsel %vm480, %v2035, -inf
  %2038 = vmax.xlane.f32.xlu0 %v2037
  %v2039 = vpop.xlane.xlu0 %2038
  %v2040 = vsel %vm484, %v2036, -inf
  %2041 = vmax.xlane.f32.xlu0 %v2040
  %v2042 = vpop.xlane.xlu0 %2041
  %v2043 = vsub.f32 %v2035, %v2039
  %v2044 = vsub.f32 %v2036, %v2042
  %v2045 = vmul.f32 %v2043, 1.442695
  %v2046 = vpow.pop %v2045
  %v2047 = vmul.f32 %v2044, 1.442695
  %v2048 = vpow.pop %v2047
  %v2049 = vsel %vm480, %v2046, 0.0
  %2050 = vadd.xlane.f32.xlu0 %v2049
  %v2051 = vpop.xlane.xlu0 %2050
  %v2052 = vsel %vm484, %v2048, 0.0
  %2053 = vadd.xlane.f32.xlu0 %v2052
  %v2054 = vpop.xlane.xlu0 %2053
  %v2055 = vrcp.pop %v2051
  %v2056 = vrcp.pop %v2054
  %v2057 = vmul.f32 %v2046, %v2055
  %v2058 = vmul.f32 %v2048, %v2056
  %2059 = vrot.lane.b32.xlu0 %v1729, 56
  %v2060 = vpop.permute.xlu0 %2059
  %2061 = vrot.lane.b32.xlu0 %v1734, 56
  %v2062 = vpop.permute.xlu0 %2061
  %v2065 = vsel %vm480, %v2057, 0
  %v2068 = vsel %vm480, %v2058, 0
  %v2070 = vsel %vm515, %v2062, 0
  %2072 = vmatprep.subr.mxu0 0.0
  %2073 = vmatpush1.msra.mxu0 %v2060
  %2074 = vmatprep.subr.mxu0 0.0
  %2075 = vmatpush1.msra.mxu0 %v2070
  %2076 = vmatprep.subr.mxu0 0.0
  %2077 = vmatpush1.msra.mxu0 0.0
  %2078 = vmatprep.subr.mxu0 0.0
  %2079 = vmatpush1.msra.mxu0 0.0
  %2080 = vmatprep.subr.mxu0 0.0
  %2081 = vmatpush1.msra.mxu0 0.0
  %2082 = vmatprep.subr.mxu0 0.0
  %2083 = vmatpush1.msra.mxu0 0.0
  %2084 = vmatprep.subr.mxu0 0.0
  %2085 = vmatpush1.msra.mxu0 0.0
  %2086 = vmatprep.subr.mxu0 0.0
  %2087 = vmatpush1.msra.mxu0 0.0
  %2088 = vmatprep.subr.mxu0 0.0
  %2089 = vmatpush1.msra.mxu0 0.0
  %2090 = vmatprep.subr.mxu0 0.0
  %2091 = vmatpush1.msra.mxu0 0.0
  %2092 = vmatprep.subr.mxu0 0.0
  %2093 = vmatpush1.msra.mxu0 0.0
  %2094 = vmatprep.subr.mxu0 0.0
  %2095 = vmatpush1.msra.mxu0 0.0
  %2096 = vmatprep.subr.mxu0 0.0
  %2097 = vmatpush1.msra.mxu0 0.0
  %2098 = vmatprep.subr.mxu0 0.0
  %2099 = vmatpush1.msra.mxu0 0.0
  %2100 = vmatprep.subr.mxu0 0.0
  %2101 = vmatpush1.msra.mxu0 0.0
  %2102 = vmatprep.subr.mxu0 0.0
  %2103 = vmatpush1.msra.mxu0 0.0
  %2104 = vmatprep.subr.mxu0 0.0
  %2105 = vmatpush1.msra.mxu0 0.0
  %2106 = vmatprep.subr.mxu0 0.0
  %2107 = vmatpush1.msra.mxu0 0.0
  %2108 = vmatprep.subr.mxu0 0.0
  %2109 = vmatpush1.msra.mxu0 0.0
  %2110 = vmatprep.subr.mxu0 0.0
  %2111 = vmatpush1.msra.mxu0 0.0
  %2112 = vmatprep.subr.mxu0 0.0
  %2113 = vmatpush1.msra.mxu0 0.0
  %2114 = vmatprep.subr.mxu0 0.0
  %2115 = vmatpush1.msra.mxu0 0.0
  %2116 = vmatprep.subr.mxu0 0.0
  %2117 = vmatpush1.msra.mxu0 0.0
  %2118 = vmatprep.subr.mxu0 0.0
  %2119 = vmatpush1.msra.mxu0 0.0
  %2120 = vmatprep.subr.mxu0 0.0
  %2121 = vmatpush1.msra.mxu0 0.0
  %2122 = vmatprep.subr.mxu0 0.0
  %2123 = vmatpush1.msra.mxu0 0.0
  %2124 = vmatprep.subr.mxu0 0.0
  %2125 = vmatpush1.msra.mxu0 0.0
  %2126 = vmatprep.subr.mxu0 0.0
  %2127 = vmatpush1.msra.mxu0 0.0
  %2128 = vmatprep.subr.mxu0 0.0
  %2129 = vmatpush1.msra.mxu0 0.0
  %2130 = vmatprep.subr.mxu0 0.0
  %2131 = vmatpush1.msra.mxu0 0.0
  %2132 = vmatprep.subr.mxu0 0.0
  %2133 = vmatpush1.msra.mxu0 0.0
  %2134 = vmatprep.subr.mxu0 0.0
  %2135 = vmatpush1.msra.mxu0 0.0
  %2136 = vmatprep.mubr.f32.mxu0 0.0
  %2137 = vmatmul.mubr.f32.gmra.mrb[0].mxu0 %v2065
  %v2138 = vpop.f32.mrb[0].mxu0
  %v2139 = vadd.f32 0.0, %v2138
  %v2140 = vpop.f32.mrb[0].mxu0
  %2141 = vmatprep.mubr.f32.mxu0 0.0
  %2142 = vmatmul.mubr.f32.gmra.mrb[0].mxu0 %v2068
  %v2143 = vpop.f32.mrb[0].mxu0
  %v2144 = vadd.f32 0.0, %v2143
  %v2145 = vpop.f32.mrb[0].mxu0
  %2146 = vdwg.mxu0
  %2149 = vrot.lane.b32.xlu0 %v2139, 8
  %v2150 = vpop.permute.xlu0 %2149
  %2151 = vrot.lane.b32.xlu0 %v2144, 8
  %v2152 = vpop.permute.xlu0 %2151
  %2155 = vst.msk [vmem:[#allocation2] sm:$0xff] %vm809, %v2150
  %2156 = vst.msk [vmem:[#allocation2 + $0x8] sm:$0x3] %vm811, %v2152
  %2157 = vrot.lane.b32.xlu0 %v1729, 112
  %v2158 = vpop.permute.xlu0 %2157
  %2159 = vrot.lane.b32.xlu0 %v1734, 112
  %v2160 = vpop.permute.xlu0 %2159
  %2161 = vrot.lane.b32.xlu0 %v1729, 80
  %v2162 = vpop.permute.xlu0 %2161
  %2163 = vrot.lane.b32.xlu0 %v1734, 80
  %v2164 = vpop.permute.xlu0 %2163
  %v2165 = vsel %vm392, %v2158, 0
  %v2167 = vsel %vm392, %v2160, 0
  %v2169 = vsel %vm392, %v2162, 0
  %v2171 = vsel %vm392, %v2164, 0
  %2173 = vmatprep.subr.mxu0 0.0
  %2174 = vmatpush1.xpose.msra.mxu0 %v2169
  %2175 = vmatprep.subr.mxu0 0.0
  %2176 = vmatpush1.xpose.msra.mxu0 %v2171
  %2177 = vmatprep.subr.mxu0 0.0
  %2178 = vmatpush1.xpose.msra.mxu0 0.0
  %2179 = vmatprep.subr.mxu0 0.0
  %2180 = vmatpush1.xpose.msra.mxu0 0.0
  %2181 = vmatprep.subr.mxu0 0.0
  %2182 = vmatpush1.xpose.msra.mxu0 0.0
  %2183 = vmatprep.subr.mxu0 0.0
  %2184 = vmatpush1.xpose.msra.mxu0 0.0
  %2185 = vmatprep.subr.mxu0 0.0
  %2186 = vmatpush1.xpose.msra.mxu0 0.0
  %2187 = vmatprep.subr.mxu0 0.0
  %2188 = vmatpush1.xpose.msra.mxu0 0.0
  %2189 = vmatprep.subr.mxu0 0.0
  %2190 = vmatpush1.xpose.msra.mxu0 0.0
  %2191 = vmatprep.subr.mxu0 0.0
  %2192 = vmatpush1.xpose.msra.mxu0 0.0
  %2193 = vmatprep.subr.mxu0 0.0
  %2194 = vmatpush1.xpose.msra.mxu0 0.0
  %2195 = vmatprep.subr.mxu0 0.0
  %2196 = vmatpush1.xpose.msra.mxu0 0.0
  %2197 = vmatprep.subr.mxu0 0.0
  %2198 = vmatpush1.xpose.msra.mxu0 0.0
  %2199 = vmatprep.subr.mxu0 0.0
  %2200 = vmatpush1.xpose.msra.mxu0 0.0
  %2201 = vmatprep.subr.mxu0 0.0
  %2202 = vmatpush1.xpose.msra.mxu0 0.0
  %2203 = vmatprep.subr.mxu0 0.0
  %2204 = vmatpush1.xpose.msra.mxu0 0.0
  %2205 = vmatprep.subr.mxu0 0.0
  %2206 = vmatpush1.xpose.msra.mxu0 0.0
  %2207 = vmatprep.subr.mxu0 0.0
  %2208 = vmatpush1.xpose.msra.mxu0 0.0
  %2209 = vmatprep.subr.mxu0 0.0
  %2210 = vmatpush1.xpose.msra.mxu0 0.0
  %2211 = vmatprep.subr.mxu0 0.0
  %2212 = vmatpush1.xpose.msra.mxu0 0.0
  %2213 = vmatprep.subr.mxu0 0.0
  %2214 = vmatpush1.xpose.msra.mxu0 0.0
  %2215 = vmatprep.subr.mxu0 0.0
  %2216 = vmatpush1.xpose.msra.mxu0 0.0
  %2217 = vmatprep.subr.mxu0 0.0
  %2218 = vmatpush1.xpose.msra.mxu0 0.0
  %2219 = vmatprep.subr.mxu0 0.0
  %2220 = vmatpush1.xpose.msra.mxu0 0.0
  %2221 = vmatprep.subr.mxu0 0.0
  %2222 = vmatpush1.xpose.msra.mxu0 0.0
  %2223 = vmatprep.subr.mxu0 0.0
  %2224 = vmatpush1.xpose.msra.mxu0 0.0
  %2225 = vmatprep.subr.mxu0 0.0
  %2226 = vmatpush1.xpose.msra.mxu0 0.0
  %2227 = vmatprep.subr.mxu0 0.0
  %2228 = vmatpush1.xpose.msra.mxu0 0.0
  %2229 = vmatprep.subr.mxu0 0.0
  %2230 = vmatpush1.xpose.msra.mxu0 0.0
  %2231 = vmatprep.subr.mxu0 0.0
  %2232 = vmatpush1.xpose.msra.mxu0 0.0
  %2233 = vmatprep.subr.mxu0 0.0
  %2234 = vmatpush1.xpose.msra.mxu0 0.0
  %2235 = vmatprep.subr.mxu0 0.0
  %2236 = vmatpush1.xpose.msra.mxu0 0.0
  %2237 = vmatprep.mubr.f32.mxu0 0.0
  %2238 = vmatmul.mubr.f32.gmra.mrb[0].mxu0 %v2165
  %v2239 = vpop.f32.mrb[0].mxu0
  %v2240 = vadd.f32 0.0, %v2239
  %v2241 = vpop.f32.mrb[0].mxu0
  %2242 = vmatprep.mubr.f32.mxu0 0.0
  %2243 = vmatmul.mubr.f32.gmra.mrb[0].mxu0 %v2167
  %v2244 = vpop.f32.mrb[0].mxu0
  %v2245 = vadd.f32 0.0, %v2244
  %v2246 = vpop.f32.mrb[0].mxu0
  %2247 = vdwg.mxu0
  %v2248 = vmul.f32 %v2240, 0.35355338
  %v2249 = vmul.f32 %v2245, 0.35355338
  %v2250 = vadd.f32 %v2248, %v88
  %v2251 = vadd.f32 %v2249, %v89
  %v2252 = vsel %vm480, %v2250, -inf
  %2253 = vmax.xlane.f32.xlu0 %v2252
  %v2254 = vpop.xlane.xlu0 %2253
  %v2255 = vsel %vm484, %v2251, -inf
  %2256 = vmax.xlane.f32.xlu0 %v2255
  %v2257 = vpop.xlane.xlu0 %2256
  %v2258 = vsub.f32 %v2250, %v2254
  %v2259 = vsub.f32 %v2251, %v2257
  %v2260 = vmul.f32 %v2258, 1.442695
  %v2261 = vpow.pop %v2260
  %v2262 = vmul.f32 %v2259, 1.442695
  %v2263 = vpow.pop %v2262
  %v2264 = vsel %vm480, %v2261, 0.0
  %2265 = vadd.xlane.f32.xlu0 %v2264
  %v2266 = vpop.xlane.xlu0 %2265
  %v2267 = vsel %vm484, %v2263, 0.0
  %2268 = vadd.xlane.f32.xlu0 %v2267
  %v2269 = vpop.xlane.xlu0 %2268
  %v2270 = vrcp.pop %v2266
  %v2271 = vrcp.pop %v2269
  %v2272 = vmul.f32 %v2261, %v2270
  %v2273 = vmul.f32 %v2263, %v2271
  %2274 = vrot.lane.b32.xlu0 %v1729, 48
  %v2275 = vpop.permute.xlu0 %2274
  %2276 = vrot.lane.b32.xlu0 %v1734, 48
  %v2277 = vpop.permute.xlu0 %2276
  %v2280 = vsel %vm480, %v2272, 0
  %v2283 = vsel %vm480, %v2273, 0
  %v2285 = vsel %vm515, %v2277, 0
  %2287 = vmatprep.subr.mxu0 0.0
  %2288 = vmatpush1.msra.mxu0 %v2275
  %2289 = vmatprep.subr.mxu0 0.0
  %2290 = vmatpush1.msra.mxu0 %v2285
  %2291 = vmatprep.subr.mxu0 0.0
  %2292 = vmatpush1.msra.mxu0 0.0
  %2293 = vmatprep.subr.mxu0 0.0
  %2294 = vmatpush1.msra.mxu0 0.0
  %2295 = vmatprep.subr.mxu0 0.0
  %2296 = vmatpush1.msra.mxu0 0.0
  %2297 = vmatprep.subr.mxu0 0.0
  %2298 = vmatpush1.msra.mxu0 0.0
  %2299 = vmatprep.subr.mxu0 0.0
  %2300 = vmatpush1.msra.mxu0 0.0
  %2301 = vmatprep.subr.mxu0 0.0
  %2302 = vmatpush1.msra.mxu0 0.0
  %2303 = vmatprep.subr.mxu0 0.0
  %2304 = vmatpush1.msra.mxu0 0.0
  %2305 = vmatprep.subr.mxu0 0.0
  %2306 = vmatpush1.msra.mxu0 0.0
  %2307 = vmatprep.subr.mxu0 0.0
  %2308 = vmatpush1.msra.mxu0 0.0
  %2309 = vmatprep.subr.mxu0 0.0
  %2310 = vmatpush1.msra.mxu0 0.0
  %2311 = vmatprep.subr.mxu0 0.0
  %2312 = vmatpush1.msra.mxu0 0.0
  %2313 = vmatprep.subr.mxu0 0.0
  %2314 = vmatpush1.msra.mxu0 0.0
  %2315 = vmatprep.subr.mxu0 0.0
  %2316 = vmatpush1.msra.mxu0 0.0
  %2317 = vmatprep.subr.mxu0 0.0
  %2318 = vmatpush1.msra.mxu0 0.0
  %2319 = vmatprep.subr.mxu0 0.0
  %2320 = vmatpush1.msra.mxu0 0.0
  %2321 = vmatprep.subr.mxu0 0.0
  %2322 = vmatpush1.msra.mxu0 0.0
  %2323 = vmatprep.subr.mxu0 0.0
  %2324 = vmatpush1.msra.mxu0 0.0
  %2325 = vmatprep.subr.mxu0 0.0
  %2326 = vmatpush1.msra.mxu0 0.0
  %2327 = vmatprep.subr.mxu0 0.0
  %2328 = vmatpush1.msra.mxu0 0.0
  %2329 = vmatprep.subr.mxu0 0.0
  %2330 = vmatpush1.msra.mxu0 0.0
  %2331 = vmatprep.subr.mxu0 0.0
  %2332 = vmatpush1.msra.mxu0 0.0
  %2333 = vmatprep.subr.mxu0 0.0
  %2334 = vmatpush1.msra.mxu0 0.0
  %2335 = vmatprep.subr.mxu0 0.0
  %2336 = vmatpush1.msra.mxu0 0.0
  %2337 = vmatprep.subr.mxu0 0.0
  %2338 = vmatpush1.msra.mxu0 0.0
  %2339 = vmatprep.subr.mxu0 0.0
  %2340 = vmatpush1.msra.mxu0 0.0
  %2341 = vmatprep.subr.mxu0 0.0
  %2342 = vmatpush1.msra.mxu0 0.0
  %2343 = vmatprep.subr.mxu0 0.0
  %2344 = vmatpush1.msra.mxu0 0.0
  %2345 = vmatprep.subr.mxu0 0.0
  %2346 = vmatpush1.msra.mxu0 0.0
  %2347 = vmatprep.subr.mxu0 0.0
  %2348 = vmatpush1.msra.mxu0 0.0
  %2349 = vmatprep.subr.mxu0 0.0
  %2350 = vmatpush1.msra.mxu0 0.0
  %2351 = vmatprep.mubr.f32.mxu0 0.0
  %2352 = vmatmul.mubr.f32.gmra.mrb[0].mxu0 %v2280
  %v2353 = vpop.f32.mrb[0].mxu0
  %v2354 = vadd.f32 0.0, %v2353
  %v2355 = vpop.f32.mrb[0].mxu0
  %2356 = vmatprep.mubr.f32.mxu0 0.0
  %2357 = vmatmul.mubr.f32.gmra.mrb[0].mxu0 %v2283
  %v2358 = vpop.f32.mrb[0].mxu0
  %v2359 = vadd.f32 0.0, %v2358
  %v2360 = vpop.f32.mrb[0].mxu0
  %2361 = vdwg.mxu0
  %2364 = vrot.lane.b32.xlu0 %v2354, 16
  %v2365 = vpop.permute.xlu0 %2364
  %2366 = vrot.lane.b32.xlu0 %v2359, 16
  %v2367 = vpop.permute.xlu0 %2366
  %2370 = vst.msk [vmem:[#allocation2] sm:$0xff] %vm1026, %v2365
  %2371 = vst.msk [vmem:[#allocation2 + $0x8] sm:$0x3] %vm1028, %v2367
  %2372 = vrot.lane.b32.xlu0 %v1729, 104
  %v2373 = vpop.permute.xlu0 %2372
  %2374 = vrot.lane.b32.xlu0 %v1734, 104
  %v2375 = vpop.permute.xlu0 %2374
  %2376 = vrot.lane.b32.xlu0 %v1729, 72
  %v2377 = vpop.permute.xlu0 %2376
  %2378 = vrot.lane.b32.xlu0 %v1734, 72
  %v2379 = vpop.permute.xlu0 %2378
  %v2380 = vsel %vm392, %v2373, 0
  %v2382 = vsel %vm392, %v2375, 0
  %v2384 = vsel %vm392, %v2377, 0
  %v2386 = vsel %vm392, %v2379, 0
  %2388 = vmatprep.subr.mxu0 0.0
  %2389 = vmatpush1.xpose.msra.mxu0 %v2384
  %2390 = vmatprep.subr.mxu0 0.0
  %2391 = vmatpush1.xpose.msra.mxu0 %v2386
  %2392 = vmatprep.subr.mxu0 0.0
  %2393 = vmatpush1.xpose.msra.mxu0 0.0
  %2394 = vmatprep.subr.mxu0 0.0
  %2395 = vmatpush1.xpose.msra.mxu0 0.0
  %2396 = vmatprep.subr.mxu0 0.0
  %2397 = vmatpush1.xpose.msra.mxu0 0.0
  %2398 = vmatprep.subr.mxu0 0.0
  %2399 = vmatpush1.xpose.msra.mxu0 0.0
  %2400 = vmatprep.subr.mxu0 0.0
  %2401 = vmatpush1.xpose.msra.mxu0 0.0
  %2402 = vmatprep.subr.mxu0 0.0
  %2403 = vmatpush1.xpose.msra.mxu0 0.0
  %2404 = vmatprep.subr.mxu0 0.0
  %2405 = vmatpush1.xpose.msra.mxu0 0.0
  %2406 = vmatprep.subr.mxu0 0.0
  %2407 = vmatpush1.xpose.msra.mxu0 0.0
  %2408 = vmatprep.subr.mxu0 0.0
  %2409 = vmatpush1.xpose.msra.mxu0 0.0
  %2410 = vmatprep.subr.mxu0 0.0
  %2411 = vmatpush1.xpose.msra.mxu0 0.0
  %2412 = vmatprep.subr.mxu0 0.0
  %2413 = vmatpush1.xpose.msra.mxu0 0.0
  %2414 = vmatprep.subr.mxu0 0.0
  %2415 = vmatpush1.xpose.msra.mxu0 0.0
  %2416 = vmatprep.subr.mxu0 0.0
  %2417 = vmatpush1.xpose.msra.mxu0 0.0
  %2418 = vmatprep.subr.mxu0 0.0
  %2419 = vmatpush1.xpose.msra.mxu0 0.0
  %2420 = vmatprep.subr.mxu0 0.0
  %2421 = vmatpush1.xpose.msra.mxu0 0.0
  %2422 = vmatprep.subr.mxu0 0.0
  %2423 = vmatpush1.xpose.msra.mxu0 0.0
  %2424 = vmatprep.subr.mxu0 0.0
  %2425 = vmatpush1.xpose.msra.mxu0 0.0
  %2426 = vmatprep.subr.mxu0 0.0
  %2427 = vmatpush1.xpose.msra.mxu0 0.0
  %2428 = vmatprep.subr.mxu0 0.0
  %2429 = vmatpush1.xpose.msra.mxu0 0.0
  %2430 = vmatprep.subr.mxu0 0.0
  %2431 = vmatpush1.xpose.msra.mxu0 0.0
  %2432 = vmatprep.subr.mxu0 0.0
  %2433 = vmatpush1.xpose.msra.mxu0 0.0
  %2434 = vmatprep.subr.mxu0 0.0
  %2435 = vmatpush1.xpose.msra.mxu0 0.0
  %2436 = vmatprep.subr.mxu0 0.0
  %2437 = vmatpush1.xpose.msra.mxu0 0.0
  %2438 = vmatprep.subr.mxu0 0.0
  %2439 = vmatpush1.xpose.msra.mxu0 0.0
  %2440 = vmatprep.subr.mxu0 0.0
  %2441 = vmatpush1.xpose.msra.mxu0 0.0
  %2442 = vmatprep.subr.mxu0 0.0
  %2443 = vmatpush1.xpose.msra.mxu0 0.0
  %2444 = vmatprep.subr.mxu0 0.0
  %2445 = vmatpush1.xpose.msra.mxu0 0.0
  %2446 = vmatprep.subr.mxu0 0.0
  %2447 = vmatpush1.xpose.msra.mxu0 0.0
  %2448 = vmatprep.subr.mxu0 0.0
  %2449 = vmatpush1.xpose.msra.mxu0 0.0
  %2450 = vmatprep.subr.mxu0 0.0
  %2451 = vmatpush1.xpose.msra.mxu0 0.0
  %2452 = vmatprep.mubr.f32.mxu0 0.0
  %2453 = vmatmul.mubr.f32.gmra.mrb[0].mxu0 %v2380
  %v2454 = vpop.f32.mrb[0].mxu0
  %v2455 = vadd.f32 0.0, %v2454
  %v2456 = vpop.f32.mrb[0].mxu0
  %2457 = vmatprep.mubr.f32.mxu0 0.0
  %2458 = vmatmul.mubr.f32.gmra.mrb[0].mxu0 %v2382
  %v2459 = vpop.f32.mrb[0].mxu0
  %v2460 = vadd.f32 0.0, %v2459
  %v2461 = vpop.f32.mrb[0].mxu0
  %2462 = vdwg.mxu0
  %v2463 = vmul.f32 %v2455, 0.35355338
  %v2464 = vmul.f32 %v2460, 0.35355338
  %v2465 = vadd.f32 %v2463, %v88
  %v2466 = vadd.f32 %v2464, %v89
  %v2467 = vsel %vm480, %v2465, -inf
  %2468 = vmax.xlane.f32.xlu0 %v2467
  %v2469 = vpop.xlane.xlu0 %2468
  %v2470 = vsel %vm484, %v2466, -inf
  %2471 = vmax.xlane.f32.xlu0 %v2470
  %v2472 = vpop.xlane.xlu0 %2471
  %v2473 = vsub.f32 %v2465, %v2469
  %v2474 = vsub.f32 %v2466, %v2472
  %v2475 = vmul.f32 %v2473, 1.442695
  %v2476 = vpow.pop %v2475
  %v2477 = vmul.f32 %v2474, 1.442695
  %v2478 = vpow.pop %v2477
  %v2479 = vsel %vm480, %v2476, 0.0
  %2480 = vadd.xlane.f32.xlu0 %v2479
  %v2481 = vpop.xlane.xlu0 %2480
  %v2482 = vsel %vm484, %v2478, 0.0
  %2483 = vadd.xlane.f32.xlu0 %v2482
  %v2484 = vpop.xlane.xlu0 %2483
  %v2485 = vrcp.pop %v2481
  %v2486 = vrcp.pop %v2484
  %v2487 = vmul.f32 %v2476, %v2485
  %v2488 = vmul.f32 %v2478, %v2486
  %2489 = vrot.lane.b32.xlu0 %v1729, 40
  %v2490 = vpop.permute.xlu0 %2489
  %2491 = vrot.lane.b32.xlu0 %v1734, 40
  %v2492 = vpop.permute.xlu0 %2491
  %v2495 = vsel %vm480, %v2487, 0
  %v2498 = vsel %vm480, %v2488, 0
  %v2500 = vsel %vm515, %v2492, 0
  %2502 = vmatprep.subr.mxu0 0.0
  %2503 = vmatpush1.msra.mxu0 %v2490
  %2504 = vmatprep.subr.mxu0 0.0
  %2505 = vmatpush1.msra.mxu0 %v2500
  %2506 = vmatprep.subr.mxu0 0.0
  %2507 = vmatpush1.msra.mxu0 0.0
  %2508 = vmatprep.subr.mxu0 0.0
  %2509 = vmatpush1.msra.mxu0 0.0
  %2510 = vmatprep.subr.mxu0 0.0
  %2511 = vmatpush1.msra.mxu0 0.0
  %2512 = vmatprep.subr.mxu0 0.0
  %2513 = vmatpush1.msra.mxu0 0.0
  %2514 = vmatprep.subr.mxu0 0.0
  %2515 = vmatpush1.msra.mxu0 0.0
  %2516 = vmatprep.subr.mxu0 0.0
  %2517 = vmatpush1.msra.mxu0 0.0
  %2518 = vmatprep.subr.mxu0 0.0
  %2519 = vmatpush1.msra.mxu0 0.0
  %2520 = vmatprep.subr.mxu0 0.0
  %2521 = vmatpush1.msra.mxu0 0.0
  %2522 = vmatprep.subr.mxu0 0.0
  %2523 = vmatpush1.msra.mxu0 0.0
  %2524 = vmatprep.subr.mxu0 0.0
  %2525 = vmatpush1.msra.mxu0 0.0
  %2526 = vmatprep.subr.mxu0 0.0
  %2527 = vmatpush1.msra.mxu0 0.0
  %2528 = vmatprep.subr.mxu0 0.0
  %2529 = vmatpush1.msra.mxu0 0.0
  %2530 = vmatprep.subr.mxu0 0.0
  %2531 = vmatpush1.msra.mxu0 0.0
  %2532 = vmatprep.subr.mxu0 0.0
  %2533 = vmatpush1.msra.mxu0 0.0
  %2534 = vmatprep.subr.mxu0 0.0
  %2535 = vmatpush1.msra.mxu0 0.0
  %2536 = vmatprep.subr.mxu0 0.0
  %2537 = vmatpush1.msra.mxu0 0.0
  %2538 = vmatprep.subr.mxu0 0.0
  %2539 = vmatpush1.msra.mxu0 0.0
  %2540 = vmatprep.subr.mxu0 0.0
  %2541 = vmatpush1.msra.mxu0 0.0
  %2542 = vmatprep.subr.mxu0 0.0
  %2543 = vmatpush1.msra.mxu0 0.0
  %2544 = vmatprep.subr.mxu0 0.0
  %2545 = vmatpush1.msra.mxu0 0.0
  %2546 = vmatprep.subr.mxu0 0.0
  %2547 = vmatpush1.msra.mxu0 0.0
  %2548 = vmatprep.subr.mxu0 0.0
  %2549 = vmatpush1.msra.mxu0 0.0
  %2550 = vmatprep.subr.mxu0 0.0
  %2551 = vmatpush1.msra.mxu0 0.0
  %2552 = vmatprep.subr.mxu0 0.0
  %2553 = vmatpush1.msra.mxu0 0.0
  %2554 = vmatprep.subr.mxu0 0.0
  %2555 = vmatpush1.msra.mxu0 0.0
  %2556 = vmatprep.subr.mxu0 0.0
  %2557 = vmatpush1.msra.mxu0 0.0
  %2558 = vmatprep.subr.mxu0 0.0
  %2559 = vmatpush1.msra.mxu0 0.0
  %2560 = vmatprep.subr.mxu0 0.0
  %2561 = vmatpush1.msra.mxu0 0.0
  %2562 = vmatprep.subr.mxu0 0.0
  %2563 = vmatpush1.msra.mxu0 0.0
  %2564 = vmatprep.subr.mxu0 0.0
  %2565 = vmatpush1.msra.mxu0 0.0
  %2566 = vmatprep.mubr.f32.mxu0 0.0
  %2567 = vmatmul.mubr.f32.gmra.mrb[0].mxu0 %v2495
  %v2568 = vpop.f32.mrb[0].mxu0
  %v2569 = vadd.f32 0.0, %v2568
  %v2570 = vpop.f32.mrb[0].mxu0
  %2571 = vmatprep.mubr.f32.mxu0 0.0
  %2572 = vmatmul.mubr.f32.gmra.mrb[0].mxu0 %v2498
  %v2573 = vpop.f32.mrb[0].mxu0
  %v2574 = vadd.f32 0.0, %v2573
  %v2575 = vpop.f32.mrb[0].mxu0
  %2576 = vdwg.mxu0
  %2579 = vrot.lane.b32.xlu0 %v2569, 24
  %v2580 = vpop.permute.xlu0 %2579
  %2581 = vrot.lane.b32.xlu0 %v2574, 24
  %v2582 = vpop.permute.xlu0 %2581
  %2585 = vst.msk [vmem:[#allocation2] sm:$0xff] %vm1243, %v2580
  %2586 = vst.msk [vmem:[#allocation2 + $0x8] sm:$0x3] %vm1245, %v2582
  %v2587 = vld [vmem:[#allocation2] sm:$0xff]
  %v2588 = vld [vmem:[#allocation2 + $0x8] sm:$0x3]
  %s2589 = scalar_lea.vmem %s10, 32
  %v2590 = vld [vmem:[%s2589] sm:$0xff]
  %v2591 = vld [vmem:[%s2589 + $0x8] sm:$0xff]
  %v2592 = vld [vmem:[%s2589 + $0x10] sm:$0xff]
  %v2593 = vld [vmem:[%s2589 + $0x18] sm:$0xff]
  %s2594 = scalar_lea.vmem %s11, 1
  %v2595 = vld [vmem:[%s2594] sm:$0x1]
  %v2597 = vlaneseq
  %v2598 = vshrl.u32 %v2597, 7
  %v2599 = vsub.s32 0, %v2598
  %v2600 = vrot.slane %v2595, %v2599
  %v2603 = vsel %vm205, %v2587, 0
  %v2606 = vsel %vm205, %v2588, 0
  %2608 = vmatprep.subr.mxu0 0.0
  %2609 = vmatpush1.msra.mxu0 %v2590
  %2610 = vmatprep.subr.mxu0 0.0
  %2611 = vmatpush1.msra.mxu0 %v2591
  %2612 = vmatprep.subr.mxu0 0.0
  %2613 = vmatpush1.msra.mxu0 %v2592
  %2614 = vmatprep.subr.mxu0 0.0
  %2615 = vmatpush1.msra.mxu0 %v2593
  %2616 = vmatprep.subr.mxu0 0.0
  %2617 = vmatpush1.msra.mxu0 0.0
  %2618 = vmatprep.subr.mxu0 0.0
  %2619 = vmatpush1.msra.mxu0 0.0
  %2620 = vmatprep.subr.mxu0 0.0
  %2621 = vmatpush1.msra.mxu0 0.0
  %2622 = vmatprep.subr.mxu0 0.0
  %2623 = vmatpush1.msra.mxu0 0.0
  %2624 = vmatprep.subr.mxu0 0.0
  %2625 = vmatpush1.msra.mxu0 0.0
  %2626 = vmatprep.subr.mxu0 0.0
  %2627 = vmatpush1.msra.mxu0 0.0
  %2628 = vmatprep.subr.mxu0 0.0
  %2629 = vmatpush1.msra.mxu0 0.0
  %2630 = vmatprep.subr.mxu0 0.0
  %2631 = vmatpush1.msra.mxu0 0.0
  %2632 = vmatprep.subr.mxu0 0.0
  %2633 = vmatpush1.msra.mxu0 0.0
  %2634 = vmatprep.subr.mxu0 0.0
  %2635 = vmatpush1.msra.mxu0 0.0
  %2636 = vmatprep.subr.mxu0 0.0
  %2637 = vmatpush1.msra.mxu0 0.0
  %2638 = vmatprep.subr.mxu0 0.0
  %2639 = vmatpush1.msra.mxu0 0.0
  %2640 = vmatprep.subr.mxu0 0.0
  %2641 = vmatpush1.msra.mxu0 0.0
  %2642 = vmatprep.subr.mxu0 0.0
  %2643 = vmatpush1.msra.mxu0 0.0
  %2644 = vmatprep.subr.mxu0 0.0
  %2645 = vmatpush1.msra.mxu0 0.0
  %2646 = vmatprep.subr.mxu0 0.0
  %2647 = vmatpush1.msra.mxu0 0.0
  %2648 = vmatprep.subr.mxu0 0.0
  %2649 = vmatpush1.msra.mxu0 0.0
  %2650 = vmatprep.subr.mxu0 0.0
  %2651 = vmatpush1.msra.mxu0 0.0
  %2652 = vmatprep.subr.mxu0 0.0
  %2653 = vmatpush1.msra.mxu0 0.0
  %2654 = vmatprep.subr.mxu0 0.0
  %2655 = vmatpush1.msra.mxu0 0.0
  %2656 = vmatprep.subr.mxu0 0.0
  %2657 = vmatpush1.msra.mxu0 0.0
  %2658 = vmatprep.subr.mxu0 0.0
  %2659 = vmatpush1.msra.mxu0 0.0
  %2660 = vmatprep.subr.mxu0 0.0
  %2661 = vmatpush1.msra.mxu0 0.0
  %2662 = vmatprep.subr.mxu0 0.0
  %2663 = vmatpush1.msra.mxu0 0.0
  %2664 = vmatprep.subr.mxu0 0.0
  %2665 = vmatpush1.msra.mxu0 0.0
  %2666 = vmatprep.subr.mxu0 0.0
  %2667 = vmatpush1.msra.mxu0 0.0
  %2668 = vmatprep.subr.mxu0 0.0
  %2669 = vmatpush1.msra.mxu0 0.0
  %2670 = vmatprep.subr.mxu0 0.0
  %2671 = vmatpush1.msra.mxu0 0.0
  %2672 = vmatprep.mubr.f32.mxu0 0.0
  %2673 = vmatmul.mubr.f32.gmra.mrb[0].mxu0 %v2603
  %v2674 = vpop.f32.mrb[0].mxu0
  %v2675 = vadd.f32 %v2600, %v2674
  %v2676 = vpop.f32.mrb[0].mxu0
  %2677 = vmatprep.mubr.f32.mxu0 0.0
  %2678 = vmatmul.mubr.f32.gmra.mrb[0].mxu0 %v2606
  %v2679 = vpop.f32.mrb[0].mxu0
  %v2680 = vadd.f32 %v2600, %v2679
  %v2681 = vpop.f32.mrb[0].mxu0
  %2682 = vdwg.mxu0
  %v2683 = vadd.f32 %v1595, %v2675
  %v2684 = vadd.f32 %v1596, %v2680
  %s2685 = scalar_lea.vmem %s12, 1
  %v2686 = vld [vmem:[%s2685] sm:$0x1]
  %s2687 = scalar_lea.vmem %s13, 1
  %v2688 = vld [vmem:[%s2687] sm:$0x1]
  %v2689 = vsel %vm205, %v2683, 0.0
  %2690 = vadd.xlane.f32.xlu0 %v2689
  %v2691 = vpop.xlane.xlu0 %2690
  %v2692 = vsel %vm209, %v2684, 0.0
  %2693 = vadd.xlane.f32.xlu0 %v2692
  %v2694 = vpop.xlane.xlu0 %2693
  %v2695 = vmul.f32 %v2691, %v213
  %v2696 = vmul.f32 %v2694, %v213
  %v2697 = vsub.f32 %v2683, %v2695
  %v2698 = vsub.f32 %v2684, %v2696
  %v2699 = vmul.f32 %v2697, %v2697
  %v2700 = vmul.f32 %v2698, %v2698
  %v2701 = vsel %vm205, %v2699, 0.0
  %2702 = vadd.xlane.f32.xlu0 %v2701
  %v2703 = vpop.xlane.xlu0 %2702
  %v2704 = vsel %vm209, %v2700, 0.0
  %2705 = vadd.xlane.f32.xlu0 %v2704
  %v2706 = vpop.xlane.xlu0 %2705
  %v2707 = vmul.f32 %v2703, %v213
  %v2708 = vmul.f32 %v2706, %v213
  %v2709 = vadd.f32 %v2707, 1e-05
  %v2710 = vadd.f32 %v2708, 1e-05
  %v2711 = vrsqrt.pop %v2709
  %v2712 = vrsqrt.pop %v2710
  %v2713 = vmul.f32 %v2697, %v2711
  %v2714 = vmul.f32 %v2698, %v2712
  %v2716 = vlaneseq
  %v2717 = vshrl.u32 %v2716, 7
  %v2718 = vsub.s32 0, %v2717
  %v2719 = vrot.slane %v2686, %v2718
  %v2721 = vmul.f32 %v2713, %v2719
  %v2722 = vmul.f32 %v2714, %v2719
  %v2724 = vlaneseq
  %v2725 = vshrl.u32 %v2724, 7
  %v2726 = vsub.s32 0, %v2725
  %v2727 = vrot.slane %v2688, %v2726
  %v2729 = vadd.f32 %v2721, %v2727
  %v2730 = vadd.f32 %v2722, %v2727
  %s2731 = scalar_lea.vmem %s14, 32
  %v2732 = vld [vmem:[%s2731] sm:$0xff]
  %v2733 = vld [vmem:[%s2731 + $0x8] sm:$0xff]
  %v2734 = vld [vmem:[%s2731 + $0x10] sm:$0xff]
  %v2735 = vld [vmem:[%s2731 + $0x18] sm:$0xff]
  %s2736 = scalar_lea.vmem %s15, 1
  %v2737 = vld [vmem:[%s2736] sm:$0x1]
  %v2739 = vlaneseq
  %v2740 = vshrl.u32 %v2739, 7
  %v2741 = vsub.s32 0, %v2740
  %v2742 = vrot.slane %v2737, %v2741
  %v2745 = vsel %vm205, %v2729, 0
  %v2748 = vsel %vm205, %v2730, 0
  %2750 = vmatprep.subr.mxu0 0.0
  %2751 = vmatpush1.msra.mxu0 %v2732
  %2752 = vmatprep.subr.mxu0 0.0
  %2753 = vmatpush1.msra.mxu0 %v2733
  %2754 = vmatprep.subr.mxu0 0.0
  %2755 = vmatpush1.msra.mxu0 %v2734
  %2756 = vmatprep.subr.mxu0 0.0
  %2757 = vmatpush1.msra.mxu0 %v2735
  %2758 = vmatprep.subr.mxu0 0.0
  %2759 = vmatpush1.msra.mxu0 0.0
  %2760 = vmatprep.subr.mxu0 0.0
  %2761 = vmatpush1.msra.mxu0 0.0
  %2762 = vmatprep.subr.mxu0 0.0
  %2763 = vmatpush1.msra.mxu0 0.0
  %2764 = vmatprep.subr.mxu0 0.0
  %2765 = vmatpush1.msra.mxu0 0.0
  %2766 = vmatprep.subr.mxu0 0.0
  %2767 = vmatpush1.msra.mxu0 0.0
  %2768 = vmatprep.subr.mxu0 0.0
  %2769 = vmatpush1.msra.mxu0 0.0
  %2770 = vmatprep.subr.mxu0 0.0
  %2771 = vmatpush1.msra.mxu0 0.0
  %2772 = vmatprep.subr.mxu0 0.0
  %2773 = vmatpush1.msra.mxu0 0.0
  %2774 = vmatprep.subr.mxu0 0.0
  %2775 = vmatpush1.msra.mxu0 0.0
  %2776 = vmatprep.subr.mxu0 0.0
  %2777 = vmatpush1.msra.mxu0 0.0
  %2778 = vmatprep.subr.mxu0 0.0
  %2779 = vmatpush1.msra.mxu0 0.0
  %2780 = vmatprep.subr.mxu0 0.0
  %2781 = vmatpush1.msra.mxu0 0.0
  %2782 = vmatprep.subr.mxu0 0.0
  %2783 = vmatpush1.msra.mxu0 0.0
  %2784 = vmatprep.subr.mxu0 0.0
  %2785 = vmatpush1.msra.mxu0 0.0
  %2786 = vmatprep.subr.mxu0 0.0
  %2787 = vmatpush1.msra.mxu0 0.0
  %2788 = vmatprep.subr.mxu0 0.0
  %2789 = vmatpush1.msra.mxu0 0.0
  %2790 = vmatprep.subr.mxu0 0.0
  %2791 = vmatpush1.msra.mxu0 0.0
  %2792 = vmatprep.subr.mxu0 0.0
  %2793 = vmatpush1.msra.mxu0 0.0
  %2794 = vmatprep.subr.mxu0 0.0
  %2795 = vmatpush1.msra.mxu0 0.0
  %2796 = vmatprep.subr.mxu0 0.0
  %2797 = vmatpush1.msra.mxu0 0.0
  %2798 = vmatprep.subr.mxu0 0.0
  %2799 = vmatpush1.msra.mxu0 0.0
  %2800 = vmatprep.subr.mxu0 0.0
  %2801 = vmatpush1.msra.mxu0 0.0
  %2802 = vmatprep.subr.mxu0 0.0
  %2803 = vmatpush1.msra.mxu0 0.0
  %2804 = vmatprep.subr.mxu0 0.0
  %2805 = vmatpush1.msra.mxu0 0.0
  %2806 = vmatprep.subr.mxu0 0.0
  %2807 = vmatpush1.msra.mxu0 0.0
  %2808 = vmatprep.subr.mxu0 0.0
  %2809 = vmatpush1.msra.mxu0 0.0
  %2810 = vmatprep.subr.mxu0 0.0
  %2811 = vmatpush1.msra.mxu0 0.0
  %2812 = vmatprep.subr.mxu0 0.0
  %2813 = vmatpush1.msra.mxu0 0.0
  %2814 = vmatprep.mubr.f32.mxu0 0.0
  %2815 = vmatmul.mubr.f32.gmra.mrb[0].mxu0 %v2745
  %v2816 = vpop.f32.mrb[0].mxu0
  %v2817 = vadd.f32 %v2742, %v2816
  %v2818 = vpop.f32.mrb[0].mxu0
  %2819 = vmatprep.mubr.f32.mxu0 0.0
  %2820 = vmatmul.mubr.f32.gmra.mrb[0].mxu0 %v2748
  %v2821 = vpop.f32.mrb[0].mxu0
  %v2822 = vadd.f32 %v2742, %v2821
  %v2823 = vpop.f32.mrb[0].mxu0
  %2824 = vdwg.mxu0
  %v2825 = vmul.f32 %v2817, 1.702
  %v2826 = vmul.f32 %v2822, 1.702
  %v2827 = vxor.u32 %v2825, 2147483648
  %v2828 = vxor.u32 %v2826, 2147483648
  %v2829 = vmul.f32 %v2827, 1.442695
  %v2830 = vpow.pop %v2829
  %v2831 = vmul.f32 %v2828, 1.442695
  %v2832 = vpow.pop %v2831
  %v2833 = vadd.f32 %v2830, 1.0
  %v2834 = vadd.f32 %v2832, 1.0
  %v2835 = vrcp.pop %v2833
  %v2836 = vmul.f32 1.0, %v2835
  %v2837 = vrcp.pop %v2834
  %v2838 = vmul.f32 1.0, %v2837
  %v2839 = vmul.f32 %v2817, %v2836
  %v2840 = vmul.f32 %v2822, %v2838
  %s2841 = scalar_lea.vmem %s16, 128
  %v2842 = vld [vmem:[%s2841] sm:$0xff]
  %v2843 = vld [vmem:[%s2841 + $0x8] sm:$0xff]
  %v2844 = vld [vmem:[%s2841 + $0x10] sm:$0xff]
  %v2845 = vld [vmem:[%s2841 + $0x18] sm:$0xff]
  %v2846 = vld [vmem:[%s2841 + $0x20] sm:$0xff]
  %v2847 = vld [vmem:[%s2841 + $0x28] sm:$0xff]
  %v2848 = vld [vmem:[%s2841 + $0x30] sm:$0xff]
  %v2849 = vld [vmem:[%s2841 + $0x38] sm:$0xff]
  %v2850 = vld [vmem:[%s2841 + $0x40] sm:$0xff]
  %v2851 = vld [vmem:[%s2841 + $0x48] sm:$0xff]
  %v2852 = vld [vmem:[%s2841 + $0x50] sm:$0xff]
  %v2853 = vld [vmem:[%s2841 + $0x58] sm:$0xff]
  %v2854 = vld [vmem:[%s2841 + $0x60] sm:$0xff]
  %v2855 = vld [vmem:[%s2841 + $0x68] sm:$0xff]
  %v2856 = vld [vmem:[%s2841 + $0x70] sm:$0xff]
  %v2857 = vld [vmem:[%s2841 + $0x78] sm:$0xff]
  %2858 = vmatprep.subr.mxu0 0.0
  %2859 = vmatpush1.msra.mxu0 %v2842
  %2860 = vmatprep.subr.mxu0 0.0
  %2861 = vmatpush1.msra.mxu0 %v2843
  %2862 = vmatprep.subr.mxu0 0.0
  %2863 = vmatpush1.msra.mxu0 %v2844
  %2864 = vmatprep.subr.mxu0 0.0
  %2865 = vmatpush1.msra.mxu0 %v2845
  %2866 = vmatprep.subr.mxu0 0.0
  %2867 = vmatpush1.msra.mxu0 %v2846
  %2868 = vmatprep.subr.mxu0 0.0
  %2869 = vmatpush1.msra.mxu0 %v2847
  %2870 = vmatprep.subr.mxu0 0.0
  %2871 = vmatpush1.msra.mxu0 %v2848
  %2872 = vmatprep.subr.mxu0 0.0
  %2873 = vmatpush1.msra.mxu0 %v2849
  %2874 = vmatprep.subr.mxu0 0.0
  %2875 = vmatpush1.msra.mxu0 %v2850
  %2876 = vmatprep.subr.mxu0 0.0
  %2877 = vmatpush1.msra.mxu0 %v2851
  %2878 = vmatprep.subr.mxu0 0.0
  %2879 = vmatpush1.msra.mxu0 %v2852
  %2880 = vmatprep.subr.mxu0 0.0
  %2881 = vmatpush1.msra.mxu0 %v2853
  %2882 = vmatprep.subr.mxu0 0.0
  %2883 = vmatpush1.msra.mxu0 %v2854
  %2884 = vmatprep.subr.mxu0 0.0
  %2885 = vmatpush1.msra.mxu0 %v2855
  %2886 = vmatprep.subr.mxu0 0.0
  %2887 = vmatpush1.msra.mxu0 %v2856
  %2888 = vmatprep.subr.mxu0 0.0
  %2889 = vmatpush1.msra.mxu0 %v2857
  %2890 = vmatprep.subr.mxu0 0.0
  %2891 = vmatpush1.msra.mxu0 0.0
  %2892 = vmatprep.subr.mxu0 0.0
  %2893 = vmatpush1.msra.mxu0 0.0
  %2894 = vmatprep.subr.mxu0 0.0
  %2895 = vmatpush1.msra.mxu0 0.0
  %2896 = vmatprep.subr.mxu0 0.0
  %2897 = vmatpush1.msra.mxu0 0.0
  %2898 = vmatprep.subr.mxu0 0.0
  %2899 = vmatpush1.msra.mxu0 0.0
  %2900 = vmatprep.subr.mxu0 0.0
  %2901 = vmatpush1.msra.mxu0 0.0
  %2902 = vmatprep.subr.mxu0 0.0
  %2903 = vmatpush1.msra.mxu0 0.0
  %2904 = vmatprep.subr.mxu0 0.0
  %2905 = vmatpush1.msra.mxu0 0.0
  %2906 = vmatprep.subr.mxu0 0.0
  %2907 = vmatpush1.msra.mxu0 0.0
  %2908 = vmatprep.subr.mxu0 0.0
  %2909 = vmatpush1.msra.mxu0 0.0
  %2910 = vmatprep.subr.mxu0 0.0
  %2911 = vmatpush1.msra.mxu0 0.0
  %2912 = vmatprep.subr.mxu0 0.0
  %2913 = vmatpush1.msra.mxu0 0.0
  %2914 = vmatprep.subr.mxu0 0.0
  %2915 = vmatpush1.msra.mxu0 0.0
  %2916 = vmatprep.subr.mxu0 0.0
  %2917 = vmatpush1.msra.mxu0 0.0
  %2918 = vmatprep.subr.mxu0 0.0
  %2919 = vmatpush1.msra.mxu0 0.0
  %2920 = vmatprep.subr.mxu0 0.0
  %2921 = vmatpush1.msra.mxu0 0.0
  %2922 = vmatprep.mubr.f32.mxu0 0.0
  %2923 = vmatmul.mubr.f32.gmra.mrb[0].mxu0 %v2839
  %v2924 = vpop.f32.mrb[0].mxu0
  %v2925 = vadd.f32 0.0, %v2924
  %v2926 = vpop.f32.mrb[0].mxu0
  %2927 = vmatprep.mubr.f32.mxu0 0.0
  %2928 = vmatmul.mubr.f32.gmra.mrb[0].mxu0 %v2840
  %v2929 = vpop.f32.mrb[0].mxu0
  %v2930 = vadd.f32 0.0, %v2929
  %v2931 = vpop.f32.mrb[0].mxu0
  %2932 = vdwg.mxu0
  %v2933 = vadd.f32 %v2683, %v2925
  %v2934 = vadd.f32 %v2684, %v2930
  %s2935 = scalar_lea.vmem %s17, 1
  %v2936 = vld [vmem:[%s2935] sm:$0x1]
  %v2938 = vlaneseq
  %v2939 = vshrl.u32 %v2938, 7
  %v2940 = vsub.s32 0, %v2939
  %v2941 = vrot.slane %v2936, %v2940
  %v2943 = vadd.f32 %v2933, %v2941
  %v2944 = vadd.f32 %v2934, %v2941
  %v2945 = vld [vmem:[%s20] sm:$0x3]
  %v2947 = vsel %vm480, %v2945, 0
  %v2950 = vsel %vm515, %v2944, 0
  %2952 = vmatprep.subr.mxu0 0.0
  %2953 = vmatpush1.msra.mxu0 %v2943
  %2954 = vmatprep.subr.mxu0 0.0
  %2955 = vmatpush1.msra.mxu0 %v2950
  %2956 = vmatprep.subr.mxu0 0.0
  %2957 = vmatpush1.msra.mxu0 0.0
  %2958 = vmatprep.subr.mxu0 0.0
  %2959 = vmatpush1.msra.mxu0 0.0
  %2960 = vmatprep.subr.mxu0 0.0
  %2961 = vmatpush1.msra.mxu0 0.0
  %2962 = vmatprep.subr.mxu0 0.0
  %2963 = vmatpush1.msra.mxu0 0.0
  %2964 = vmatprep.subr.mxu0 0.0
  %2965 = vmatpush1.msra.mxu0 0.0
  %2966 = vmatprep.subr.mxu0 0.0
  %2967 = vmatpush1.msra.mxu0 0.0
  %2968 = vmatprep.subr.mxu0 0.0
  %2969 = vmatpush1.msra.mxu0 0.0
  %2970 = vmatprep.subr.mxu0 0.0
  %2971 = vmatpush1.msra.mxu0 0.0
  %2972 = vmatprep.subr.mxu0 0.0
  %2973 = vmatpush1.msra.mxu0 0.0
  %2974 = vmatprep.subr.mxu0 0.0
  %2975 = vmatpush1.msra.mxu0 0.0
  %2976 = vmatprep.subr.mxu0 0.0
  %2977 = vmatpush1.msra.mxu0 0.0
  %2978 = vmatprep.subr.mxu0 0.0
  %2979 = vmatpush1.msra.mxu0 0.0
  %2980 = vmatprep.subr.mxu0 0.0
  %2981 = vmatpush1.msra.mxu0 0.0
  %2982 = vmatprep.subr.mxu0 0.0
  %2983 = vmatpush1.msra.mxu0 0.0
  %2984 = vmatprep.subr.mxu0 0.0
  %2985 = vmatpush1.msra.mxu0 0.0
  %2986 = vmatprep.subr.mxu0 0.0
  %2987 = vmatpush1.msra.mxu0 0.0
  %2988 = vmatprep.subr.mxu0 0.0
  %2989 = vmatpush1.msra.mxu0 0.0
  %2990 = vmatprep.subr.mxu0 0.0
  %2991 = vmatpush1.msra.mxu0 0.0
  %2992 = vmatprep.subr.mxu0 0.0
  %2993 = vmatpush1.msra.mxu0 0.0
  %2994 = vmatprep.subr.mxu0 0.0
  %2995 = vmatpush1.msra.mxu0 0.0
  %2996 = vmatprep.subr.mxu0 0.0
  %2997 = vmatpush1.msra.mxu0 0.0
  %2998 = vmatprep.subr.mxu0 0.0
  %2999 = vmatpush1.msra.mxu0 0.0
  %3000 = vmatprep.subr.mxu0 0.0
  %3001 = vmatpush1.msra.mxu0 0.0
  %3002 = vmatprep.subr.mxu0 0.0
  %3003 = vmatpush1.msra.mxu0 0.0
  %3004 = vmatprep.subr.mxu0 0.0
  %3005 = vmatpush1.msra.mxu0 0.0
  %3006 = vmatprep.subr.mxu0 0.0
  %3007 = vmatpush1.msra.mxu0 0.0
  %3008 = vmatprep.subr.mxu0 0.0
  %3009 = vmatpush1.msra.mxu0 0.0
  %3010 = vmatprep.subr.mxu0 0.0
  %3011 = vmatpush1.msra.mxu0 0.0
  %3012 = vmatprep.subr.mxu0 0.0
  %3013 = vmatpush1.msra.mxu0 0.0
  %3014 = vmatprep.subr.mxu0 0.0
  %3015 = vmatpush1.msra.mxu0 0.0
  %3016 = vmatprep.mubr.f32.mxu0 0.0
  %3017 = vmatmul.mubr.f32.gmra.mrb[0].mxu0 %v2947
  %v3018 = vpop.f32.mrb[0].mxu0
  %v3019 = vadd.f32 0.0, %v3018
  %v3020 = vpop.f32.mrb[0].mxu0
  %3021 = vdwg.mxu0
  %v3022 = vld [vmem:[%s18] sm:$0x1]
  %v3023 = vld [vmem:[%s19] sm:$0x1]
  %v3024 = vsel %vm209, %v3019, 0.0
  %3025 = vadd.xlane.f32.xlu0 %v3024
  %v3026 = vpop.xlane.xlu0 %3025
  %v3027 = vmul.f32 %v3026, %v213
  %v3028 = vsub.f32 %v3019, %v3027
  %v3029 = vmul.f32 %v3028, %v3028
  %v3030 = vsel %vm209, %v3029, 0.0
  %3031 = vadd.xlane.f32.xlu0 %v3030
  %v3032 = vpop.xlane.xlu0 %3031
  %v3033 = vmul.f32 %v3032, %v213
  %v3034 = vadd.f32 %v3033, 1e-05
  %v3035 = vrsqrt.pop %v3034
  %v3036 = vmul.f32 %v3028, %v3035
  %v3038 = vlaneseq
  %v3039 = vshrl.u32 %v3038, 7
  %v3040 = vsub.s32 0, %v3039
  %v3041 = vrot.slane %v3022, %v3040
  %v3043 = vmul.f32 %v3036, %v3041
  %v3045 = vlaneseq
  %v3046 = vshrl.u32 %v3045, 7
  %v3047 = vsub.s32 0, %v3046
  %v3048 = vrot.slane %v3023, %v3047
  %v3050 = vadd.f32 %v3043, %v3048
  %v3051 = vld [vmem:[%s22] sm:$0xff]
  %v3052 = vld [vmem:[%s22 + $0x8] sm:$0xff]
  %v3053 = vld [vmem:[%s22 + $0x10] sm:$0xff]
  %v3054 = vld [vmem:[%s22 + $0x18] sm:$0xff]
  %v3055 = vld [vmem:[%s21] sm:$0x3]
  %v3056 = vld [vmem:[%s23] sm:$0x3]
  %vm3057 = vcmask 15360
  %v3059 = vsel %vm3057, %v3055, 0
  %v3062 = vsel %vm515, %v3056, 0
  %3064 = vmatprep.subr.mxu0 0.0
  %3065 = vmatpush1.msra.mxu0 %v3062
  %3066 = vmatprep.subr.mxu0 0.0
  %3067 = vmatpush1.msra.mxu0 0.0
  %3068 = vmatprep.subr.mxu0 0.0
  %3069 = vmatpush1.msra.mxu0 0.0
  %3070 = vmatprep.subr.mxu0 0.0
  %3071 = vmatpush1.msra.mxu0 0.0
  %3072 = vmatprep.subr.mxu0 0.0
  %3073 = vmatpush1.msra.mxu0 0.0
  %3074 = vmatprep.subr.mxu0 0.0
  %3075 = vmatpush1.msra.mxu0 0.0
  %3076 = vmatprep.subr.mxu0 0.0
  %3077 = vmatpush1.msra.mxu0 0.0
  %3078 = vmatprep.subr.mxu0 0.0
  %3079 = vmatpush1.msra.mxu0 0.0
  %3080 = vmatprep.subr.mxu0 0.0
  %3081 = vmatpush1.msra.mxu0 0.0
  %3082 = vmatprep.subr.mxu0 0.0
  %3083 = vmatpush1.msra.mxu0 0.0
  %3084 = vmatprep.subr.mxu0 0.0
  %3085 = vmatpush1.msra.mxu0 0.0
  %3086 = vmatprep.subr.mxu0 0.0
  %3087 = vmatpush1.msra.mxu0 0.0
  %3088 = vmatprep.subr.mxu0 0.0
  %3089 = vmatpush1.msra.mxu0 0.0
  %3090 = vmatprep.subr.mxu0 0.0
  %3091 = vmatpush1.msra.mxu0 0.0
  %3092 = vmatprep.subr.mxu0 0.0
  %3093 = vmatpush1.msra.mxu0 0.0
  %3094 = vmatprep.subr.mxu0 0.0
  %3095 = vmatpush1.msra.mxu0 0.0
  %3096 = vmatprep.subr.mxu0 0.0
  %3097 = vmatpush1.msra.mxu0 0.0
  %3098 = vmatprep.subr.mxu0 0.0
  %3099 = vmatpush1.msra.mxu0 0.0
  %3100 = vmatprep.subr.mxu0 0.0
  %3101 = vmatpush1.msra.mxu0 0.0
  %3102 = vmatprep.subr.mxu0 0.0
  %3103 = vmatpush1.msra.mxu0 0.0
  %3104 = vmatprep.subr.mxu0 0.0
  %3105 = vmatpush1.msra.mxu0 0.0
  %3106 = vmatprep.subr.mxu0 0.0
  %3107 = vmatpush1.msra.mxu0 0.0
  %3108 = vmatprep.subr.mxu0 0.0
  %3109 = vmatpush1.msra.mxu0 0.0
  %3110 = vmatprep.subr.mxu0 0.0
  %3111 = vmatpush1.msra.mxu0 0.0
  %3112 = vmatprep.subr.mxu0 0.0
  %3113 = vmatpush1.msra.mxu0 0.0
  %3114 = vmatprep.subr.mxu0 0.0
  %3115 = vmatpush1.msra.mxu0 0.0
  %3116 = vmatprep.subr.mxu0 0.0
  %3117 = vmatpush1.msra.mxu0 0.0
  %3118 = vmatprep.subr.mxu0 0.0
  %3119 = vmatpush1.msra.mxu0 0.0
  %3120 = vmatprep.subr.mxu0 0.0
  %3121 = vmatpush1.msra.mxu0 0.0
  %3122 = vmatprep.subr.mxu0 0.0
  %3123 = vmatpush1.msra.mxu0 0.0
  %3124 = vmatprep.subr.mxu0 0.0
  %3125 = vmatpush1.msra.mxu0 0.0
  %3126 = vmatprep.subr.mxu0 0.0
  %3127 = vmatpush1.msra.mxu0 0.0
  %3128 = vmatprep.mubr.f32.mxu0 0.0
  %3129 = vmatmul.mubr.f32.gmra.mrb[0].mxu0 %v3059
  %v3130 = vpop.f32.mrb[0].mxu0
  %v3131 = vadd.f32 0.0, %v3130
  %v3132 = vpop.f32.mrb[0].mxu0
  %3133 = vdwg.mxu0
  %v3135 = vsel %vm205, %v3050, 0
  %3137 = vmatprep.subr.mxu0 0.0
  %3138 = vmatpush1.msra.mxu0 %v3051
  %3139 = vmatprep.subr.mxu0 0.0
  %3140 = vmatpush1.msra.mxu0 %v3052
  %3141 = vmatprep.subr.mxu0 0.0
  %3142 = vmatpush1.msra.mxu0 %v3053
  %3143 = vmatprep.subr.mxu0 0.0
  %3144 = vmatpush1.msra.mxu0 %v3054
  %3145 = vmatprep.subr.mxu0 0.0
  %3146 = vmatpush1.msra.mxu0 0.0
  %3147 = vmatprep.subr.mxu0 0.0
  %3148 = vmatpush1.msra.mxu0 0.0
  %3149 = vmatprep.subr.mxu0 0.0
  %3150 = vmatpush1.msra.mxu0 0.0
  %3151 = vmatprep.subr.mxu0 0.0
  %3152 = vmatpush1.msra.mxu0 0.0
  %3153 = vmatprep.subr.mxu0 0.0
  %3154 = vmatpush1.msra.mxu0 0.0
  %3155 = vmatprep.subr.mxu0 0.0
  %3156 = vmatpush1.msra.mxu0 0.0
  %3157 = vmatprep.subr.mxu0 0.0
  %3158 = vmatpush1.msra.mxu0 0.0
  %3159 = vmatprep.subr.mxu0 0.0
  %3160 = vmatpush1.msra.mxu0 0.0
  %3161 = vmatprep.subr.mxu0 0.0
  %3162 = vmatpush1.msra.mxu0 0.0
  %3163 = vmatprep.subr.mxu0 0.0
  %3164 = vmatpush1.msra.mxu0 0.0
  %3165 = vmatprep.subr.mxu0 0.0
  %3166 = vmatpush1.msra.mxu0 0.0
  %3167 = vmatprep.subr.mxu0 0.0
  %3168 = vmatpush1.msra.mxu0 0.0
  %3169 = vmatprep.subr.mxu0 0.0
  %3170 = vmatpush1.msra.mxu0 0.0
  %3171 = vmatprep.subr.mxu0 0.0
  %3172 = vmatpush1.msra.mxu0 0.0
  %3173 = vmatprep.subr.mxu0 0.0
  %3174 = vmatpush1.msra.mxu0 0.0
  %3175 = vmatprep.subr.mxu0 0.0
  %3176 = vmatpush1.msra.mxu0 0.0
  %3177 = vmatprep.subr.mxu0 0.0
  %3178 = vmatpush1.msra.mxu0 0.0
  %3179 = vmatprep.subr.mxu0 0.0
  %3180 = vmatpush1.msra.mxu0 0.0
  %3181 = vmatprep.subr.mxu0 0.0
  %3182 = vmatpush1.msra.mxu0 0.0
  %3183 = vmatprep.subr.mxu0 0.0
  %3184 = vmatpush1.msra.mxu0 0.0
  %3185 = vmatprep.subr.mxu0 0.0
  %3186 = vmatpush1.msra.mxu0 0.0
  %3187 = vmatprep.subr.mxu0 0.0
  %3188 = vmatpush1.msra.mxu0 0.0
  %3189 = vmatprep.subr.mxu0 0.0
  %3190 = vmatpush1.msra.mxu0 0.0
  %3191 = vmatprep.subr.mxu0 0.0
  %3192 = vmatpush1.msra.mxu0 0.0
  %3193 = vmatprep.subr.mxu0 0.0
  %3194 = vmatpush1.msra.mxu0 0.0
  %3195 = vmatprep.subr.mxu0 0.0
  %3196 = vmatpush1.msra.mxu0 0.0
  %3197 = vmatprep.subr.mxu0 0.0
  %3198 = vmatpush1.msra.mxu0 0.0
  %3199 = vmatprep.subr.mxu0 0.0
  %3200 = vmatpush1.msra.mxu0 0.0
  %3201 = vmatprep.mubr.f32.mxu0 0.0
  %3202 = vmatmul.mubr.f32.gmra.mrb[0].mxu0 %v3135
  %v3203 = vpop.f32.mrb[0].mxu0
  %v3204 = vadd.f32 %v3131, %v3203
  %v3205 = vpop.f32.mrb[0].mxu0
  %3206 = vdwg.mxu0
  %v3207 = vld [vmem:[%s24] sm:$0x1]
  %v3209 = vlaneseq
  %v3210 = vshrl.u32 %v3209, 7
  %v3211 = vsub.s32 0, %v3210
  %v3212 = vrot.slane %v3207, %v3211
  %v3214 = vadd.f32 %v3204, %v3212
  %vm3215 = vcmp.gt.f32.partialorder %v3214, 0.0
  %v3216 = vmul.f32 %v3214, 0.2
  %v3217 = vsel %vm3215, %v3214, %v3216
  %v3218 = vld [vmem:[%s25] sm:$0xff]
  %v3219 = vld [vmem:[%s25 + $0x8] sm:$0xff]
  %v3220 = vld [vmem:[%s25 + $0x10] sm:$0xff]
  %v3221 = vld [vmem:[%s25 + $0x18] sm:$0xff]
  %v3222 = vld [vmem:[%s25 + $0x20] sm:$0xff]
  %v3223 = vld [vmem:[%s25 + $0x28] sm:$0xff]
  %v3224 = vld [vmem:[%s25 + $0x30] sm:$0xff]
  %v3225 = vld [vmem:[%s25 + $0x38] sm:$0xff]
  %v3226 = vld [vmem:[%s25 + $0x40] sm:$0xff]
  %v3227 = vld [vmem:[%s25 + $0x48] sm:$0xff]
  %v3228 = vld [vmem:[%s25 + $0x50] sm:$0xff]
  %v3229 = vld [vmem:[%s25 + $0x58] sm:$0xff]
  %v3230 = vld [vmem:[%s25 + $0x60] sm:$0xff]
  %v3231 = vld [vmem:[%s25 + $0x68] sm:$0xff]
  %v3232 = vld [vmem:[%s25 + $0x70] sm:$0xff]
  %v3233 = vld [vmem:[%s25 + $0x78] sm:$0xff]
  %v3234 = vld [vmem:[#allocation3] sm:$0x1]
  %v3236 = vlaneseq
  %v3237 = vshrl.u32 %v3236, 7
  %v3238 = vsub.s32 0, %v3237
  %v3239 = vrot.slane %v3234, %v3238
  %3241 = vmatprep.subr.mxu0 0.0
  %3242 = vmatpush1.msra.mxu0 %v3218
  %3243 = vmatprep.subr.mxu0 0.0
  %3244 = vmatpush1.msra.mxu0 %v3219
  %3245 = vmatprep.subr.mxu0 0.0
  %3246 = vmatpush1.msra.mxu0 %v3220
  %3247 = vmatprep.subr.mxu0 0.0
  %3248 = vmatpush1.msra.mxu0 %v3221
  %3249 = vmatprep.subr.mxu0 0.0
  %3250 = vmatpush1.msra.mxu0 %v3222
  %3251 = vmatprep.subr.mxu0 0.0
  %3252 = vmatpush1.msra.mxu0 %v3223
  %3253 = vmatprep.subr.mxu0 0.0
  %3254 = vmatpush1.msra.mxu0 %v3224
  %3255 = vmatprep.subr.mxu0 0.0
  %3256 = vmatpush1.msra.mxu0 %v3225
  %3257 = vmatprep.subr.mxu0 0.0
  %3258 = vmatpush1.msra.mxu0 %v3226
  %3259 = vmatprep.subr.mxu0 0.0
  %3260 = vmatpush1.msra.mxu0 %v3227
  %3261 = vmatprep.subr.mxu0 0.0
  %3262 = vmatpush1.msra.mxu0 %v3228
  %3263 = vmatprep.subr.mxu0 0.0
  %3264 = vmatpush1.msra.mxu0 %v3229
  %3265 = vmatprep.subr.mxu0 0.0
  %3266 = vmatpush1.msra.mxu0 %v3230
  %3267 = vmatprep.subr.mxu0 0.0
  %3268 = vmatpush1.msra.mxu0 %v3231
  %3269 = vmatprep.subr.mxu0 0.0
  %3270 = vmatpush1.msra.mxu0 %v3232
  %3271 = vmatprep.subr.mxu0 0.0
  %3272 = vmatpush1.msra.mxu0 %v3233
  %3273 = vmatprep.subr.mxu0 0.0
  %3274 = vmatpush1.msra.mxu0 0.0
  %3275 = vmatprep.subr.mxu0 0.0
  %3276 = vmatpush1.msra.mxu0 0.0
  %3277 = vmatprep.subr.mxu0 0.0
  %3278 = vmatpush1.msra.mxu0 0.0
  %3279 = vmatprep.subr.mxu0 0.0
  %3280 = vmatpush1.msra.mxu0 0.0
  %3281 = vmatprep.subr.mxu0 0.0
  %3282 = vmatpush1.msra.mxu0 0.0
  %3283 = vmatprep.subr.mxu0 0.0
  %3284 = vmatpush1.msra.mxu0 0.0
  %3285 = vmatprep.subr.mxu0 0.0
  %3286 = vmatpush1.msra.mxu0 0.0
  %3287 = vmatprep.subr.mxu0 0.0
  %3288 = vmatpush1.msra.mxu0 0.0
  %3289 = vmatprep.subr.mxu0 0.0
  %3290 = vmatpush1.msra.mxu0 0.0
  %3291 = vmatprep.subr.mxu0 0.0
  %3292 = vmatpush1.msra.mxu0 0.0
  %3293 = vmatprep.subr.mxu0 0.0
  %3294 = vmatpush1.msra.mxu0 0.0
  %3295 = vmatprep.subr.mxu0 0.0
  %3296 = vmatpush1.msra.mxu0 0.0
  %3297 = vmatprep.subr.mxu0 0.0
  %3298 = vmatpush1.msra.mxu0 0.0
  %3299 = vmatprep.subr.mxu0 0.0
  %3300 = vmatpush1.msra.mxu0 0.0
  %3301 = vmatprep.subr.mxu0 0.0
  %3302 = vmatpush1.msra.mxu0 0.0
  %3303 = vmatprep.subr.mxu0 0.0
  %3304 = vmatpush1.msra.mxu0 0.0
  %3305 = vmatprep.mubr.f32.mxu0 0.0
  %3306 = vmatmul.mubr.f32.gmra.mrb[0].mxu0 %v3217
  %v3307 = vpop.f32.mrb[0].mxu0
  %v3308 = vadd.f32 %v3239, %v3307
  %v3309 = vpop.f32.mrb[0].mxu0
  %3310 = vdwg.mxu0
  %vm3311 = vcmask 1024
  %3312 = vst.msk [vmem:[%s27] sm:$0x3] %vm3311, %v3308
  // Predicated region
  $region110: #{clip_binary_classifier_forward.1} parent=0 // pred_check
    _
  $region111: #{clip_binary_classifier_forward.1} parent=0 // pred_check_branch
    %3314 = sbr.rel (0) target = $region113
  $region112: #{clip_binary_classifier_forward.1} parent=0 // pred_region
    _
  $region113: #{clip_binary_classifier_forward.1} parent=0 // pred_fallthru
    _
  // Predicated region
  $region114: #{clip_binary_classifier_forward.1} parent=0 // pred_check
    _
  $region115: #{clip_binary_classifier_forward.1} parent=0 // pred_check_branch
    %3316 = sbr.rel (0) target = $region117
  $region116: #{clip_binary_classifier_forward.1} parent=0 // pred_region
    _
  $region117: #{clip_binary_classifier_forward.1} parent=0 // pred_fallthru
    _

</llo_original>
